<compile_context>
chip_gen: v7x
topology: tpu7x:2x2x1
jax: 0.10.0
libtpu: 0.0.40
codegen_flags: <defaults>
</compile_context>

<pallas_src>
import functools

import numpy as np
import jax
import jax.numpy as jnp
from jax import lax
from jax.experimental import pallas as pl
from jax.experimental.pallas import tpu as pltpu

_LANE = 128


def _round_up(x, m):
    return (x + m - 1) // m * m


def _nbytes(a):
    return int(a.size) * a.dtype.itemsize


def _vmem_limit_bytes():
    # Generation-aware VMEM budget: ~3/4 of physical, capped at 96 MiB.
    # (v5e/v6e: 128 MiB physical -> 96 MiB;  v7x: 64 MiB -> 48 MiB.)
    cap = 128 * 1024 * 1024
    try:
        cap = int(pltpu.get_tpu_info().vmem_capacity_bytes)
    except Exception:
        pass
    return min(96 * 1024 * 1024, (cap * 3) // 4)


# ----------------------------------------------------------------------------
# Input packing (wrapper-side layout plumbing only, ~1x the input bytes).
#
# For a 3x3 / pad=1 / stride=s conv, the input is padded once, split into the
# s*s sampling phases and row-flattened so that, for extended output position
# m = ho*Wf + wo and tap (kh, kw):
#     patch value = xpp[n, (kh%s)*s + (kw%s), m + (kh//s)*Wf + (kw//s), :]
# i.e. every tap window is a *contiguous* slice of the flattened dim.
# Extended columns wo in [Wo, Wf) are garbage and are sliced off afterwards.
# ----------------------------------------------------------------------------
def _pack_input(x_nhwc, stride, dtype):
    N, H, W, C = x_nhwc.shape
    s = stride
    Ho = (H - 1) // s + 1
    Wo = (W - 1) // s + 1
    Wf = -(-(W + 2) // s)            # phase width == extended output width
    Hf = Ho + 2 // s + 1             # phase rows incl. slack for tap row shifts
    xp = jnp.pad(x_nhwc,
                 ((0, 0), (1, Hf * s - H - 1), (1, Wf * s - W - 1), (0, 0)))
    xpp = xp.reshape(N, Hf, s, Wf, s, C).transpose(0, 2, 4, 1, 3, 5)
    xpp = xpp.reshape(N, s * s, Hf * Wf, C).astype(dtype)
    meta = dict(N=N, H=H, W=W, C=C, s=s, Ho=Ho, Wo=Wo, Wf=Wf,
                Me=Ho * Wf, Lf=Hf * Wf)
    return xpp, meta


# ----------------------------------------------------------------------------
# Weight / BN preparation: fold eval-mode BN scale into the weight columns so
# the kernel epilogue is only an add of the folded bias.  Tiny tensors only.
# ----------------------------------------------------------------------------
def _fold_bn(gamma, beta, mean, var, eps=1e-5):
    scale = gamma / jnp.sqrt(var + eps)
    bias = beta - mean * scale
    return scale, bias


def _prep_conv3x3(w_oihw, gamma, beta, mean, var, co_p, mm_dtype):
    cout, cin = w_oihw.shape[0], w_oihw.shape[1]
    scale, bias = _fold_bn(gamma, beta, mean, var)
    w = jnp.transpose(w_oihw, (2, 3, 1, 0)).reshape(9, cin, cout) * scale
    w = jnp.pad(w, ((0, 0), (0, 0), (0, co_p - cout))).astype(mm_dtype)
    b = jnp.pad(bias.reshape(1, -1), ((0, 0), (0, co_p - cout))).astype(jnp.float32)
    return w, b


def _prep_conv1x1(w_oihw, gamma, beta, mean, var, co_p, mm_dtype):
    cout, cin = w_oihw.shape[0], w_oihw.shape[1]
    scale, bias = _fold_bn(gamma, beta, mean, var)
    w = w_oihw.reshape(cout, cin).T * scale
    w = jnp.pad(w, ((0, 0), (0, co_p - cout))).astype(mm_dtype)
    b = jnp.pad(bias.reshape(1, -1), ((0, 0), (0, co_p - cout))).astype(jnp.float32)
    return w, b


# ----------------------------------------------------------------------------
# Fused kernel: one batch image per grid step.
#   3x3 conv as 9 accumulated tap matmuls (MXU, f32 acc) -> +folded BN bias
#   -> optional residual (identity slice or fused downsample 1x1 conv + BN)
#   -> optional ReLU -> lane-dense store.
# ----------------------------------------------------------------------------
def _conv_bn_kernel(x_ref, w_ref, b_ref, *rest,
                    s, Wf, Me, relu, res_mode, mm_dtype):
    if res_mode is None:
        (o_ref,) = rest
    else:
        res_ref, rw_ref, rb_ref, o_ref = rest

    co_p = o_ref.shape[-1]
    acc = jnp.zeros((Me, co_p), jnp.float32)
    for kh in range(3):
        for kw in range(3):
            p = (kh % s) * s + (kw % s)
            off = (kh // s) * Wf + (kw // s)
            win = x_ref[0, p, off:off + Me, :].astype(mm_dtype)    # (Me, Cin)
            acc = acc + jnp.dot(win, w_ref[kh * 3 + kw],
                                preferred_element_type=jnp.float32)
    acc = acc + b_ref[...]                         # folded eval-mode BN bias

    if res_mode is not None:
        if res_mode == "slice":
            # Identity residual: x itself, read as a shifted slice of the same
            # packed array conv1 consumed (no identity tensor in HBM).
            rows = res_ref[0, 0, Wf + 1:Wf + 1 + Me, :]
        else:                                      # "rows": fused downsample
            rows = res_ref[0]
        acc = acc + jnp.dot(rows.astype(mm_dtype), rw_ref[...],
                            preferred_element_type=jnp.float32)
        acc = acc + rb_ref[...]

    if relu:
        acc = jnp.maximum(acc, 0.0)
    o_ref[0] = acc.astype(o_ref.dtype)


def _conv3x3_bn_act(xpp, meta, w_taps, bias, *, residual=None, relu=True,
                    out_dtype=jnp.float32, mm_dtype=jnp.bfloat16):
    N, Me, Wf, s, C, Lf = (meta[k] for k in ("N", "Me", "Wf", "s", "C", "Lf"))
    ss = s * s
    co_p = w_taps.shape[-1]
    res_mode = None if residual is None else residual["mode"]

    kernel = functools.partial(_conv_bn_kernel, s=s, Wf=Wf, Me=Me, relu=relu,
                               res_mode=res_mode, mm_dtype=mm_dtype)

    inputs = [xpp, w_taps, bias]
    in_specs = [
        pl.BlockSpec((1, ss, Lf, C), lambda i: (i, 0, 0, 0)),   # packed input
        pl.BlockSpec(w_taps.shape, lambda i: (0, 0, 0)),        # resident weights
        pl.BlockSpec(bias.shape, lambda i: (0, 0)),             # resident bias
    ]
    flops = 2 * N * Me * (9 * C) * co_p
    bytes_accessed = _nbytes(xpp) + _nbytes(w_taps) + _nbytes(bias)

    if residual is not None:
        rarr, rw, rb = residual["array"], residual["rw"], residual["rb"]
        inputs += [rarr, rw, rb]
        if res_mode == "slice":
            in_specs.append(pl.BlockSpec((1,) + rarr.shape[1:],
                                         lambda i: (i, 0, 0, 0)))
        else:
            in_specs.append(pl.BlockSpec((1,) + rarr.shape[1:],
                                         lambda i: (i, 0, 0)))
        in_specs.append(pl.BlockSpec(rw.shape, lambda i: (0, 0)))
        in_specs.append(pl.BlockSpec(rb.shape, lambda i: (0, 0)))
        flops += 2 * N * Me * rw.shape[0] * co_p
        bytes_accessed += _nbytes(rarr) + _nbytes(rw) + _nbytes(rb)

    out_nbytes = N * Me * co_p * np.dtype(out_dtype).itemsize
    return pl.pallas_call(
        kernel,
        out_shape=jax.ShapeDtypeStruct((N, Me, co_p), out_dtype),
        grid=(N,),
        in_specs=in_specs,
        out_specs=pl.BlockSpec((1, Me, co_p), lambda i: (i, 0, 0)),
        compiler_params=pltpu.CompilerParams(
            dimension_semantics=("parallel",),
            vmem_limit_bytes=_vmem_limit_bytes()),
        cost_estimate=pl.CostEstimate(flops=int(flops), transcendentals=0,
                                      bytes_accessed=int(bytes_accessed + out_nbytes)),
    )(*inputs)


# ----------------------------------------------------------------------------
# BasicBlock forward (wrapper)
# ----------------------------------------------------------------------------
def basic_block_forward(x_nchw, params, stride, *,
                        mm_dtype=jnp.bfloat16, store_dtype=jnp.bfloat16):
    x = jnp.transpose(x_nchw, (0, 2, 3, 1)).astype(jnp.float32)   # NCHW -> NHWC
    N, H, W, cin = x.shape
    cout = params["w1"].shape[0]
    co_p = _round_up(cout, _LANE)

    # --- conv1 + bn1 + relu ---------------------------------------------------
    xpp1, m1 = _pack_input(x, stride, store_dtype)
    w1, b1 = _prep_conv3x3(params["w1"], params["bn1_g"], params["bn1_b"],
                           params["bn1_m"], params["bn1_v"], co_p, mm_dtype)
    out1 = _conv3x3_bn_act(xpp1, m1, w1, b1, relu=True,
                           out_dtype=store_dtype, mm_dtype=mm_dtype)
    Ho, Wo = m1["Ho"], m1["Wo"]
    out1_nhwc = out1.reshape(N, Ho, m1["Wf"], co_p)[:, :, :Wo, :cout]

    # --- conv2 + bn2 + residual + relu (single fused kernel) -------------------
    xpp2, m2 = _pack_input(out1_nhwc, 1, store_dtype)
    w2, b2 = _prep_conv3x3(params["w2"], params["bn2_g"], params["bn2_b"],
                           params["bn2_m"], params["bn2_v"], co_p, mm_dtype)

    if stride != 1 or cin != cout:
        # Downsample fused into the conv2 kernel: identity = BNd(1x1 conv(x_s)).
        wd, bd = _prep_conv1x1(params["wd"], params["bnd_g"], params["bnd_b"],
                               params["bnd_m"], params["bnd_v"], co_p, mm_dtype)
        xd = x[:, ::stride, ::stride, :]                         # (N, Ho, Wo, cin)
        xd = jnp.pad(xd, ((0, 0), (0, 0), (0, m2["Wf"] - Wo), (0, 0)))
        xd = xd.reshape(N, m2["Me"], cin).astype(store_dtype)
        residual = dict(mode="rows", array=xd, rw=wd, rb=bd)
    else:
        # Plain identity: residual rows come from conv1's packed input; the
        # channel pad to co_p rides a tiny identity matmul on the MXU.
        rw = jnp.eye(cin, co_p, dtype=jnp.float32).astype(mm_dtype)
        rb = jnp.zeros((1, co_p), jnp.float32)
        residual = dict(mode="slice", array=xpp1, rw=rw, rb=rb)

    out2 = _conv3x3_bn_act(xpp2, m2, w2, b2, residual=residual, relu=True,
                           out_dtype=jnp.float32, mm_dtype=mm_dtype)
    out2_nhwc = out2.reshape(N, Ho, m2["Wf"], co_p)[:, :, :Wo, :cout]
    return jnp.transpose(out2_nhwc, (0, 3, 1, 2))                 # NHWC -> NCHW


# ----------------------------------------------------------------------------
# Pure-JAX reference (for the correctness check)
# ----------------------------------------------------------------------------
def _bn_ref(x, g, b, m, v, eps=1e-5):
    g, b, m, v = (a.reshape(1, -1, 1, 1) for a in (g, b, m, v))
    return (x - m) / jnp.sqrt(v + eps) * g + b


def basic_block_ref(x, params, stride):
    conv = lambda x, w, s: lax.conv_general_dilated(
        x, w, (s, s), ((w.shape[2] // 2,) * 2, (w.shape[3] // 2,) * 2),
        dimension_numbers=("NCHW", "OIHW", "NCHW"),
        precision=lax.Precision.HIGHEST)
    out = conv(x, params["w1"], stride)
    out = jnp.maximum(_bn_ref(out, params["bn1_g"], params["bn1_b"],
                              params["bn1_m"], params["bn1_v"]), 0.0)
    out = conv(out, params["w2"], 1)
    out = _bn_ref(out, params["bn2_g"], params["bn2_b"],
                  params["bn2_m"], params["bn2_v"])
    if stride != 1 or params["w1"].shape[1] != params["w1"].shape[0]:
        identity = conv(x, params["wd"], stride)
        identity = _bn_ref(identity, params["bnd_g"], params["bnd_b"],
                           params["bnd_m"], params["bnd_v"])
    else:
        identity = x
    return jnp.maximum(out + identity, 0.0)


# ----------------------------------------------------------------------------
def make_params(key, cin, cout):
    ks = jax.random.split(key, 8)
    p = {
        "w1": 0.1 * jax.random.normal(ks[0], (cout, cin, 3, 3), jnp.float32),
        "w2": 0.1 * jax.random.normal(ks[1], (cout, cout, 3, 3), jnp.float32),
        "bn1_g": 1.0 + 0.1 * jax.random.normal(ks[2], (cout,), jnp.float32),
        "bn1_b": 0.1 * jax.random.normal(ks[3], (cout,), jnp.float32),
        "bn1_m": 0.05 * jax.random.normal(ks[4], (cout,), jnp.float32),
        "bn1_v": 1.0 + 0.1 * jax.random.uniform(ks[5], (cout,), jnp.float32),
        "bn2_g": 1.0 + 0.1 * jax.random.normal(ks[6], (cout,), jnp.float32),
        "bn2_b": 0.1 * jax.random.normal(ks[7], (cout,), jnp.float32),
        "bn2_m": jnp.zeros((cout,), jnp.float32),
        "bn2_v": jnp.ones((cout,), jnp.float32),
    }
    kd = jax.random.split(ks[0], 3)
    p["wd"] = 0.1 * jax.random.normal(kd[0], (cout, cin, 1, 1), jnp.float32)
    p["bnd_g"] = 1.0 + 0.1 * jax.random.normal(kd[1], (cout,), jnp.float32)
    p["bnd_b"] = 0.1 * jax.random.normal(kd[2], (cout,), jnp.float32)
    p["bnd_m"] = jnp.zeros((cout,), jnp.float32)
    p["bnd_v"] = jnp.ones((cout,), jnp.float32)
    return p


if __name__ == "__main__":
    key = jax.random.PRNGKey(0)

    configs = [
        # (N, Cin, Cout, H, W, stride)
        (2, 4, 8, 16, 16, 2),    # downsample path (stride 2, channel change)
        (2, 8, 8, 16, 16, 1),    # identity path
        (2, 8, 8, 32, 32, 1),    # larger spatial extent
    ]

    fwd = jax.jit(basic_block_forward, static_argnames=("stride",))

    for idx, (N, Cin, Cout, H, W, stride) in enumerate(configs):
        k_x, k_p = jax.random.split(jax.random.fold_in(key, idx))
        x = jax.random.normal(k_x, (N, Cin, H, W), jnp.float32)
        params = make_params(k_p, Cin, Cout)

        ref = jax.block_until_ready(basic_block_ref(x, params, stride))
        out = jax.block_until_ready(fwd(x, params, stride=stride))

        assert out.shape == ref.shape == (N, Cout, H // stride, W // stride)
        err = float(jnp.max(jnp.abs(out - ref)))
        assert jnp.allclose(out, ref, atol=5e-2, rtol=5e-2), (idx, err)

    print("KERNEL_OK")
</pallas_src>

<mosaic_0001>
module attributes {stable_mosaic.version = 11 : i64} {
  func.func @_conv_bn_kernel(%arg0: i32, %arg1: memref<1x4x90x4xbf16, #tpu.memory_space<vmem>>, %arg2: memref<9x4x128xbf16, #tpu.memory_space<vmem>>, %arg3: memref<1x128xf32, #tpu.memory_space<vmem>>, %arg4: memref<1x72x128xbf16, #tpu.memory_space<vmem>>) attributes {dimension_semantics = [#tpu.dimension_semantics<parallel>], iteration_bounds = array<i64: 2>, scalar_prefetch = 0 : i64, scratch_operands = 0 : i64, tpu.core_type = #tpu.core_type<tc>, window_params = [{transform_indices = @transform_0, window_bounds = array<i64: 1, 4, 90, 4>}, {pipeline_mode = #tpu.pipeline_mode<synchronous>, transform_indices = @transform_1, window_bounds = array<i64: 9, 4, 128>}, {pipeline_mode = #tpu.pipeline_mode<synchronous>, transform_indices = @transform_2, window_bounds = array<i64: 1, 128>}, {transform_indices = @transform_3, window_bounds = array<i64: 1, 72, 128>}]} {
    %cst = arith.constant 0.000000e+00 : f32
    %0 = vector.broadcast %cst : f32 to vector<72x128xf32>
    %c0 = arith.constant 0 : index
    %c0_0 = arith.constant 0 : index
    %c0_1 = arith.constant 0 : index
    %c0_2 = arith.constant 0 : index
    %1 = vector.load %arg1[%c0, %c0_0, %c0_1, %c0_2] : memref<1x4x90x4xbf16, #tpu.memory_space<vmem>>, vector<1x1x72x4xbf16>
    %2 = vector.shape_cast %1 : vector<1x1x72x4xbf16> to vector<72x4xbf16>
    %c0_3 = arith.constant 0 : index
    %c0_4 = arith.constant 0 : index
    %c0_5 = arith.constant 0 : index
    %3 = vector.load %arg2[%c0_3, %c0_4, %c0_5] : memref<9x4x128xbf16, #tpu.memory_space<vmem>>, vector<1x4x128xbf16>
    %4 = vector.shape_cast %3 : vector<1x4x128xbf16> to vector<4x128xbf16>
    %cst_6 = arith.constant dense<0.000000e+00> : vector<72x128xf32>
    %5 = tpu.matmul %2, %4, %cst_6 {dimension_numbers = #tpu.dot_dimension_numbers<[1], [0], [0], [1], [0, 0, 1, 1], [], []>} : vector<72x4xbf16>, vector<4x128xbf16>, vector<72x128xf32> -> vector<72x128xf32>
    %6 = arith.addf %0, %5 : vector<72x128xf32>
    %c0_7 = arith.constant 0 : index
    %c1 = arith.constant 1 : index
    %c0_8 = arith.constant 0 : index
    %c0_9 = arith.constant 0 : index
    %7 = vector.load %arg1[%c0_7, %c1, %c0_8, %c0_9] : memref<1x4x90x4xbf16, #tpu.memory_space<vmem>>, vector<1x1x72x4xbf16>
    %8 = vector.shape_cast %7 : vector<1x1x72x4xbf16> to vector<72x4xbf16>
    %c1_10 = arith.constant 1 : index
    %c0_11 = arith.constant 0 : index
    %c0_12 = arith.constant 0 : index
    %9 = vector.load %arg2[%c1_10, %c0_11, %c0_12] : memref<9x4x128xbf16, #tpu.memory_space<vmem>>, vector<1x4x128xbf16>
    %10 = vector.shape_cast %9 : vector<1x4x128xbf16> to vector<4x128xbf16>
    %cst_13 = arith.constant dense<0.000000e+00> : vector<72x128xf32>
    %11 = tpu.matmul %8, %10, %cst_13 {dimension_numbers = #tpu.dot_dimension_numbers<[1], [0], [0], [1], [0, 0, 1, 1], [], []>} : vector<72x4xbf16>, vector<4x128xbf16>, vector<72x128xf32> -> vector<72x128xf32>
    %12 = arith.addf %6, %11 : vector<72x128xf32>
    %c0_14 = arith.constant 0 : index
    %c0_15 = arith.constant 0 : index
    %c1_16 = arith.constant 1 : index
    %c0_17 = arith.constant 0 : index
    %13 = vector.load %arg1[%c0_14, %c0_15, %c1_16, %c0_17] : memref<1x4x90x4xbf16, #tpu.memory_space<vmem>>, vector<1x1x72x4xbf16>
    %14 = vector.shape_cast %13 : vector<1x1x72x4xbf16> to vector<72x4xbf16>
    %c2 = arith.constant 2 : index
    %c0_18 = arith.constant 0 : index
    %c0_19 = arith.constant 0 : index
    %15 = vector.load %arg2[%c2, %c0_18, %c0_19] : memref<9x4x128xbf16, #tpu.memory_space<vmem>>, vector<1x4x128xbf16>
    %16 = vector.shape_cast %15 : vector<1x4x128xbf16> to vector<4x128xbf16>
    %cst_20 = arith.constant dense<0.000000e+00> : vector<72x128xf32>
    %17 = tpu.matmul %14, %16, %cst_20 {dimension_numbers = #tpu.dot_dimension_numbers<[1], [0], [0], [1], [0, 0, 1, 1], [], []>} : vector<72x4xbf16>, vector<4x128xbf16>, vector<72x128xf32> -> vector<72x128xf32>
    %18 = arith.addf %12, %17 : vector<72x128xf32>
    %c0_21 = arith.constant 0 : index
    %c2_22 = arith.constant 2 : index
    %c0_23 = arith.constant 0 : index
    %c0_24 = arith.constant 0 : index
    %19 = vector.load %arg1[%c0_21, %c2_22, %c0_23, %c0_24] : memref<1x4x90x4xbf16, #tpu.memory_space<vmem>>, vector<1x1x72x4xbf16>
    %20 = vector.shape_cast %19 : vector<1x1x72x4xbf16> to vector<72x4xbf16>
    %c3 = arith.constant 3 : index
    %c0_25 = arith.constant 0 : index
    %c0_26 = arith.constant 0 : index
    %21 = vector.load %arg2[%c3, %c0_25, %c0_26] : memref<9x4x128xbf16, #tpu.memory_space<vmem>>, vector<1x4x128xbf16>
    %22 = vector.shape_cast %21 : vector<1x4x128xbf16> to vector<4x128xbf16>
    %cst_27 = arith.constant dense<0.000000e+00> : vector<72x128xf32>
    %23 = tpu.matmul %20, %22, %cst_27 {dimension_numbers = #tpu.dot_dimension_numbers<[1], [0], [0], [1], [0, 0, 1, 1], [], []>} : vector<72x4xbf16>, vector<4x128xbf16>, vector<72x128xf32> -> vector<72x128xf32>
    %24 = arith.addf %18, %23 : vector<72x128xf32>
    %c0_28 = arith.constant 0 : index
    %c3_29 = arith.constant 3 : index
    %c0_30 = arith.constant 0 : index
    %c0_31 = arith.constant 0 : index
    %25 = vector.load %arg1[%c0_28, %c3_29, %c0_30, %c0_31] : memref<1x4x90x4xbf16, #tpu.memory_space<vmem>>, vector<1x1x72x4xbf16>
    %26 = vector.shape_cast %25 : vector<1x1x72x4xbf16> to vector<72x4xbf16>
    %c4 = arith.constant 4 : index
    %c0_32 = arith.constant 0 : index
    %c0_33 = arith.constant 0 : index
    %27 = vector.load %arg2[%c4, %c0_32, %c0_33] : memref<9x4x128xbf16, #tpu.memory_space<vmem>>, vector<1x4x128xbf16>
    %28 = vector.shape_cast %27 : vector<1x4x128xbf16> to vector<4x128xbf16>
    %cst_34 = arith.constant dense<0.000000e+00> : vector<72x128xf32>
    %29 = tpu.matmul %26, %28, %cst_34 {dimension_numbers = #tpu.dot_dimension_numbers<[1], [0], [0], [1], [0, 0, 1, 1], [], []>} : vector<72x4xbf16>, vector<4x128xbf16>, vector<72x128xf32> -> vector<72x128xf32>
    %30 = arith.addf %24, %29 : vector<72x128xf32>
    %c0_35 = arith.constant 0 : index
    %c2_36 = arith.constant 2 : index
    %c1_37 = arith.constant 1 : index
    %c0_38 = arith.constant 0 : index
    %31 = vector.load %arg1[%c0_35, %c2_36, %c1_37, %c0_38] : memref<1x4x90x4xbf16, #tpu.memory_space<vmem>>, vector<1x1x72x4xbf16>
    %32 = vector.shape_cast %31 : vector<1x1x72x4xbf16> to vector<72x4xbf16>
    %c5 = arith.constant 5 : index
    %c0_39 = arith.constant 0 : index
    %c0_40 = arith.constant 0 : index
    %33 = vector.load %arg2[%c5, %c0_39, %c0_40] : memref<9x4x128xbf16, #tpu.memory_space<vmem>>, vector<1x4x128xbf16>
    %34 = vector.shape_cast %33 : vector<1x4x128xbf16> to vector<4x128xbf16>
    %cst_41 = arith.constant dense<0.000000e+00> : vector<72x128xf32>
    %35 = tpu.matmul %32, %34, %cst_41 {dimension_numbers = #tpu.dot_dimension_numbers<[1], [0], [0], [1], [0, 0, 1, 1], [], []>} : vector<72x4xbf16>, vector<4x128xbf16>, vector<72x128xf32> -> vector<72x128xf32>
    %36 = arith.addf %30, %35 : vector<72x128xf32>
    %c0_42 = arith.constant 0 : index
    %c0_43 = arith.constant 0 : index
    %c9 = arith.constant 9 : index
    %c0_44 = arith.constant 0 : index
    %37 = vector.load %arg1[%c0_42, %c0_43, %c9, %c0_44] : memref<1x4x90x4xbf16, #tpu.memory_space<vmem>>, vector<1x1x72x4xbf16>
    %38 = vector.shape_cast %37 : vector<1x1x72x4xbf16> to vector<72x4xbf16>
    %c6 = arith.constant 6 : index
    %c0_45 = arith.constant 0 : index
    %c0_46 = arith.constant 0 : index
    %39 = vector.load %arg2[%c6, %c0_45, %c0_46] : memref<9x4x128xbf16, #tpu.memory_space<vmem>>, vector<1x4x128xbf16>
    %40 = vector.shape_cast %39 : vector<1x4x128xbf16> to vector<4x128xbf16>
    %cst_47 = arith.constant dense<0.000000e+00> : vector<72x128xf32>
    %41 = tpu.matmul %38, %40, %cst_47 {dimension_numbers = #tpu.dot_dimension_numbers<[1], [0], [0], [1], [0, 0, 1, 1], [], []>} : vector<72x4xbf16>, vector<4x128xbf16>, vector<72x128xf32> -> vector<72x128xf32>
    %42 = arith.addf %36, %41 : vector<72x128xf32>
    %c0_48 = arith.constant 0 : index
    %c1_49 = arith.constant 1 : index
    %c9_50 = arith.constant 9 : index
    %c0_51 = arith.constant 0 : index
    %43 = vector.load %arg1[%c0_48, %c1_49, %c9_50, %c0_51] : memref<1x4x90x4xbf16, #tpu.memory_space<vmem>>, vector<1x1x72x4xbf16>
    %44 = vector.shape_cast %43 : vector<1x1x72x4xbf16> to vector<72x4xbf16>
    %c7 = arith.constant 7 : index
    %c0_52 = arith.constant 0 : index
    %c0_53 = arith.constant 0 : index
    %45 = vector.load %arg2[%c7, %c0_52, %c0_53] : memref<9x4x128xbf16, #tpu.memory_space<vmem>>, vector<1x4x128xbf16>
    %46 = vector.shape_cast %45 : vector<1x4x128xbf16> to vector<4x128xbf16>
    %cst_54 = arith.constant dense<0.000000e+00> : vector<72x128xf32>
    %47 = tpu.matmul %44, %46, %cst_54 {dimension_numbers = #tpu.dot_dimension_numbers<[1], [0], [0], [1], [0, 0, 1, 1], [], []>} : vector<72x4xbf16>, vector<4x128xbf16>, vector<72x128xf32> -> vector<72x128xf32>
    %48 = arith.addf %42, %47 : vector<72x128xf32>
    %c0_55 = arith.constant 0 : index
    %c0_56 = arith.constant 0 : index
    %c10 = arith.constant 10 : index
    %c0_57 = arith.constant 0 : index
    %49 = vector.load %arg1[%c0_55, %c0_56, %c10, %c0_57] : memref<1x4x90x4xbf16, #tpu.memory_space<vmem>>, vector<1x1x72x4xbf16>
    %50 = vector.shape_cast %49 : vector<1x1x72x4xbf16> to vector<72x4xbf16>
    %c8 = arith.constant 8 : index
    %c0_58 = arith.constant 0 : index
    %c0_59 = arith.constant 0 : index
    %51 = vector.load %arg2[%c8, %c0_58, %c0_59] : memref<9x4x128xbf16, #tpu.memory_space<vmem>>, vector<1x4x128xbf16>
    %52 = vector.shape_cast %51 : vector<1x4x128xbf16> to vector<4x128xbf16>
    %cst_60 = arith.constant dense<0.000000e+00> : vector<72x128xf32>
    %53 = tpu.matmul %50, %52, %cst_60 {dimension_numbers = #tpu.dot_dimension_numbers<[1], [0], [0], [1], [0, 0, 1, 1], [], []>} : vector<72x4xbf16>, vector<4x128xbf16>, vector<72x128xf32> -> vector<72x128xf32>
    %54 = arith.addf %48, %53 : vector<72x128xf32>
    %c0_61 = arith.constant 0 : index
    %c0_62 = arith.constant 0 : index
    %55 = vector.load %arg3[%c0_61, %c0_62] : memref<1x128xf32, #tpu.memory_space<vmem>>, vector<1x128xf32>
    %56 = vector.broadcast %55 : vector<1x128xf32> to vector<72x128xf32>
    %57 = arith.addf %54, %56 : vector<72x128xf32>
    %cst_63 = arith.constant 0.000000e+00 : f32
    %58 = vector.broadcast %cst_63 : f32 to vector<72x128xf32>
    %59 = arith.maximumf %57, %58 : vector<72x128xf32>
    %60 = arith.truncf %59 : vector<72x128xf32> to vector<72x128xbf16>
    %c0_64 = arith.constant 0 : index
    %c0_65 = arith.constant 0 : index
    %c0_66 = arith.constant 0 : index
    %61 = vector.load %arg4[%c0_64, %c0_65, %c0_66] : memref<1x72x128xbf16, #tpu.memory_space<vmem>>, vector<1x72x128xbf16>
    %62 = vector.shape_cast %61 : vector<1x72x128xbf16> to vector<72x128xbf16>
    %63 = vector.shape_cast %60 : vector<72x128xbf16> to vector<1x72x128xbf16>
    tpu.vector_store %arg4[%c0_64, %c0_65, %c0_66], %63 {strides = array<i32>} : memref<1x72x128xbf16, #tpu.memory_space<vmem>>, vector<1x72x128xbf16>,
    return
  }
  func.func @transform_0(%arg0: i32) -> (i32, i32, i32, i32) {
    %c0_i32 = arith.constant 0 : i32
    %c0_i32_0 = arith.constant 0 : i32
    %c0_i32_1 = arith.constant 0 : i32
    %c0_i32_2 = arith.constant 0 : i32
    return %arg0, %c0_i32, %c0_i32_0, %c0_i32_1 : i32, i32, i32, i32
  }
  func.func @transform_1(%arg0: i32) -> (i32, i32, i32) {
    %c0_i32 = arith.constant 0 : i32
    %c0_i32_0 = arith.constant 0 : i32
    %c0_i32_1 = arith.constant 0 : i32
    %c0_i32_2 = arith.constant 0 : i32
    return %c0_i32, %c0_i32_0, %c0_i32_1 : i32, i32, i32
  }
  func.func @transform_2(%arg0: i32) -> (i32, i32) {
    %c0_i32 = arith.constant 0 : i32
    %c0_i32_0 = arith.constant 0 : i32
    %c0_i32_1 = arith.constant 0 : i32
    return %c0_i32, %c0_i32_0 : i32, i32
  }
  func.func @transform_3(%arg0: i32) -> (i32, i32, i32) {
    %c0_i32 = arith.constant 0 : i32
    %c0_i32_0 = arith.constant 0 : i32
    %c0_i32_1 = arith.constant 0 : i32
    return %arg0, %c0_i32, %c0_i32_0 : i32, i32, i32
  }
}

module attributes {stable_mosaic.version = 11 : i64} {
  func.func @_conv_bn_kernel(%arg0: i32, %arg1: memref<1x1x110x8xbf16, #tpu.memory_space<vmem>>, %arg2: memref<9x8x128xbf16, #tpu.memory_space<vmem>>, %arg3: memref<1x128xf32, #tpu.memory_space<vmem>>, %arg4: memref<1x80x4xbf16, #tpu.memory_space<vmem>>, %arg5: memref<4x128xbf16, #tpu.memory_space<vmem>>, %arg6: memref<1x128xf32, #tpu.memory_space<vmem>>, %arg7: memref<1x80x128xf32, #tpu.memory_space<vmem>>) attributes {dimension_semantics = [#tpu.dimension_semantics<parallel>], iteration_bounds = array<i64: 2>, scalar_prefetch = 0 : i64, scratch_operands = 0 : i64, tpu.core_type = #tpu.core_type<tc>, window_params = [{transform_indices = @transform_0, window_bounds = array<i64: 1, 1, 110, 8>}, {pipeline_mode = #tpu.pipeline_mode<synchronous>, transform_indices = @transform_1, window_bounds = array<i64: 9, 8, 128>}, {pipeline_mode = #tpu.pipeline_mode<synchronous>, transform_indices = @transform_2, window_bounds = array<i64: 1, 128>}, {transform_indices = @transform_3, window_bounds = array<i64: 1, 80, 4>}, {pipeline_mode = #tpu.pipeline_mode<synchronous>, transform_indices = @transform_4, window_bounds = array<i64: 4, 128>}, {pipeline_mode = #tpu.pipeline_mode<synchronous>, transform_indices = @transform_5, window_bounds = array<i64: 1, 128>}, {transform_indices = @transform_6, window_bounds = array<i64: 1, 80, 128>}]} {
    %cst = arith.constant 0.000000e+00 : f32
    %0 = vector.broadcast %cst : f32 to vector<80x128xf32>
    %c0 = arith.constant 0 : index
    %c0_0 = arith.constant 0 : index
    %c0_1 = arith.constant 0 : index
    %c0_2 = arith.constant 0 : index
    %1 = vector.load %arg1[%c0, %c0_0, %c0_1, %c0_2] : memref<1x1x110x8xbf16, #tpu.memory_space<vmem>>, vector<1x1x80x8xbf16>
    %2 = vector.shape_cast %1 : vector<1x1x80x8xbf16> to vector<80x8xbf16>
    %c0_3 = arith.constant 0 : index
    %c0_4 = arith.constant 0 : index
    %c0_5 = arith.constant 0 : index
    %3 = vector.load %arg2[%c0_3, %c0_4, %c0_5] : memref<9x8x128xbf16, #tpu.memory_space<vmem>>, vector<1x8x128xbf16>
    %4 = vector.shape_cast %3 : vector<1x8x128xbf16> to vector<8x128xbf16>
    %cst_6 = arith.constant dense<0.000000e+00> : vector<80x128xf32>
    %5 = tpu.matmul %2, %4, %cst_6 {dimension_numbers = #tpu.dot_dimension_numbers<[1], [0], [0], [1], [0, 0, 1, 1], [], []>} : vector<80x8xbf16>, vector<8x128xbf16>, vector<80x128xf32> -> vector<80x128xf32>
    %6 = arith.addf %0, %5 : vector<80x128xf32>
    %c0_7 = arith.constant 0 : index
    %c0_8 = arith.constant 0 : index
    %c1 = arith.constant 1 : index
    %c0_9 = arith.constant 0 : index
    %7 = vector.load %arg1[%c0_7, %c0_8, %c1, %c0_9] : memref<1x1x110x8xbf16, #tpu.memory_space<vmem>>, vector<1x1x80x8xbf16>
    %8 = vector.shape_cast %7 : vector<1x1x80x8xbf16> to vector<80x8xbf16>
    %c1_10 = arith.constant 1 : index
    %c0_11 = arith.constant 0 : index
    %c0_12 = arith.constant 0 : index
    %9 = vector.load %arg2[%c1_10, %c0_11, %c0_12] : memref<9x8x128xbf16, #tpu.memory_space<vmem>>, vector<1x8x128xbf16>
    %10 = vector.shape_cast %9 : vector<1x8x128xbf16> to vector<8x128xbf16>
    %cst_13 = arith.constant dense<0.000000e+00> : vector<80x128xf32>
    %11 = tpu.matmul %8, %10, %cst_13 {dimension_numbers = #tpu.dot_dimension_numbers<[1], [0], [0], [1], [0, 0, 1, 1], [], []>} : vector<80x8xbf16>, vector<8x128xbf16>, vector<80x128xf32> -> vector<80x128xf32>
    %12 = arith.addf %6, %11 : vector<80x128xf32>
    %c0_14 = arith.constant 0 : index
    %c0_15 = arith.constant 0 : index
    %c2 = arith.constant 2 : index
    %c0_16 = arith.constant 0 : index
    %13 = vector.load %arg1[%c0_14, %c0_15, %c2, %c0_16] : memref<1x1x110x8xbf16, #tpu.memory_space<vmem>>, vector<1x1x80x8xbf16>
    %14 = vector.shape_cast %13 : vector<1x1x80x8xbf16> to vector<80x8xbf16>
    %c2_17 = arith.constant 2 : index
    %c0_18 = arith.constant 0 : index
    %c0_19 = arith.constant 0 : index
    %15 = vector.load %arg2[%c2_17, %c0_18, %c0_19] : memref<9x8x128xbf16, #tpu.memory_space<vmem>>, vector<1x8x128xbf16>
    %16 = vector.shape_cast %15 : vector<1x8x128xbf16> to vector<8x128xbf16>
    %cst_20 = arith.constant dense<0.000000e+00> : vector<80x128xf32>
    %17 = tpu.matmul %14, %16, %cst_20 {dimension_numbers = #tpu.dot_dimension_numbers<[1], [0], [0], [1], [0, 0, 1, 1], [], []>} : vector<80x8xbf16>, vector<8x128xbf16>, vector<80x128xf32> -> vector<80x128xf32>
    %18 = arith.addf %12, %17 : vector<80x128xf32>
    %c0_21 = arith.constant 0 : index
    %c0_22 = arith.constant 0 : index
    %c10 = arith.constant 10 : index
    %c0_23 = arith.constant 0 : index
    %19 = vector.load %arg1[%c0_21, %c0_22, %c10, %c0_23] : memref<1x1x110x8xbf16, #tpu.memory_space<vmem>>, vector<1x1x80x8xbf16>
    %20 = vector.shape_cast %19 : vector<1x1x80x8xbf16> to vector<80x8xbf16>
    %c3 = arith.constant 3 : index
    %c0_24 = arith.constant 0 : index
    %c0_25 = arith.constant 0 : index
    %21 = vector.load %arg2[%c3, %c0_24, %c0_25] : memref<9x8x128xbf16, #tpu.memory_space<vmem>>, vector<1x8x128xbf16>
    %22 = vector.shape_cast %21 : vector<1x8x128xbf16> to vector<8x128xbf16>
    %cst_26 = arith.constant dense<0.000000e+00> : vector<80x128xf32>
    %23 = tpu.matmul %20, %22, %cst_26 {dimension_numbers = #tpu.dot_dimension_numbers<[1], [0], [0], [1], [0, 0, 1, 1], [], []>} : vector<80x8xbf16>, vector<8x128xbf16>, vector<80x128xf32> -> vector<80x128xf32>
    %24 = arith.addf %18, %23 : vector<80x128xf32>
    %c0_27 = arith.constant 0 : index
    %c0_28 = arith.constant 0 : index
    %c11 = arith.constant 11 : index
    %c0_29 = arith.constant 0 : index
    %25 = vector.load %arg1[%c0_27, %c0_28, %c11, %c0_29] : memref<1x1x110x8xbf16, #tpu.memory_space<vmem>>, vector<1x1x80x8xbf16>
    %26 = vector.shape_cast %25 : vector<1x1x80x8xbf16> to vector<80x8xbf16>
    %c4 = arith.constant 4 : index
    %c0_30 = arith.constant 0 : index
    %c0_31 = arith.constant 0 : index
    %27 = vector.load %arg2[%c4, %c0_30, %c0_31] : memref<9x8x128xbf16, #tpu.memory_space<vmem>>, vector<1x8x128xbf16>
    %28 = vector.shape_cast %27 : vector<1x8x128xbf16> to vector<8x128xbf16>
    %cst_32 = arith.constant dense<0.000000e+00> : vector<80x128xf32>
    %29 = tpu.matmul %26, %28, %cst_32 {dimension_numbers = #tpu.dot_dimension_numbers<[1], [0], [0], [1], [0, 0, 1, 1], [], []>} : vector<80x8xbf16>, vector<8x128xbf16>, vector<80x128xf32> -> vector<80x128xf32>
    %30 = arith.addf %24, %29 : vector<80x128xf32>
    %c0_33 = arith.constant 0 : index
    %c0_34 = arith.constant 0 : index
    %c12 = arith.constant 12 : index
    %c0_35 = arith.constant 0 : index
    %31 = vector.load %arg1[%c0_33, %c0_34, %c12, %c0_35] : memref<1x1x110x8xbf16, #tpu.memory_space<vmem>>, vector<1x1x80x8xbf16>
    %32 = vector.shape_cast %31 : vector<1x1x80x8xbf16> to vector<80x8xbf16>
    %c5 = arith.constant 5 : index
    %c0_36 = arith.constant 0 : index
    %c0_37 = arith.constant 0 : index
    %33 = vector.load %arg2[%c5, %c0_36, %c0_37] : memref<9x8x128xbf16, #tpu.memory_space<vmem>>, vector<1x8x128xbf16>
    %34 = vector.shape_cast %33 : vector<1x8x128xbf16> to vector<8x128xbf16>
    %cst_38 = arith.constant dense<0.000000e+00> : vector<80x128xf32>
    %35 = tpu.matmul %32, %34, %cst_38 {dimension_numbers = #tpu.dot_dimension_numbers<[1], [0], [0], [1], [0, 0, 1, 1], [], []>} : vector<80x8xbf16>, vector<8x128xbf16>, vector<80x128xf32> -> vector<80x128xf32>
    %36 = arith.addf %30, %35 : vector<80x128xf32>
    %c0_39 = arith.constant 0 : index
    %c0_40 = arith.constant 0 : index
    %c20 = arith.constant 20 : index
    %c0_41 = arith.constant 0 : index
    %37 = vector.load %arg1[%c0_39, %c0_40, %c20, %c0_41] : memref<1x1x110x8xbf16, #tpu.memory_space<vmem>>, vector<1x1x80x8xbf16>
    %38 = vector.shape_cast %37 : vector<1x1x80x8xbf16> to vector<80x8xbf16>
    %c6 = arith.constant 6 : index
    %c0_42 = arith.constant 0 : index
    %c0_43 = arith.constant 0 : index
    %39 = vector.load %arg2[%c6, %c0_42, %c0_43] : memref<9x8x128xbf16, #tpu.memory_space<vmem>>, vector<1x8x128xbf16>
    %40 = vector.shape_cast %39 : vector<1x8x128xbf16> to vector<8x128xbf16>
    %cst_44 = arith.constant dense<0.000000e+00> : vector<80x128xf32>
    %41 = tpu.matmul %38, %40, %cst_44 {dimension_numbers = #tpu.dot_dimension_numbers<[1], [0], [0], [1], [0, 0, 1, 1], [], []>} : vector<80x8xbf16>, vector<8x128xbf16>, vector<80x128xf32> -> vector<80x128xf32>
    %42 = arith.addf %36, %41 : vector<80x128xf32>
    %c0_45 = arith.constant 0 : index
    %c0_46 = arith.constant 0 : index
    %c21 = arith.constant 21 : index
    %c0_47 = arith.constant 0 : index
    %43 = vector.load %arg1[%c0_45, %c0_46, %c21, %c0_47] : memref<1x1x110x8xbf16, #tpu.memory_space<vmem>>, vector<1x1x80x8xbf16>
    %44 = vector.shape_cast %43 : vector<1x1x80x8xbf16> to vector<80x8xbf16>
    %c7 = arith.constant 7 : index
    %c0_48 = arith.constant 0 : index
    %c0_49 = arith.constant 0 : index
    %45 = vector.load %arg2[%c7, %c0_48, %c0_49] : memref<9x8x128xbf16, #tpu.memory_space<vmem>>, vector<1x8x128xbf16>
    %46 = vector.shape_cast %45 : vector<1x8x128xbf16> to vector<8x128xbf16>
    %cst_50 = arith.constant dense<0.000000e+00> : vector<80x128xf32>
    %47 = tpu.matmul %44, %46, %cst_50 {dimension_numbers = #tpu.dot_dimension_numbers<[1], [0], [0], [1], [0, 0, 1, 1], [], []>} : vector<80x8xbf16>, vector<8x128xbf16>, vector<80x128xf32> -> vector<80x128xf32>
    %48 = arith.addf %42, %47 : vector<80x128xf32>
    %c0_51 = arith.constant 0 : index
    %c0_52 = arith.constant 0 : index
    %c22 = arith.constant 22 : index
    %c0_53 = arith.constant 0 : index
    %49 = vector.load %arg1[%c0_51, %c0_52, %c22, %c0_53] : memref<1x1x110x8xbf16, #tpu.memory_space<vmem>>, vector<1x1x80x8xbf16>
    %50 = vector.shape_cast %49 : vector<1x1x80x8xbf16> to vector<80x8xbf16>
    %c8 = arith.constant 8 : index
    %c0_54 = arith.constant 0 : index
    %c0_55 = arith.constant 0 : index
    %51 = vector.load %arg2[%c8, %c0_54, %c0_55] : memref<9x8x128xbf16, #tpu.memory_space<vmem>>, vector<1x8x128xbf16>
    %52 = vector.shape_cast %51 : vector<1x8x128xbf16> to vector<8x128xbf16>
    %cst_56 = arith.constant dense<0.000000e+00> : vector<80x128xf32>
    %53 = tpu.matmul %50, %52, %cst_56 {dimension_numbers = #tpu.dot_dimension_numbers<[1], [0], [0], [1], [0, 0, 1, 1], [], []>} : vector<80x8xbf16>, vector<8x128xbf16>, vector<80x128xf32> -> vector<80x128xf32>
    %54 = arith.addf %48, %53 : vector<80x128xf32>
    %c0_57 = arith.constant 0 : index
    %c0_58 = arith.constant 0 : index
    %55 = vector.load %arg3[%c0_57, %c0_58] : memref<1x128xf32, #tpu.memory_space<vmem>>, vector<1x128xf32>
    %56 = vector.broadcast %55 : vector<1x128xf32> to vector<80x128xf32>
    %57 = arith.addf %54, %56 : vector<80x128xf32>
    %c0_59 = arith.constant 0 : index
    %c0_60 = arith.constant 0 : index
    %c0_61 = arith.constant 0 : index
    %58 = vector.load %arg4[%c0_59, %c0_60, %c0_61] : memref<1x80x4xbf16, #tpu.memory_space<vmem>>, vector<1x80x4xbf16>
    %59 = vector.shape_cast %58 : vector<1x80x4xbf16> to vector<80x4xbf16>
    %c0_62 = arith.constant 0 : index
    %c0_63 = arith.constant 0 : index
    %60 = vector.load %arg5[%c0_62, %c0_63] : memref<4x128xbf16, #tpu.memory_space<vmem>>, vector<4x128xbf16>
    %cst_64 = arith.constant dense<0.000000e+00> : vector<80x128xf32>
    %61 = tpu.matmul %59, %60, %cst_64 {dimension_numbers = #tpu.dot_dimension_numbers<[1], [0], [0], [1], [0, 0, 1, 1], [], []>} : vector<80x4xbf16>, vector<4x128xbf16>, vector<80x128xf32> -> vector<80x128xf32>
    %62 = arith.addf %57, %61 : vector<80x128xf32>
    %c0_65 = arith.constant 0 : index
    %c0_66 = arith.constant 0 : index
    %63 = vector.load %arg6[%c0_65, %c0_66] : memref<1x128xf32, #tpu.memory_space<vmem>>, vector<1x128xf32>
    %64 = vector.broadcast %63 : vector<1x128xf32> to vector<80x128xf32>
    %65 = arith.addf %62, %64 : vector<80x128xf32>
    %cst_67 = arith.constant 0.000000e+00 : f32
    %66 = vector.broadcast %cst_67 : f32 to vector<80x128xf32>
    %67 = arith.maximumf %65, %66 : vector<80x128xf32>
    %c0_68 = arith.constant 0 : index
    %c0_69 = arith.constant 0 : index
    %c0_70 = arith.constant 0 : index
    %68 = vector.load %arg7[%c0_68, %c0_69, %c0_70] : memref<1x80x128xf32, #tpu.memory_space<vmem>>, vector<1x80x128xf32>
    %69 = vector.shape_cast %68 : vector<1x80x128xf32> to vector<80x128xf32>
    %70 = vector.shape_cast %67 : vector<80x128xf32> to vector<1x80x128xf32>
    tpu.vector_store %arg7[%c0_68, %c0_69, %c0_70], %70 {strides = array<i32>} : memref<1x80x128xf32, #tpu.memory_space<vmem>>, vector<1x80x128xf32>,
    return
  }
  func.func @transform_0(%arg0: i32) -> (i32, i32, i32, i32) {
    %c0_i32 = arith.constant 0 : i32
    %c0_i32_0 = arith.constant 0 : i32
    %c0_i32_1 = arith.constant 0 : i32
    %c0_i32_2 = arith.constant 0 : i32
    return %arg0, %c0_i32, %c0_i32_0, %c0_i32_1 : i32, i32, i32, i32
  }
  func.func @transform_1(%arg0: i32) -> (i32, i32, i32) {
    %c0_i32 = arith.constant 0 : i32
    %c0_i32_0 = arith.constant 0 : i32
    %c0_i32_1 = arith.constant 0 : i32
    %c0_i32_2 = arith.constant 0 : i32
    return %c0_i32, %c0_i32_0, %c0_i32_1 : i32, i32, i32
  }
  func.func @transform_2(%arg0: i32) -> (i32, i32) {
    %c0_i32 = arith.constant 0 : i32
    %c0_i32_0 = arith.constant 0 : i32
    %c0_i32_1 = arith.constant 0 : i32
    return %c0_i32, %c0_i32_0 : i32, i32
  }
  func.func @transform_3(%arg0: i32) -> (i32, i32, i32) {
    %c0_i32 = arith.constant 0 : i32
    %c0_i32_0 = arith.constant 0 : i32
    %c0_i32_1 = arith.constant 0 : i32
    return %arg0, %c0_i32, %c0_i32_0 : i32, i32, i32
  }
  func.func @transform_4(%arg0: i32) -> (i32, i32) {
    %c0_i32 = arith.constant 0 : i32
    %c0_i32_0 = arith.constant 0 : i32
    %c0_i32_1 = arith.constant 0 : i32
    return %c0_i32, %c0_i32_0 : i32, i32
  }
  func.func @transform_5(%arg0: i32) -> (i32, i32) {
    %c0_i32 = arith.constant 0 : i32
    %c0_i32_0 = arith.constant 0 : i32
    %c0_i32_1 = arith.constant 0 : i32
    return %c0_i32, %c0_i32_0 : i32, i32
  }
  func.func @transform_6(%arg0: i32) -> (i32, i32, i32) {
    %c0_i32 = arith.constant 0 : i32
    %c0_i32_0 = arith.constant 0 : i32
    %c0_i32_1 = arith.constant 0 : i32
    return %arg0, %c0_i32, %c0_i32_0 : i32, i32, i32
  }
}

</mosaic_0001>

<llo_original>
// kernel: basic_block_forward.2
$region0: #{basic_block_forward.2}
  #allocation0 [shape = 'u32[]', space=smem, size = 0x4, offset = 0x4, fixed_abs, tag = 'smem constant byte address 0x4 - core index']
  #allocation1 [shape = 'u32[144,128]{1,0:T(1,128)}', space=vmem, size = 0x12000, scoped, tag = 'internal scratch']
  %s0 = inlined_call_operand.hbm [shape: bf16[2,4,90,4], index: 0, kind: input, shape index: {}]
  %s1 = inlined_call_operand.hbm [shape: bf16[9,4,128], index: 1, kind: input, shape index: {}]
  %s2 = inlined_call_operand.hbm [shape: f32[1,128], index: 2, kind: input, shape index: {}]
  %s3 = inlined_call_operand.hbm [shape: bf16[2,72,128], index: 3, kind: output, shape index: {}]
  %s4 = sld [smem:[#allocation0]]
  $region57: #{basic_block_forward.2} parent=0
    _
  %s6 = ssub.s32 1, %s4
  %s7 = scalar_select 0, %s6, %s4
  $region1: #{basic_block_forward.2} parent=0
    #allocation2 [shape = 'u8[196608]{0}', space=vmem, size = 0x30000, scoped, tag = 'input window, operand 0']
    #allocation3 [shape = 's32[2]{0}', space=sflag, size = 0x8, scoped, tag = 'scoped memory for basic_block_forward.2']
    #allocation4 [shape = 's32[2]{0}', space=sflag, size = 0x8, scoped, tag = 'scoped memory for basic_block_forward.2']
    #allocation5 [shape = 'u8[9216]{0}', space=vmem, size = 0x2400, scoped, tag = 'input window, operand 1, single buffered']
    #allocation6 [shape = 's32[1]{0}', space=sflag, size = 0x4, scoped, tag = 'scoped memory for basic_block_forward.2']
    #allocation7 [shape = 'u8[512]{0}', space=vmem, size = 0x400, scoped, tag = 'input window, operand 2, single buffered']
    #allocation8 [shape = 'u8[36864]{0}', space=vmem, size = 0x9000, scoped, tag = 'output window, operand 0']
    %8 = vsyncpa [#allocation3], 0
    %s9 = scalar_lea.sflag [#allocation3], 1
    %10 = vsyncpa %s9, 0
    %11 = vsyncpa [#allocation6], 0
    %12 = vsyncpa [#allocation4], 0
    %s13 = scalar_lea.sflag [#allocation4], 1
    %14 = vsyncpa %s13, 0
    loop: start=0, step=1, limit=4
    $region2: #{basic_block_forward.2} parent=1 // loop_pre_header
      _
    $region3: #{basic_block_forward.2} parent=1 // loop_header
      %s16 = sphi 0, %s20
      %p17 = scmp.ge.s32.totalorder %s16, 4
      %s26 = sphi 0, %s28
      %s29 = sphi 0, %s26
      %s30 = sphi 0, %s29
      %s46 = sphi 0, %s30
      %s50 = sphi 0, %s50
      %s52 = sphi 0, %s50
      %s53 = sphi 0, %s52
      %s67 = sphi 0, %s53
      %s71 = sphi 0, %s71
      %s73 = sphi 0, %s71
      %s74 = sphi 0, %s73
      %s88 = sphi 0, %s74
      %s94 = sphi 0, %s96
      %s97 = sphi 0, %s94
      %s98 = sphi 0, %s97
      %s114 = sphi 0, %s98
    $region4: #{basic_block_forward.2} parent=1 // loop_header_branch
      %19 = sbr.rel (%p17) target = $region8
    $region5: #{basic_block_forward.2} parent=1 // loop_body
      %s21 = ssub.s32 %s16, 1
      %s22 = ssub.s32 %s16, 2
      %s23 = sadd.s32 %s16, 1
      %s24 = ssub.s32 %s16, %s23
      %p25 = scmp.eq.s32.totalorder %s24, 0
      %s27 = sadd.s32 %s26, 1
      %s28 = scalar_select %p25, %s26, %s27
      %p31 = pneg %p25
      %p32 = scmp.eq.s32.totalorder %s16, 1
      %p33 = por %p31, %p32
      %p34 = scmp.ne.s32.totalorder %s26, %s29
      %p35 = scmp.eq.s32.totalorder %s16, 0
      %p36 = por %p34, %p35
      %p37 = scmp.ne.s32.totalorder %s26, %s29
      %p38 = scmp.eq.s32.totalorder %s21, 1
      %p39 = por %p37, %p38
      %p40 = scmp.ne.s32.totalorder %s29, %s30
      %p41 = scmp.eq.s32.totalorder %s21, 0
      %p42 = por %p40, %p41
      %p43 = scmp.ne.s32.totalorder %s29, %s30
      %p44 = scmp.eq.s32.totalorder %s22, 1
      %p45 = por %p43, %p44
      %p47 = scmp.ne.s32.totalorder %s30, %s46
      %p48 = scmp.eq.s32.totalorder %s22, 0
      %p49 = por %p47, %p48
      %s51 = sadd.s32 %s50, 1
      %p54 = scmp.eq.s32.totalorder %s16, 1
      %p55 = scmp.ne.s32.totalorder %s50, %s52
      %p56 = scmp.eq.s32.totalorder %s16, 0
      %p57 = por %p55, %p56
      %p58 = scmp.ne.s32.totalorder %s50, %s52
      %p59 = scmp.eq.s32.totalorder %s21, 1
      %p60 = por %p58, %p59
      %p61 = scmp.ne.s32.totalorder %s52, %s53
      %p62 = scmp.eq.s32.totalorder %s21, 0
      %p63 = por %p61, %p62
      %p64 = scmp.ne.s32.totalorder %s52, %s53
      %p65 = scmp.eq.s32.totalorder %s22, 1
      %p66 = por %p64, %p65
      %p68 = scmp.ne.s32.totalorder %s53, %s67
      %p69 = scmp.eq.s32.totalorder %s22, 0
      %p70 = por %p68, %p69
      %s72 = sadd.s32 %s71, 1
      %p75 = scmp.eq.s32.totalorder %s16, 1
      %p76 = scmp.ne.s32.totalorder %s71, %s73
      %p77 = scmp.eq.s32.totalorder %s16, 0
      %p78 = por %p76, %p77
      %p79 = scmp.ne.s32.totalorder %s71, %s73
      %p80 = scmp.eq.s32.totalorder %s21, 1
      %p81 = por %p79, %p80
      %p82 = scmp.ne.s32.totalorder %s73, %s74
      %p83 = scmp.eq.s32.totalorder %s21, 0
      %p84 = por %p82, %p83
      %p85 = scmp.ne.s32.totalorder %s73, %s74
      %p86 = scmp.eq.s32.totalorder %s22, 1
      %p87 = por %p85, %p86
      %p89 = scmp.ne.s32.totalorder %s74, %s88
      %p90 = scmp.eq.s32.totalorder %s22, 0
      %p91 = por %p89, %p90
      %s92 = ssub.s32 %s16, %s23
      %p93 = scmp.eq.s32.totalorder %s92, 0
      %s95 = sadd.s32 %s94, 1
      %s96 = scalar_select %p93, %s94, %s95
      %p99 = pneg %p93
      %p100 = scmp.eq.s32.totalorder %s16, 1
      %p101 = por %p99, %p100
      %p102 = scmp.ne.s32.totalorder %s94, %s97
      %p103 = scmp.eq.s32.totalorder %s16, 0
      %p104 = por %p102, %p103
      %p105 = scmp.ne.s32.totalorder %s94, %s97
      %p106 = scmp.eq.s32.totalorder %s21, 1
      %p107 = por %p105, %p106
      %p108 = scmp.ne.s32.totalorder %s97, %s98
      %p109 = scmp.eq.s32.totalorder %s21, 0
      %p110 = por %p108, %p109
      %p111 = scmp.ne.s32.totalorder %s97, %s98
      %p112 = scmp.eq.s32.totalorder %s22, 1
      %p113 = por %p111, %p112
      %p115 = scmp.ne.s32.totalorder %s98, %s114
      %p116 = scmp.eq.s32.totalorder %s22, 0
      %p117 = por %p115, %p116
      %p118 = scmp.le.s32.totalorder 1, %s16
      %p119 = scmp.lt.s32.totalorder %s16, 3
      %p120 = pnand %p118, %p119
      %p121 = pneg %p120
      // Predicated region
      $region9: #{basic_block_forward.2} parent=5 // pred_check
        _
      $region10: #{basic_block_forward.2} parent=5 // pred_check_branch
        %123 = sbr.rel (%p120) target = $region12
      $region11: #{basic_block_forward.2} parent=5 // pred_region
        %s124 = ssub.s32 %s16, 1
        // Predicated region
        $region13: #{basic_block_forward.2} parent=11 // pred_check
          %p125 = pneg %p63
        $region14: #{basic_block_forward.2} parent=11 // pred_check_branch
          %127 = sbr.rel (%p125) target = $region16
        $region15: #{basic_block_forward.2} parent=11 // pred_region
          %s129 = ssub.s32 288, 288
          %130 = vsyncadd [#allocation6], %s129
          %s131 = sshll.u32 [#allocation5], 4
          %s132 = int_to_ptr.vmem [resolvable:$true] %s131
          %137 = dma.hbm_to_vmem [thread:$0]  %s1, 288, %s132, [#allocation6], 32, 32, 2
        $region16: #{basic_block_forward.2} parent=11 // pred_fallthru
          _
        // Predicated region
        $region17: #{basic_block_forward.2} parent=11 // pred_check
          %p138 = pneg %p84
        $region18: #{basic_block_forward.2} parent=11 // pred_check_branch
          %140 = sbr.rel (%p138) target = $region20
        $region19: #{basic_block_forward.2} parent=11 // pred_region
          %s142 = ssub.s32 16, 16
          %143 = vsyncadd [#allocation6], %s142
          %s145 = sshll.u32 [#allocation7], 4
          %s146 = int_to_ptr.vmem [resolvable:$true] %s145
          %148 = dma.hbm_to_vmem [thread:$0]  %s2, 16, %s146, [#allocation6]
        $region20: #{basic_block_forward.2} parent=11 // pred_fallthru
          _
      $region12: #{basic_block_forward.2} parent=5 // pred_fallthru
        _
      %p149 = scmp.lt.s32.totalorder %s16, 2
      // Predicated region
      $region21: #{basic_block_forward.2} parent=5 // pred_check
        %p150 = pneg %p149
      $region22: #{basic_block_forward.2} parent=5 // pred_check_branch
        %152 = sbr.rel (%p150) target = $region24
      $region23: #{basic_block_forward.2} parent=5 // pred_region
        // Predicated region
        $region25: #{basic_block_forward.2} parent=23 // pred_check
          %p153 = pneg %p36
        $region26: #{basic_block_forward.2} parent=23 // pred_check_branch
          %155 = sbr.rel (%p153) target = $region28
        $region27: #{basic_block_forward.2} parent=23 // pred_region
          %s156 = sand.u32 %s26, 1
          %s157 = scalar_lea.sflag [#allocation3], %s156
          %s158 = sand.u32 %s26, 1
          %s159 = smul.addr %s158, 192
          %s160 = scalar_lea.vmem [#allocation2], %s159
          %s162 = ssub.s32 3072, 3072
          %163 = vsyncadd %s157, %s162
          %s164 = smul.addr %s16, 48
          %s165 = smul.addr %s164, 64
          %s166 = scalar_lea.hbm %s0, %s165
          %s167 = sshll.u32 %s160, 4
          %s168 = int_to_ptr.vmem [resolvable:$true] %s167
          %173 = dma.hbm_to_vmem [thread:$0]  %s166, 3072, %s168, %s157, 64, 64, 4
        $region28: #{basic_block_forward.2} parent=23 // pred_fallthru
          _
      $region24: #{basic_block_forward.2} parent=5 // pred_fallthru
        _
      %p174 = scmp.le.s32.totalorder 1, %s16
      %p175 = scmp.lt.s32.totalorder %s16, 3
      %p176 = pnand %p174, %p175
      %p177 = pneg %p176
      // Predicated region
      $region29: #{basic_block_forward.2} parent=5 // pred_check
        _
      $region30: #{basic_block_forward.2} parent=5 // pred_check_branch
        %179 = sbr.rel (%p176) target = $region32
      $region31: #{basic_block_forward.2} parent=5 // pred_region
        %s180 = ssub.s32 %s16, 1
        %s181 = sand.u32 %s29, 1
        %s182 = scalar_lea.sflag [#allocation3], %s181
        %s183 = sand.u32 %s29, 1
        %s184 = smul.addr %s183, 192
        %s185 = scalar_lea.vmem [#allocation2], %s184
        // Predicated region
        $region33: #{basic_block_forward.2} parent=31 // pred_check
          %p186 = pneg %p42
        $region34: #{basic_block_forward.2} parent=31 // pred_check_branch
          %188 = sbr.rel (%p186) target = $region36
        $region35: #{basic_block_forward.2} parent=31 // pred_region
          %189 = dma.done %s182, 3072
        $region36: #{basic_block_forward.2} parent=31 // pred_fallthru
          _
        // Predicated region
        $region37: #{basic_block_forward.2} parent=31 // pred_check
          %p190 = pneg %p63
        $region38: #{basic_block_forward.2} parent=31 // pred_check_branch
          %192 = sbr.rel (%p190) target = $region40
        $region39: #{basic_block_forward.2} parent=31 // pred_region
          %193 = dma.done [#allocation6], 288
        $region40: #{basic_block_forward.2} parent=31 // pred_fallthru
          _
        // Predicated region
        $region41: #{basic_block_forward.2} parent=31 // pred_check
          %p194 = pneg %p84
        $region42: #{basic_block_forward.2} parent=31 // pred_check_branch
          %196 = sbr.rel (%p194) target = $region44
        $region43: #{basic_block_forward.2} parent=31 // pred_region
          %197 = dma.done [#allocation6], 16
        $region44: #{basic_block_forward.2} parent=31 // pred_fallthru
          _
        %s198 = sand.u32 %s29, 1
        %s199 = scalar_lea.sflag [#allocation3], %s198
        %s200 = sand.u32 %s29, 1
        %s201 = smul.addr %s200, 192
        %s202 = scalar_lea.vmem [#allocation2], %s201
        %p203 = pneg %p42
        %p204 = pneg %p39
        %p205 = pneg %p63
        %p206 = pneg %p60
        %p207 = pneg %p84
        %p208 = pneg %p81
        %p209 = pneg %p110
        %p210 = pneg %p107
        %s211 = sand.u32 %s97, 1
        %s212 = scalar_lea.sflag [#allocation4], %s211
        %s213 = sand.u32 %s97, 1
        %s214 = smul.addr %s213, 36
        %s215 = scalar_lea.vmem [#allocation8], %s214
        %v217 = vld [vmem:[%s185] sm:$0xf]
        %v218 = vld [vmem:[%s185 + $0x4] sm:$0xf]
        %v219 = vld [vmem:[%s185 + $0x8] sm:$0xf]
        %v220 = vld [vmem:[%s185 + $0xc] sm:$0xf]
        %v221 = vld [vmem:[%s185 + $0x10] sm:$0xf]
        %v222 = vld [vmem:[%s185 + $0x14] sm:$0xf]
        %v223 = vld [vmem:[%s185 + $0x18] sm:$0xf]
        %v224 = vld [vmem:[%s185 + $0x1c] sm:$0xf]
        %v225 = vld [vmem:[%s185 + $0x20] sm:$0xf]
        %v226 = vld [vmem:[#allocation5] sm:$0x3]
        %s227 = scalar_lea.vmem %s185, 48 [#allocation2]
        %v228 = vld [vmem:[%s227] sm:$0xf]
        %v229 = vld [vmem:[%s227 + $0x4] sm:$0xf]
        %v230 = vld [vmem:[%s227 + $0x8] sm:$0xf]
        %v231 = vld [vmem:[%s227 + $0xc] sm:$0xf]
        %v232 = vld [vmem:[%s227 + $0x10] sm:$0xf]
        %v233 = vld [vmem:[%s227 + $0x14] sm:$0xf]
        %v234 = vld [vmem:[%s227 + $0x18] sm:$0xf]
        %v235 = vld [vmem:[%s227 + $0x1c] sm:$0xf]
        %v236 = vld [vmem:[%s227 + $0x20] sm:$0xf]
        %s237 = scalar_lea.vmem [#allocation5], 2
        %v238 = vld [vmem:[%s237] sm:$0x3]
        %v248 = vunpack.c.l.b16 %v228
        %v249 = vunpack.c.l.b16 %v229
        %v250 = vunpack.c.l.b16 %v230
        %v251 = vunpack.c.l.b16 %v231
        %v252 = vunpack.c.l.b16 %v232
        %v253 = vunpack.c.l.b16 %v233
        %v254 = vunpack.c.l.b16 %v234
        %v255 = vunpack.c.l.b16 %v235
        %v256 = vunpack.c.l.b16 %v236
        %v257 = vpack.c.b16 %v249, %v248
        %v258 = vpack.c.b16 %v251, %v250
        %v259 = vpack.c.b16 %v253, %v252
        %v260 = vpack.c.b16 %v255, %v254
        %v261 = vpack.c.b16 %v256, %v256
        %vm262 = vcmask 31744
        %v264 = vsel %vm262, %v257, 0
        %v267 = vsel %vm262, %v258, 0
        %v270 = vsel %vm262, %v259, 0
        %v273 = vsel %vm262, %v260, 0
        %v276 = vsel %vm262, %v261, 0
        %vm278 = vcmask 1041408
        %v280 = vsel %vm278, %v238, 0
        %282 = vmatprep.subr.bf16.mxu0 0
        %283 = vmatpush1.bf16.msra.mxu0 %v280
        %284 = vmatprep.subr.bf16.mxu0 0
        %285 = vmatpush1.bf16.msra.mxu0 0
        %286 = vmatprep.subr.bf16.mxu0 0
        %287 = vmatpush1.bf16.msra.mxu0 0
        %288 = vmatprep.subr.bf16.mxu0 0
        %289 = vmatpush1.bf16.msra.mxu0 0
        %290 = vmatprep.subr.bf16.mxu0 0
        %291 = vmatpush1.bf16.msra.mxu0 0
        %292 = vmatprep.subr.bf16.mxu0 0
        %293 = vmatpush1.bf16.msra.mxu0 0
        %294 = vmatprep.subr.bf16.mxu0 0
        %295 = vmatpush1.bf16.msra.mxu0 0
        %296 = vmatprep.subr.bf16.mxu0 0
        %297 = vmatpush1.bf16.msra.mxu0 0
        %298 = vmatprep.subr.bf16.mxu0 0
        %299 = vmatpush1.bf16.msra.mxu0 0
        %300 = vmatprep.subr.bf16.mxu0 0
        %301 = vmatpush1.bf16.msra.mxu0 0
        %302 = vmatprep.subr.bf16.mxu0 0
        %303 = vmatpush1.bf16.msra.mxu0 0
        %304 = vmatprep.subr.bf16.mxu0 0
        %305 = vmatpush1.bf16.msra.mxu0 0
        %306 = vmatprep.subr.bf16.mxu0 0
        %307 = vmatpush1.bf16.msra.mxu0 0
        %308 = vmatprep.subr.bf16.mxu0 0
        %309 = vmatpush1.bf16.msra.mxu0 0
        %310 = vmatprep.subr.bf16.mxu0 0
        %311 = vmatpush1.bf16.msra.mxu0 0
        %312 = vmatprep.subr.bf16.mxu0 0
        %313 = vmatpush1.bf16.msra.mxu0 0
        %314 = vmatprep.mubr.bf16.mxu0 0
        %315 = vmatmul.mubr.bf16.gmra.mrb[0].mxu0 %v264
        %v316 = vpop.f32.mrb[0].mxu0
        %v317 = vadd.f32 0.0, %v316
        %v318 = vpop.f32.mrb[0].mxu0
        %v319 = vpop.f32.mrb[0].mxu0
        %v320 = vadd.f32 0.0, %v319
        %v321 = vpop.f32.mrb[0].mxu0
        %322 = vmatprep.mubr.bf16.mxu0 0
        %323 = vmatmul.mubr.bf16.gmra.mrb[0].mxu0 %v267
        %v324 = vpop.f32.mrb[0].mxu0
        %v325 = vadd.f32 0.0, %v324
        %v326 = vpop.f32.mrb[0].mxu0
        %v327 = vpop.f32.mrb[0].mxu0
        %v328 = vadd.f32 0.0, %v327
        %v329 = vpop.f32.mrb[0].mxu0
        %330 = vmatprep.mubr.bf16.mxu0 0
        %331 = vmatmul.mubr.bf16.gmra.mrb[0].mxu0 %v270
        %v332 = vpop.f32.mrb[0].mxu0
        %v333 = vadd.f32 0.0, %v332
        %v334 = vpop.f32.mrb[0].mxu0
        %v335 = vpop.f32.mrb[0].mxu0
        %v336 = vadd.f32 0.0, %v335
        %v337 = vpop.f32.mrb[0].mxu0
        %338 = vmatprep.mubr.bf16.mxu0 0
        %339 = vmatmul.mubr.bf16.gmra.mrb[0].mxu0 %v273
        %v340 = vpop.f32.mrb[0].mxu0
        %v341 = vadd.f32 0.0, %v340
        %v342 = vpop.f32.mrb[0].mxu0
        %v343 = vpop.f32.mrb[0].mxu0
        %v344 = vadd.f32 0.0, %v343
        %v345 = vpop.f32.mrb[0].mxu0
        %346 = vmatprep.mubr.bf16.mxu0 0
        %347 = vmatmul.mubr.bf16.gmra.mrb[0].mxu0 %v276
        %v348 = vpop.f32.mrb[0].mxu0
        %v349 = vadd.f32 0.0, %v348
        %v350 = vpop.f32.mrb[0].mxu0
        %v351 = vpop.f32.mrb[0].mxu0
        %v352 = vpop.f32.mrb[0].mxu0
        %353 = vdwg.mxu0
        %v363 = vunpack.c.l.b16 %v217
        %v364 = vunpack.c.l.b16 %v218
        %v365 = vunpack.c.l.b16 %v219
        %v366 = vunpack.c.l.b16 %v220
        %v367 = vunpack.c.l.b16 %v221
        %v368 = vunpack.c.l.b16 %v222
        %v369 = vunpack.c.l.b16 %v223
        %v370 = vunpack.c.l.b16 %v224
        %v371 = vunpack.c.l.b16 %v225
        %v372 = vpack.c.b16 %v364, %v363
        %v373 = vpack.c.b16 %v366, %v365
        %v374 = vpack.c.b16 %v368, %v367
        %v375 = vpack.c.b16 %v370, %v369
        %v376 = vpack.c.b16 %v371, %v371
        %v378 = vsel %vm262, %v372, 0
        %v381 = vsel %vm262, %v373, 0
        %v384 = vsel %vm262, %v374, 0
        %v387 = vsel %vm262, %v375, 0
        %v390 = vsel %vm262, %v376, 0
        %v393 = vsel %vm278, %v226, 0
        %395 = vmatprep.subr.bf16.mxu0 0
        %396 = vmatpush1.bf16.msra.mxu0 %v393
        %397 = vmatprep.subr.bf16.mxu0 0
        %398 = vmatpush1.bf16.msra.mxu0 0
        %399 = vmatprep.subr.bf16.mxu0 0
        %400 = vmatpush1.bf16.msra.mxu0 0
        %401 = vmatprep.subr.bf16.mxu0 0
        %402 = vmatpush1.bf16.msra.mxu0 0
        %403 = vmatprep.subr.bf16.mxu0 0
        %404 = vmatpush1.bf16.msra.mxu0 0
        %405 = vmatprep.subr.bf16.mxu0 0
        %406 = vmatpush1.bf16.msra.mxu0 0
        %407 = vmatprep.subr.bf16.mxu0 0
        %408 = vmatpush1.bf16.msra.mxu0 0
        %409 = vmatprep.subr.bf16.mxu0 0
        %410 = vmatpush1.bf16.msra.mxu0 0
        %411 = vmatprep.subr.bf16.mxu0 0
        %412 = vmatpush1.bf16.msra.mxu0 0
        %413 = vmatprep.subr.bf16.mxu0 0
        %414 = vmatpush1.bf16.msra.mxu0 0
        %415 = vmatprep.subr.bf16.mxu0 0
        %416 = vmatpush1.bf16.msra.mxu0 0
        %417 = vmatprep.subr.bf16.mxu0 0
        %418 = vmatpush1.bf16.msra.mxu0 0
        %419 = vmatprep.subr.bf16.mxu0 0
        %420 = vmatpush1.bf16.msra.mxu0 0
        %421 = vmatprep.subr.bf16.mxu0 0
        %422 = vmatpush1.bf16.msra.mxu0 0
        %423 = vmatprep.subr.bf16.mxu0 0
        %424 = vmatpush1.bf16.msra.mxu0 0
        %425 = vmatprep.subr.bf16.mxu0 0
        %426 = vmatpush1.bf16.msra.mxu0 0
        %427 = vmatprep.mubr.bf16.mxu0 0
        %428 = vmatmul.mubr.bf16.gmra.mrb[0].mxu0 %v378
        %v429 = vpop.f32.mrb[0].mxu0
        %v430 = vadd.f32 %v317, %v429
        %v431 = vpop.f32.mrb[0].mxu0
        %v432 = vpop.f32.mrb[0].mxu0
        %v433 = vadd.f32 %v320, %v432
        %v434 = vpop.f32.mrb[0].mxu0
        %435 = vmatprep.mubr.bf16.mxu0 0
        %436 = vmatmul.mubr.bf16.gmra.mrb[0].mxu0 %v381
        %v437 = vpop.f32.mrb[0].mxu0
        %v438 = vadd.f32 %v325, %v437
        %v439 = vpop.f32.mrb[0].mxu0
        %v440 = vpop.f32.mrb[0].mxu0
        %v441 = vadd.f32 %v328, %v440
        %v442 = vpop.f32.mrb[0].mxu0
        %443 = vmatprep.mubr.bf16.mxu0 0
        %444 = vmatmul.mubr.bf16.gmra.mrb[0].mxu0 %v384
        %v445 = vpop.f32.mrb[0].mxu0
        %v446 = vadd.f32 %v333, %v445
        %v447 = vpop.f32.mrb[0].mxu0
        %v448 = vpop.f32.mrb[0].mxu0
        %v449 = vadd.f32 %v336, %v448
        %v450 = vpop.f32.mrb[0].mxu0
        %451 = vmatprep.mubr.bf16.mxu0 0
        %452 = vmatmul.mubr.bf16.gmra.mrb[0].mxu0 %v387
        %v453 = vpop.f32.mrb[0].mxu0
        %v454 = vadd.f32 %v341, %v453
        %v455 = vpop.f32.mrb[0].mxu0
        %v456 = vpop.f32.mrb[0].mxu0
        %v457 = vadd.f32 %v344, %v456
        %v458 = vpop.f32.mrb[0].mxu0
        %459 = vmatprep.mubr.bf16.mxu0 0
        %460 = vmatmul.mubr.bf16.gmra.mrb[0].mxu0 %v390
        %v461 = vpop.f32.mrb[0].mxu0
        %v462 = vadd.f32 %v349, %v461
        %v463 = vpop.f32.mrb[0].mxu0
        %v464 = vpop.f32.mrb[0].mxu0
        %v465 = vpop.f32.mrb[0].mxu0
        %466 = vdwg.mxu0
        %v467 = vld [vmem:[%s185] sm:$0xf]
        %v468 = vld [vmem:[%s185 + $0x4] sm:$0xf]
        %v469 = vld [vmem:[%s185 + $0x8] sm:$0xf]
        %v470 = vld [vmem:[%s185 + $0xc] sm:$0xf]
        %v471 = vld [vmem:[%s185 + $0x10] sm:$0xf]
        %v472 = vld [vmem:[%s185 + $0x14] sm:$0xf]
        %v473 = vld [vmem:[%s185 + $0x18] sm:$0xf]
        %v474 = vld [vmem:[%s185 + $0x1c] sm:$0xf]
        %v475 = vld [vmem:[%s185 + $0x20] sm:$0xf]
        %v476 = vld [vmem:[%s185 + $0x24] sm:$0x1]
        %s477 = scalar_lea.vmem [#allocation5], 4
        %v478 = vld [vmem:[%s477] sm:$0x3]
        %v489 = vunpack.c.l.b16 %v467
        %v490 = vunpack.c.l.b16 %v468
        %v491 = vunpack.c.l.b16 %v469
        %v492 = vunpack.c.l.b16 %v470
        %v493 = vunpack.c.l.b16 %v471
        %v494 = vunpack.c.l.b16 %v472
        %v495 = vunpack.c.l.b16 %v473
        %v496 = vunpack.c.l.b16 %v474
        %v497 = vunpack.c.l.b16 %v475
        %v498 = vunpack.c.l.b16 %v476
        %v499 = vpack.c.b16 %v490, %v489
        %v500 = vpack.c.b16 %v492, %v491
        %v501 = vpack.c.b16 %v494, %v493
        %v502 = vpack.c.b16 %v496, %v495
        %v503 = vpack.c.b16 %v498, %v497
        %vm504 = vsmask.f32 7424
        %v506 = vshrl.u32 %v499, 16
        %v508 = vshll.u32 %v499, 16
        %v510 = vrot.slane %v508, 1
        %v511 = vor.u32 %v506, %v510
        %v513 = vshll.u32 %v500, 16
        %v515 = vrot.slane %v513, 1
        %v516 = vsel %vm504, %v511, %v515
        %v517 = vshrl.u32 %v500, 16
        %v519 = vor.u32 %v517, %v515
        %v521 = vshll.u32 %v501, 16
        %v523 = vrot.slane %v521, 1
        %v524 = vsel %vm504, %v519, %v523
        %v525 = vshrl.u32 %v501, 16
        %v527 = vor.u32 %v525, %v523
        %v529 = vshll.u32 %v502, 16
        %v531 = vrot.slane %v529, 1
        %v532 = vsel %vm504, %v527, %v531
        %v533 = vshrl.u32 %v502, 16
        %v535 = vor.u32 %v533, %v531
        %v537 = vshll.u32 %v503, 16
        %v539 = vrot.slane %v537, 1
        %v540 = vsel %vm504, %v535, %v539
        %v541 = vshrl.u32 %v503, 16
        %v543 = vor.u32 %v541, %v539
        %v545 = vsel %vm262, %v516, 0
        %v548 = vsel %vm262, %v524, 0
        %v551 = vsel %vm262, %v532, 0
        %v554 = vsel %vm262, %v540, 0
        %v557 = vsel %vm262, %v543, 0
        %v560 = vsel %vm278, %v478, 0
        %562 = vmatprep.subr.bf16.mxu0 0
        %563 = vmatpush1.bf16.msra.mxu0 %v560
        %564 = vmatprep.subr.bf16.mxu0 0
        %565 = vmatpush1.bf16.msra.mxu0 0
        %566 = vmatprep.subr.bf16.mxu0 0
        %567 = vmatpush1.bf16.msra.mxu0 0
        %568 = vmatprep.subr.bf16.mxu0 0
        %569 = vmatpush1.bf16.msra.mxu0 0
        %570 = vmatprep.subr.bf16.mxu0 0
        %571 = vmatpush1.bf16.msra.mxu0 0
        %572 = vmatprep.subr.bf16.mxu0 0
        %573 = vmatpush1.bf16.msra.mxu0 0
        %574 = vmatprep.subr.bf16.mxu0 0
        %575 = vmatpush1.bf16.msra.mxu0 0
        %576 = vmatprep.subr.bf16.mxu0 0
        %577 = vmatpush1.bf16.msra.mxu0 0
        %578 = vmatprep.subr.bf16.mxu0 0
        %579 = vmatpush1.bf16.msra.mxu0 0
        %580 = vmatprep.subr.bf16.mxu0 0
        %581 = vmatpush1.bf16.msra.mxu0 0
        %582 = vmatprep.subr.bf16.mxu0 0
        %583 = vmatpush1.bf16.msra.mxu0 0
        %584 = vmatprep.subr.bf16.mxu0 0
        %585 = vmatpush1.bf16.msra.mxu0 0
        %586 = vmatprep.subr.bf16.mxu0 0
        %587 = vmatpush1.bf16.msra.mxu0 0
        %588 = vmatprep.subr.bf16.mxu0 0
        %589 = vmatpush1.bf16.msra.mxu0 0
        %590 = vmatprep.subr.bf16.mxu0 0
        %591 = vmatpush1.bf16.msra.mxu0 0
        %592 = vmatprep.subr.bf16.mxu0 0
        %593 = vmatpush1.bf16.msra.mxu0 0
        %594 = vmatprep.mubr.bf16.mxu0 0
        %595 = vmatmul.mubr.bf16.gmra.mrb[0].mxu0 %v545
        %v596 = vpop.f32.mrb[0].mxu0
        %v597 = vadd.f32 0.0, %v596
        %v598 = vpop.f32.mrb[0].mxu0
        %v599 = vpop.f32.mrb[0].mxu0
        %v600 = vadd.f32 0.0, %v599
        %v601 = vpop.f32.mrb[0].mxu0
        %602 = vmatprep.mubr.bf16.mxu0 0
        %603 = vmatmul.mubr.bf16.gmra.mrb[0].mxu0 %v548
        %v604 = vpop.f32.mrb[0].mxu0
        %v605 = vadd.f32 0.0, %v604
        %v606 = vpop.f32.mrb[0].mxu0
        %v607 = vpop.f32.mrb[0].mxu0
        %v608 = vadd.f32 0.0, %v607
        %v609 = vpop.f32.mrb[0].mxu0
        %610 = vmatprep.mubr.bf16.mxu0 0
        %611 = vmatmul.mubr.bf16.gmra.mrb[0].mxu0 %v551
        %v612 = vpop.f32.mrb[0].mxu0
        %v613 = vadd.f32 0.0, %v612
        %v614 = vpop.f32.mrb[0].mxu0
        %v615 = vpop.f32.mrb[0].mxu0
        %v616 = vadd.f32 0.0, %v615
        %v617 = vpop.f32.mrb[0].mxu0
        %618 = vmatprep.mubr.bf16.mxu0 0
        %619 = vmatmul.mubr.bf16.gmra.mrb[0].mxu0 %v554
        %v620 = vpop.f32.mrb[0].mxu0
        %v621 = vadd.f32 0.0, %v620
        %v622 = vpop.f32.mrb[0].mxu0
        %v623 = vpop.f32.mrb[0].mxu0
        %v624 = vadd.f32 0.0, %v623
        %v625 = vpop.f32.mrb[0].mxu0
        %626 = vmatprep.mubr.bf16.mxu0 0
        %627 = vmatmul.mubr.bf16.gmra.mrb[0].mxu0 %v557
        %v628 = vpop.f32.mrb[0].mxu0
        %v629 = vadd.f32 0.0, %v628
        %v630 = vpop.f32.mrb[0].mxu0
        %v631 = vpop.f32.mrb[0].mxu0
        %v632 = vpop.f32.mrb[0].mxu0
        %633 = vdwg.mxu0
        %v634 = vadd.f32 %v430, %v597
        %v635 = vadd.f32 %v433, %v600
        %v636 = vadd.f32 %v438, %v605
        %v637 = vadd.f32 %v441, %v608
        %v638 = vadd.f32 %v446, %v613
        %v639 = vadd.f32 %v449, %v616
        %v640 = vadd.f32 %v454, %v621
        %v641 = vadd.f32 %v457, %v624
        %v642 = vadd.f32 %v462, %v629
        %s643 = scalar_lea.vmem %s185, 96 [#allocation2]
        %v644 = vld [vmem:[%s643] sm:$0xf]
        %v645 = vld [vmem:[%s643 + $0x4] sm:$0xf]
        %v646 = vld [vmem:[%s643 + $0x8] sm:$0xf]
        %v647 = vld [vmem:[%s643 + $0xc] sm:$0xf]
        %v648 = vld [vmem:[%s643 + $0x10] sm:$0xf]
        %v649 = vld [vmem:[%s643 + $0x14] sm:$0xf]
        %v650 = vld [vmem:[%s643 + $0x18] sm:$0xf]
        %v651 = vld [vmem:[%s643 + $0x1c] sm:$0xf]
        %v652 = vld [vmem:[%s643 + $0x20] sm:$0xf]
        %s653 = scalar_lea.vmem [#allocation5], 6
        %v654 = vld [vmem:[%s653] sm:$0x3]
        %v664 = vunpack.c.l.b16 %v644
        %v665 = vunpack.c.l.b16 %v645
        %v666 = vunpack.c.l.b16 %v646
        %v667 = vunpack.c.l.b16 %v647
        %v668 = vunpack.c.l.b16 %v648
        %v669 = vunpack.c.l.b16 %v649
        %v670 = vunpack.c.l.b16 %v650
        %v671 = vunpack.c.l.b16 %v651
        %v672 = vunpack.c.l.b16 %v652
        %v673 = vpack.c.b16 %v665, %v664
        %v674 = vpack.c.b16 %v667, %v666
        %v675 = vpack.c.b16 %v669, %v668
        %v676 = vpack.c.b16 %v671, %v670
        %v677 = vpack.c.b16 %v672, %v672
        %v679 = vsel %vm262, %v673, 0
        %v682 = vsel %vm262, %v674, 0
        %v685 = vsel %vm262, %v675, 0
        %v688 = vsel %vm262, %v676, 0
        %v691 = vsel %vm262, %v677, 0
        %v694 = vsel %vm278, %v654, 0
        %696 = vmatprep.subr.bf16.mxu0 0
        %697 = vmatpush1.bf16.msra.mxu0 %v694
        %698 = vmatprep.subr.bf16.mxu0 0
        %699 = vmatpush1.bf16.msra.mxu0 0
        %700 = vmatprep.subr.bf16.mxu0 0
        %701 = vmatpush1.bf16.msra.mxu0 0
        %702 = vmatprep.subr.bf16.mxu0 0
        %703 = vmatpush1.bf16.msra.mxu0 0
        %704 = vmatprep.subr.bf16.mxu0 0
        %705 = vmatpush1.bf16.msra.mxu0 0
        %706 = vmatprep.subr.bf16.mxu0 0
        %707 = vmatpush1.bf16.msra.mxu0 0
        %708 = vmatprep.subr.bf16.mxu0 0
        %709 = vmatpush1.bf16.msra.mxu0 0
        %710 = vmatprep.subr.bf16.mxu0 0
        %711 = vmatpush1.bf16.msra.mxu0 0
        %712 = vmatprep.subr.bf16.mxu0 0
        %713 = vmatpush1.bf16.msra.mxu0 0
        %714 = vmatprep.subr.bf16.mxu0 0
        %715 = vmatpush1.bf16.msra.mxu0 0
        %716 = vmatprep.subr.bf16.mxu0 0
        %717 = vmatpush1.bf16.msra.mxu0 0
        %718 = vmatprep.subr.bf16.mxu0 0
        %719 = vmatpush1.bf16.msra.mxu0 0
        %720 = vmatprep.subr.bf16.mxu0 0
        %721 = vmatpush1.bf16.msra.mxu0 0
        %722 = vmatprep.subr.bf16.mxu0 0
        %723 = vmatpush1.bf16.msra.mxu0 0
        %724 = vmatprep.subr.bf16.mxu0 0
        %725 = vmatpush1.bf16.msra.mxu0 0
        %726 = vmatprep.subr.bf16.mxu0 0
        %727 = vmatpush1.bf16.msra.mxu0 0
        %728 = vmatprep.mubr.bf16.mxu0 0
        %729 = vmatmul.mubr.bf16.gmra.mrb[0].mxu0 %v679
        %v730 = vpop.f32.mrb[0].mxu0
        %v731 = vadd.f32 0.0, %v730
        %v732 = vpop.f32.mrb[0].mxu0
        %v733 = vpop.f32.mrb[0].mxu0
        %v734 = vadd.f32 0.0, %v733
        %v735 = vpop.f32.mrb[0].mxu0
        %736 = vmatprep.mubr.bf16.mxu0 0
        %737 = vmatmul.mubr.bf16.gmra.mrb[0].mxu0 %v682
        %v738 = vpop.f32.mrb[0].mxu0
        %v739 = vadd.f32 0.0, %v738
        %v740 = vpop.f32.mrb[0].mxu0
        %v741 = vpop.f32.mrb[0].mxu0
        %v742 = vadd.f32 0.0, %v741
        %v743 = vpop.f32.mrb[0].mxu0
        %744 = vmatprep.mubr.bf16.mxu0 0
        %745 = vmatmul.mubr.bf16.gmra.mrb[0].mxu0 %v685
        %v746 = vpop.f32.mrb[0].mxu0
        %v747 = vadd.f32 0.0, %v746
        %v748 = vpop.f32.mrb[0].mxu0
        %v749 = vpop.f32.mrb[0].mxu0
        %v750 = vadd.f32 0.0, %v749
        %v751 = vpop.f32.mrb[0].mxu0
        %752 = vmatprep.mubr.bf16.mxu0 0
        %753 = vmatmul.mubr.bf16.gmra.mrb[0].mxu0 %v688
        %v754 = vpop.f32.mrb[0].mxu0
        %v755 = vadd.f32 0.0, %v754
        %v756 = vpop.f32.mrb[0].mxu0
        %v757 = vpop.f32.mrb[0].mxu0
        %v758 = vadd.f32 0.0, %v757
        %v759 = vpop.f32.mrb[0].mxu0
        %760 = vmatprep.mubr.bf16.mxu0 0
        %761 = vmatmul.mubr.bf16.gmra.mrb[0].mxu0 %v691
        %v762 = vpop.f32.mrb[0].mxu0
        %v763 = vadd.f32 0.0, %v762
        %v764 = vpop.f32.mrb[0].mxu0
        %v765 = vpop.f32.mrb[0].mxu0
        %v766 = vpop.f32.mrb[0].mxu0
        %767 = vdwg.mxu0
        %v768 = vadd.f32 %v634, %v731
        %v769 = vadd.f32 %v635, %v734
        %v770 = vadd.f32 %v636, %v739
        %v771 = vadd.f32 %v637, %v742
        %v772 = vadd.f32 %v638, %v747
        %v773 = vadd.f32 %v639, %v750
        %v774 = vadd.f32 %v640, %v755
        %v775 = vadd.f32 %v641, %v758
        %v776 = vadd.f32 %v642, %v763
        %s777 = scalar_lea.vmem %s185, 144 [#allocation2]
        %v778 = vld [vmem:[%s777] sm:$0xf]
        %v779 = vld [vmem:[%s777 + $0x4] sm:$0xf]
        %v780 = vld [vmem:[%s777 + $0x8] sm:$0xf]
        %v781 = vld [vmem:[%s777 + $0xc] sm:$0xf]
        %v782 = vld [vmem:[%s777 + $0x10] sm:$0xf]
        %v783 = vld [vmem:[%s777 + $0x14] sm:$0xf]
        %v784 = vld [vmem:[%s777 + $0x18] sm:$0xf]
        %v785 = vld [vmem:[%s777 + $0x1c] sm:$0xf]
        %v786 = vld [vmem:[%s777 + $0x20] sm:$0xf]
        %s787 = scalar_lea.vmem [#allocation5], 8
        %v788 = vld [vmem:[%s787] sm:$0x3]
        %v798 = vunpack.c.l.b16 %v778
        %v799 = vunpack.c.l.b16 %v779
        %v800 = vunpack.c.l.b16 %v780
        %v801 = vunpack.c.l.b16 %v781
        %v802 = vunpack.c.l.b16 %v782
        %v803 = vunpack.c.l.b16 %v783
        %v804 = vunpack.c.l.b16 %v784
        %v805 = vunpack.c.l.b16 %v785
        %v806 = vunpack.c.l.b16 %v786
        %v807 = vpack.c.b16 %v799, %v798
        %v808 = vpack.c.b16 %v801, %v800
        %v809 = vpack.c.b16 %v803, %v802
        %v810 = vpack.c.b16 %v805, %v804
        %v811 = vpack.c.b16 %v806, %v806
        %v813 = vsel %vm262, %v807, 0
        %v816 = vsel %vm262, %v808, 0
        %v819 = vsel %vm262, %v809, 0
        %v822 = vsel %vm262, %v810, 0
        %v825 = vsel %vm262, %v811, 0
        %v828 = vsel %vm278, %v788, 0
        %830 = vmatprep.subr.bf16.mxu0 0
        %831 = vmatpush1.bf16.msra.mxu0 %v828
        %832 = vmatprep.subr.bf16.mxu0 0
        %833 = vmatpush1.bf16.msra.mxu0 0
        %834 = vmatprep.subr.bf16.mxu0 0
        %835 = vmatpush1.bf16.msra.mxu0 0
        %836 = vmatprep.subr.bf16.mxu0 0
        %837 = vmatpush1.bf16.msra.mxu0 0
        %838 = vmatprep.subr.bf16.mxu0 0
        %839 = vmatpush1.bf16.msra.mxu0 0
        %840 = vmatprep.subr.bf16.mxu0 0
        %841 = vmatpush1.bf16.msra.mxu0 0
        %842 = vmatprep.subr.bf16.mxu0 0
        %843 = vmatpush1.bf16.msra.mxu0 0
        %844 = vmatprep.subr.bf16.mxu0 0
        %845 = vmatpush1.bf16.msra.mxu0 0
        %846 = vmatprep.subr.bf16.mxu0 0
        %847 = vmatpush1.bf16.msra.mxu0 0
        %848 = vmatprep.subr.bf16.mxu0 0
        %849 = vmatpush1.bf16.msra.mxu0 0
        %850 = vmatprep.subr.bf16.mxu0 0
        %851 = vmatpush1.bf16.msra.mxu0 0
        %852 = vmatprep.subr.bf16.mxu0 0
        %853 = vmatpush1.bf16.msra.mxu0 0
        %854 = vmatprep.subr.bf16.mxu0 0
        %855 = vmatpush1.bf16.msra.mxu0 0
        %856 = vmatprep.subr.bf16.mxu0 0
        %857 = vmatpush1.bf16.msra.mxu0 0
        %858 = vmatprep.subr.bf16.mxu0 0
        %859 = vmatpush1.bf16.msra.mxu0 0
        %860 = vmatprep.subr.bf16.mxu0 0
        %861 = vmatpush1.bf16.msra.mxu0 0
        %862 = vmatprep.mubr.bf16.mxu0 0
        %863 = vmatmul.mubr.bf16.gmra.mrb[0].mxu0 %v813
        %v864 = vpop.f32.mrb[0].mxu0
        %v865 = vadd.f32 0.0, %v864
        %v866 = vpop.f32.mrb[0].mxu0
        %v867 = vpop.f32.mrb[0].mxu0
        %v868 = vadd.f32 0.0, %v867
        %v869 = vpop.f32.mrb[0].mxu0
        %870 = vmatprep.mubr.bf16.mxu0 0
        %871 = vmatmul.mubr.bf16.gmra.mrb[0].mxu0 %v816
        %v872 = vpop.f32.mrb[0].mxu0
        %v873 = vadd.f32 0.0, %v872
        %v874 = vpop.f32.mrb[0].mxu0
        %v875 = vpop.f32.mrb[0].mxu0
        %v876 = vadd.f32 0.0, %v875
        %v877 = vpop.f32.mrb[0].mxu0
        %878 = vmatprep.mubr.bf16.mxu0 0
        %879 = vmatmul.mubr.bf16.gmra.mrb[0].mxu0 %v819
        %v880 = vpop.f32.mrb[0].mxu0
        %v881 = vadd.f32 0.0, %v880
        %v882 = vpop.f32.mrb[0].mxu0
        %v883 = vpop.f32.mrb[0].mxu0
        %v884 = vadd.f32 0.0, %v883
        %v885 = vpop.f32.mrb[0].mxu0
        %886 = vmatprep.mubr.bf16.mxu0 0
        %887 = vmatmul.mubr.bf16.gmra.mrb[0].mxu0 %v822
        %v888 = vpop.f32.mrb[0].mxu0
        %v889 = vadd.f32 0.0, %v888
        %v890 = vpop.f32.mrb[0].mxu0
        %v891 = vpop.f32.mrb[0].mxu0
        %v892 = vadd.f32 0.0, %v891
        %v893 = vpop.f32.mrb[0].mxu0
        %894 = vmatprep.mubr.bf16.mxu0 0
        %895 = vmatmul.mubr.bf16.gmra.mrb[0].mxu0 %v825
        %v896 = vpop.f32.mrb[0].mxu0
        %v897 = vadd.f32 0.0, %v896
        %v898 = vpop.f32.mrb[0].mxu0
        %v899 = vpop.f32.mrb[0].mxu0
        %v900 = vpop.f32.mrb[0].mxu0
        %901 = vdwg.mxu0
        %v902 = vadd.f32 %v768, %v865
        %v903 = vadd.f32 %v769, %v868
        %v904 = vadd.f32 %v770, %v873
        %v905 = vadd.f32 %v771, %v876
        %v906 = vadd.f32 %v772, %v881
        %v907 = vadd.f32 %v773, %v884
        %v908 = vadd.f32 %v774, %v889
        %v909 = vadd.f32 %v775, %v892
        %v910 = vadd.f32 %v776, %v897
        %v911 = vld [vmem:[%s643] sm:$0xf]
        %v912 = vld [vmem:[%s643 + $0x4] sm:$0xf]
        %v913 = vld [vmem:[%s643 + $0x8] sm:$0xf]
        %v914 = vld [vmem:[%s643 + $0xc] sm:$0xf]
        %v915 = vld [vmem:[%s643 + $0x10] sm:$0xf]
        %v916 = vld [vmem:[%s643 + $0x14] sm:$0xf]
        %v917 = vld [vmem:[%s643 + $0x18] sm:$0xf]
        %v918 = vld [vmem:[%s643 + $0x1c] sm:$0xf]
        %v919 = vld [vmem:[%s643 + $0x20] sm:$0xf]
        %v920 = vld [vmem:[%s643 + $0x24] sm:$0x1]
        %s921 = scalar_lea.vmem [#allocation5], 10
        %v922 = vld [vmem:[%s921] sm:$0x3]
        %v933 = vunpack.c.l.b16 %v911
        %v934 = vunpack.c.l.b16 %v912
        %v935 = vunpack.c.l.b16 %v913
        %v936 = vunpack.c.l.b16 %v914
        %v937 = vunpack.c.l.b16 %v915
        %v938 = vunpack.c.l.b16 %v916
        %v939 = vunpack.c.l.b16 %v917
        %v940 = vunpack.c.l.b16 %v918
        %v941 = vunpack.c.l.b16 %v919
        %v942 = vunpack.c.l.b16 %v920
        %v943 = vpack.c.b16 %v934, %v933
        %v944 = vpack.c.b16 %v936, %v935
        %v945 = vpack.c.b16 %v938, %v937
        %v946 = vpack.c.b16 %v940, %v939
        %v947 = vpack.c.b16 %v942, %v941
        %v949 = vshrl.u32 %v943, 16
        %v951 = vshll.u32 %v943, 16
        %v953 = vrot.slane %v951, 1
        %v954 = vor.u32 %v949, %v953
        %v956 = vshll.u32 %v944, 16
        %v958 = vrot.slane %v956, 1
        %v959 = vsel %vm504, %v954, %v958
        %v960 = vshrl.u32 %v944, 16
        %v962 = vor.u32 %v960, %v958
        %v964 = vshll.u32 %v945, 16
        %v966 = vrot.slane %v964, 1
        %v967 = vsel %vm504, %v962, %v966
        %v968 = vshrl.u32 %v945, 16
        %v970 = vor.u32 %v968, %v966
        %v972 = vshll.u32 %v946, 16
        %v974 = vrot.slane %v972, 1
        %v975 = vsel %vm504, %v970, %v974
        %v976 = vshrl.u32 %v946, 16
        %v978 = vor.u32 %v976, %v974
        %v980 = vshll.u32 %v947, 16
        %v982 = vrot.slane %v980, 1
        %v983 = vsel %vm504, %v978, %v982
        %v984 = vshrl.u32 %v947, 16
        %v986 = vor.u32 %v984, %v982
        %v988 = vsel %vm262, %v959, 0
        %v991 = vsel %vm262, %v967, 0
        %v994 = vsel %vm262, %v975, 0
        %v997 = vsel %vm262, %v983, 0
        %v1000 = vsel %vm262, %v986, 0
        %v1003 = vsel %vm278, %v922, 0
        %1005 = vmatprep.subr.bf16.mxu0 0
        %1006 = vmatpush1.bf16.msra.mxu0 %v1003
        %1007 = vmatprep.subr.bf16.mxu0 0
        %1008 = vmatpush1.bf16.msra.mxu0 0
        %1009 = vmatprep.subr.bf16.mxu0 0
        %1010 = vmatpush1.bf16.msra.mxu0 0
        %1011 = vmatprep.subr.bf16.mxu0 0
        %1012 = vmatpush1.bf16.msra.mxu0 0
        %1013 = vmatprep.subr.bf16.mxu0 0
        %1014 = vmatpush1.bf16.msra.mxu0 0
        %1015 = vmatprep.subr.bf16.mxu0 0
        %1016 = vmatpush1.bf16.msra.mxu0 0
        %1017 = vmatprep.subr.bf16.mxu0 0
        %1018 = vmatpush1.bf16.msra.mxu0 0
        %1019 = vmatprep.subr.bf16.mxu0 0
        %1020 = vmatpush1.bf16.msra.mxu0 0
        %1021 = vmatprep.subr.bf16.mxu0 0
        %1022 = vmatpush1.bf16.msra.mxu0 0
        %1023 = vmatprep.subr.bf16.mxu0 0
        %1024 = vmatpush1.bf16.msra.mxu0 0
        %1025 = vmatprep.subr.bf16.mxu0 0
        %1026 = vmatpush1.bf16.msra.mxu0 0
        %1027 = vmatprep.subr.bf16.mxu0 0
        %1028 = vmatpush1.bf16.msra.mxu0 0
        %1029 = vmatprep.subr.bf16.mxu0 0
        %1030 = vmatpush1.bf16.msra.mxu0 0
        %1031 = vmatprep.subr.bf16.mxu0 0
        %1032 = vmatpush1.bf16.msra.mxu0 0
        %1033 = vmatprep.subr.bf16.mxu0 0
        %1034 = vmatpush1.bf16.msra.mxu0 0
        %1035 = vmatprep.subr.bf16.mxu0 0
        %1036 = vmatpush1.bf16.msra.mxu0 0
        %1037 = vmatprep.mubr.bf16.mxu0 0
        %1038 = vmatmul.mubr.bf16.gmra.mrb[0].mxu0 %v988
        %v1039 = vpop.f32.mrb[0].mxu0
        %v1040 = vadd.f32 0.0, %v1039
        %v1041 = vpop.f32.mrb[0].mxu0
        %v1042 = vpop.f32.mrb[0].mxu0
        %v1043 = vadd.f32 0.0, %v1042
        %v1044 = vpop.f32.mrb[0].mxu0
        %1045 = vmatprep.mubr.bf16.mxu0 0
        %1046 = vmatmul.mubr.bf16.gmra.mrb[0].mxu0 %v991
        %v1047 = vpop.f32.mrb[0].mxu0
        %v1048 = vadd.f32 0.0, %v1047
        %v1049 = vpop.f32.mrb[0].mxu0
        %v1050 = vpop.f32.mrb[0].mxu0
        %v1051 = vadd.f32 0.0, %v1050
        %v1052 = vpop.f32.mrb[0].mxu0
        %1053 = vmatprep.mubr.bf16.mxu0 0
        %1054 = vmatmul.mubr.bf16.gmra.mrb[0].mxu0 %v994
        %v1055 = vpop.f32.mrb[0].mxu0
        %v1056 = vadd.f32 0.0, %v1055
        %v1057 = vpop.f32.mrb[0].mxu0
        %v1058 = vpop.f32.mrb[0].mxu0
        %v1059 = vadd.f32 0.0, %v1058
        %v1060 = vpop.f32.mrb[0].mxu0
        %1061 = vmatprep.mubr.bf16.mxu0 0
        %1062 = vmatmul.mubr.bf16.gmra.mrb[0].mxu0 %v997
        %v1063 = vpop.f32.mrb[0].mxu0
        %v1064 = vadd.f32 0.0, %v1063
        %v1065 = vpop.f32.mrb[0].mxu0
        %v1066 = vpop.f32.mrb[0].mxu0
        %v1067 = vadd.f32 0.0, %v1066
        %v1068 = vpop.f32.mrb[0].mxu0
        %1069 = vmatprep.mubr.bf16.mxu0 0
        %1070 = vmatmul.mubr.bf16.gmra.mrb[0].mxu0 %v1000
        %v1071 = vpop.f32.mrb[0].mxu0
        %v1072 = vadd.f32 0.0, %v1071
        %v1073 = vpop.f32.mrb[0].mxu0
        %v1074 = vpop.f32.mrb[0].mxu0
        %v1075 = vpop.f32.mrb[0].mxu0
        %1076 = vdwg.mxu0
        %v1077 = vadd.f32 %v902, %v1040
        %v1078 = vadd.f32 %v903, %v1043
        %v1079 = vadd.f32 %v904, %v1048
        %v1080 = vadd.f32 %v905, %v1051
        %v1081 = vadd.f32 %v906, %v1056
        %v1082 = vadd.f32 %v907, %v1059
        %v1083 = vadd.f32 %v908, %v1064
        %v1084 = vadd.f32 %v909, %v1067
        %v1085 = vadd.f32 %v910, %v1072
        %v1086 = vld [vmem:[%s185 + $0x4] sm:$0xf]
        %v1087 = vld [vmem:[%s185 + $0x8] sm:$0xf]
        %v1088 = vld [vmem:[%s185 + $0xc] sm:$0xf]
        %v1089 = vld [vmem:[%s185 + $0x10] sm:$0xf]
        %v1090 = vld [vmem:[%s185 + $0x14] sm:$0xf]
        %v1091 = vld [vmem:[%s185 + $0x18] sm:$0xf]
        %v1092 = vld [vmem:[%s185 + $0x1c] sm:$0xf]
        %v1093 = vld [vmem:[%s185 + $0x20] sm:$0xf]
        %v1094 = vld [vmem:[%s185 + $0x24] sm:$0xf]
        %v1095 = vld [vmem:[%s185 + $0x28] sm:$0x1]
        %s1096 = scalar_lea.vmem [#allocation5], 12
        %v1097 = vld [vmem:[%s1096] sm:$0x3]
        %v1108 = vunpack.c.l.b16 %v1086
        %v1109 = vunpack.c.l.b16 %v1087
        %v1110 = vunpack.c.l.b16 %v1088
        %v1111 = vunpack.c.l.b16 %v1089
        %v1112 = vunpack.c.l.b16 %v1090
        %v1113 = vunpack.c.l.b16 %v1091
        %v1114 = vunpack.c.l.b16 %v1092
        %v1115 = vunpack.c.l.b16 %v1093
        %v1116 = vunpack.c.l.b16 %v1094
        %v1117 = vunpack.c.l.b16 %v1095
        %v1118 = vpack.c.b16 %v1109, %v1108
        %v1119 = vpack.c.b16 %v1111, %v1110
        %v1120 = vpack.c.b16 %v1113, %v1112
        %v1121 = vpack.c.b16 %v1115, %v1114
        %v1122 = vpack.c.b16 %v1117, %v1116
        %v1124 = vshrl.u32 %v1118, 16
        %v1126 = vshll.u32 %v1118, 16
        %v1128 = vrot.slane %v1126, 1
        %v1129 = vor.u32 %v1124, %v1128
        %v1131 = vshll.u32 %v1119, 16
        %v1133 = vrot.slane %v1131, 1
        %v1134 = vsel %vm504, %v1129, %v1133
        %v1135 = vshrl.u32 %v1119, 16
        %v1137 = vor.u32 %v1135, %v1133
        %v1139 = vshll.u32 %v1120, 16
        %v1141 = vrot.slane %v1139, 1
        %v1142 = vsel %vm504, %v1137, %v1141
        %v1143 = vshrl.u32 %v1120, 16
        %v1145 = vor.u32 %v1143, %v1141
        %v1147 = vshll.u32 %v1121, 16
        %v1149 = vrot.slane %v1147, 1
        %v1150 = vsel %vm504, %v1145, %v1149
        %v1151 = vshrl.u32 %v1121, 16
        %v1153 = vor.u32 %v1151, %v1149
        %v1155 = vshll.u32 %v1122, 16
        %v1157 = vrot.slane %v1155, 1
        %v1158 = vsel %vm504, %v1153, %v1157
        %v1159 = vshrl.u32 %v1122, 16
        %v1161 = vor.u32 %v1159, %v1157
        %v1163 = vsel %vm262, %v1134, 0
        %v1166 = vsel %vm262, %v1142, 0
        %v1169 = vsel %vm262, %v1150, 0
        %v1172 = vsel %vm262, %v1158, 0
        %v1175 = vsel %vm262, %v1161, 0
        %v1178 = vsel %vm278, %v1097, 0
        %1180 = vmatprep.subr.bf16.mxu0 0
        %1181 = vmatpush1.bf16.msra.mxu0 %v1178
        %1182 = vmatprep.subr.bf16.mxu0 0
        %1183 = vmatpush1.bf16.msra.mxu0 0
        %1184 = vmatprep.subr.bf16.mxu0 0
        %1185 = vmatpush1.bf16.msra.mxu0 0
        %1186 = vmatprep.subr.bf16.mxu0 0
        %1187 = vmatpush1.bf16.msra.mxu0 0
        %1188 = vmatprep.subr.bf16.mxu0 0
        %1189 = vmatpush1.bf16.msra.mxu0 0
        %1190 = vmatprep.subr.bf16.mxu0 0
        %1191 = vmatpush1.bf16.msra.mxu0 0
        %1192 = vmatprep.subr.bf16.mxu0 0
        %1193 = vmatpush1.bf16.msra.mxu0 0
        %1194 = vmatprep.subr.bf16.mxu0 0
        %1195 = vmatpush1.bf16.msra.mxu0 0
        %1196 = vmatprep.subr.bf16.mxu0 0
        %1197 = vmatpush1.bf16.msra.mxu0 0
        %1198 = vmatprep.subr.bf16.mxu0 0
        %1199 = vmatpush1.bf16.msra.mxu0 0
        %1200 = vmatprep.subr.bf16.mxu0 0
        %1201 = vmatpush1.bf16.msra.mxu0 0
        %1202 = vmatprep.subr.bf16.mxu0 0
        %1203 = vmatpush1.bf16.msra.mxu0 0
        %1204 = vmatprep.subr.bf16.mxu0 0
        %1205 = vmatpush1.bf16.msra.mxu0 0
        %1206 = vmatprep.subr.bf16.mxu0 0
        %1207 = vmatpush1.bf16.msra.mxu0 0
        %1208 = vmatprep.subr.bf16.mxu0 0
        %1209 = vmatpush1.bf16.msra.mxu0 0
        %1210 = vmatprep.subr.bf16.mxu0 0
        %1211 = vmatpush1.bf16.msra.mxu0 0
        %1212 = vmatprep.mubr.bf16.mxu0 0
        %1213 = vmatmul.mubr.bf16.gmra.mrb[0].mxu0 %v1163
        %v1214 = vpop.f32.mrb[0].mxu0
        %v1215 = vadd.f32 0.0, %v1214
        %v1216 = vpop.f32.mrb[0].mxu0
        %v1217 = vpop.f32.mrb[0].mxu0
        %v1218 = vadd.f32 0.0, %v1217
        %v1219 = vpop.f32.mrb[0].mxu0
        %1220 = vmatprep.mubr.bf16.mxu0 0
        %1221 = vmatmul.mubr.bf16.gmra.mrb[0].mxu0 %v1166
        %v1222 = vpop.f32.mrb[0].mxu0
        %v1223 = vadd.f32 0.0, %v1222
        %v1224 = vpop.f32.mrb[0].mxu0
        %v1225 = vpop.f32.mrb[0].mxu0
        %v1226 = vadd.f32 0.0, %v1225
        %v1227 = vpop.f32.mrb[0].mxu0
        %1228 = vmatprep.mubr.bf16.mxu0 0
        %1229 = vmatmul.mubr.bf16.gmra.mrb[0].mxu0 %v1169
        %v1230 = vpop.f32.mrb[0].mxu0
        %v1231 = vadd.f32 0.0, %v1230
        %v1232 = vpop.f32.mrb[0].mxu0
        %v1233 = vpop.f32.mrb[0].mxu0
        %v1234 = vadd.f32 0.0, %v1233
        %v1235 = vpop.f32.mrb[0].mxu0
        %1236 = vmatprep.mubr.bf16.mxu0 0
        %1237 = vmatmul.mubr.bf16.gmra.mrb[0].mxu0 %v1172
        %v1238 = vpop.f32.mrb[0].mxu0
        %v1239 = vadd.f32 0.0, %v1238
        %v1240 = vpop.f32.mrb[0].mxu0
        %v1241 = vpop.f32.mrb[0].mxu0
        %v1242 = vadd.f32 0.0, %v1241
        %v1243 = vpop.f32.mrb[0].mxu0
        %1244 = vmatprep.mubr.bf16.mxu0 0
        %1245 = vmatmul.mubr.bf16.gmra.mrb[0].mxu0 %v1175
        %v1246 = vpop.f32.mrb[0].mxu0
        %v1247 = vadd.f32 0.0, %v1246
        %v1248 = vpop.f32.mrb[0].mxu0
        %v1249 = vpop.f32.mrb[0].mxu0
        %v1250 = vpop.f32.mrb[0].mxu0
        %1251 = vdwg.mxu0
        %v1252 = vadd.f32 %v1077, %v1215
        %v1253 = vadd.f32 %v1078, %v1218
        %v1254 = vadd.f32 %v1079, %v1223
        %v1255 = vadd.f32 %v1080, %v1226
        %v1256 = vadd.f32 %v1081, %v1231
        %v1257 = vadd.f32 %v1082, %v1234
        %v1258 = vadd.f32 %v1083, %v1239
        %v1259 = vadd.f32 %v1084, %v1242
        %v1260 = vadd.f32 %v1085, %v1247
        %v1261 = vld [vmem:[%s227 + $0x4] sm:$0xf]
        %v1262 = vld [vmem:[%s227 + $0x8] sm:$0xf]
        %v1263 = vld [vmem:[%s227 + $0xc] sm:$0xf]
        %v1264 = vld [vmem:[%s227 + $0x10] sm:$0xf]
        %v1265 = vld [vmem:[%s227 + $0x14] sm:$0xf]
        %v1266 = vld [vmem:[%s227 + $0x18] sm:$0xf]
        %v1267 = vld [vmem:[%s227 + $0x1c] sm:$0xf]
        %v1268 = vld [vmem:[%s227 + $0x20] sm:$0xf]
        %v1269 = vld [vmem:[%s227 + $0x24] sm:$0xf]
        %v1270 = vld [vmem:[%s227 + $0x28] sm:$0x1]
        %s1271 = scalar_lea.vmem [#allocation5], 14
        %v1272 = vld [vmem:[%s1271] sm:$0x3]
        %v1283 = vunpack.c.l.b16 %v1261
        %v1284 = vunpack.c.l.b16 %v1262
        %v1285 = vunpack.c.l.b16 %v1263
        %v1286 = vunpack.c.l.b16 %v1264
        %v1287 = vunpack.c.l.b16 %v1265
        %v1288 = vunpack.c.l.b16 %v1266
        %v1289 = vunpack.c.l.b16 %v1267
        %v1290 = vunpack.c.l.b16 %v1268
        %v1291 = vunpack.c.l.b16 %v1269
        %v1292 = vunpack.c.l.b16 %v1270
        %v1293 = vpack.c.b16 %v1284, %v1283
        %v1294 = vpack.c.b16 %v1286, %v1285
        %v1295 = vpack.c.b16 %v1288, %v1287
        %v1296 = vpack.c.b16 %v1290, %v1289
        %v1297 = vpack.c.b16 %v1292, %v1291
        %v1299 = vshrl.u32 %v1293, 16
        %v1301 = vshll.u32 %v1293, 16
        %v1303 = vrot.slane %v1301, 1
        %v1304 = vor.u32 %v1299, %v1303
        %v1306 = vshll.u32 %v1294, 16
        %v1308 = vrot.slane %v1306, 1
        %v1309 = vsel %vm504, %v1304, %v1308
        %v1310 = vshrl.u32 %v1294, 16
        %v1312 = vor.u32 %v1310, %v1308
        %v1314 = vshll.u32 %v1295, 16
        %v1316 = vrot.slane %v1314, 1
        %v1317 = vsel %vm504, %v1312, %v1316
        %v1318 = vshrl.u32 %v1295, 16
        %v1320 = vor.u32 %v1318, %v1316
        %v1322 = vshll.u32 %v1296, 16
        %v1324 = vrot.slane %v1322, 1
        %v1325 = vsel %vm504, %v1320, %v1324
        %v1326 = vshrl.u32 %v1296, 16
        %v1328 = vor.u32 %v1326, %v1324
        %v1330 = vshll.u32 %v1297, 16
        %v1332 = vrot.slane %v1330, 1
        %v1333 = vsel %vm504, %v1328, %v1332
        %v1334 = vshrl.u32 %v1297, 16
        %v1336 = vor.u32 %v1334, %v1332
        %v1338 = vsel %vm262, %v1309, 0
        %v1341 = vsel %vm262, %v1317, 0
        %v1344 = vsel %vm262, %v1325, 0
        %v1347 = vsel %vm262, %v1333, 0
        %v1350 = vsel %vm262, %v1336, 0
        %v1353 = vsel %vm278, %v1272, 0
        %1355 = vmatprep.subr.bf16.mxu0 0
        %1356 = vmatpush1.bf16.msra.mxu0 %v1353
        %1357 = vmatprep.subr.bf16.mxu0 0
        %1358 = vmatpush1.bf16.msra.mxu0 0
        %1359 = vmatprep.subr.bf16.mxu0 0
        %1360 = vmatpush1.bf16.msra.mxu0 0
        %1361 = vmatprep.subr.bf16.mxu0 0
        %1362 = vmatpush1.bf16.msra.mxu0 0
        %1363 = vmatprep.subr.bf16.mxu0 0
        %1364 = vmatpush1.bf16.msra.mxu0 0
        %1365 = vmatprep.subr.bf16.mxu0 0
        %1366 = vmatpush1.bf16.msra.mxu0 0
        %1367 = vmatprep.subr.bf16.mxu0 0
        %1368 = vmatpush1.bf16.msra.mxu0 0
        %1369 = vmatprep.subr.bf16.mxu0 0
        %1370 = vmatpush1.bf16.msra.mxu0 0
        %1371 = vmatprep.subr.bf16.mxu0 0
        %1372 = vmatpush1.bf16.msra.mxu0 0
        %1373 = vmatprep.subr.bf16.mxu0 0
        %1374 = vmatpush1.bf16.msra.mxu0 0
        %1375 = vmatprep.subr.bf16.mxu0 0
        %1376 = vmatpush1.bf16.msra.mxu0 0
        %1377 = vmatprep.subr.bf16.mxu0 0
        %1378 = vmatpush1.bf16.msra.mxu0 0
        %1379 = vmatprep.subr.bf16.mxu0 0
        %1380 = vmatpush1.bf16.msra.mxu0 0
        %1381 = vmatprep.subr.bf16.mxu0 0
        %1382 = vmatpush1.bf16.msra.mxu0 0
        %1383 = vmatprep.subr.bf16.mxu0 0
        %1384 = vmatpush1.bf16.msra.mxu0 0
        %1385 = vmatprep.subr.bf16.mxu0 0
        %1386 = vmatpush1.bf16.msra.mxu0 0
        %1387 = vmatprep.mubr.bf16.mxu0 0
        %1388 = vmatmul.mubr.bf16.gmra.mrb[0].mxu0 %v1338
        %v1389 = vpop.f32.mrb[0].mxu0
        %v1390 = vadd.f32 0.0, %v1389
        %v1391 = vpop.f32.mrb[0].mxu0
        %v1392 = vpop.f32.mrb[0].mxu0
        %v1393 = vadd.f32 0.0, %v1392
        %v1394 = vpop.f32.mrb[0].mxu0
        %1395 = vmatprep.mubr.bf16.mxu0 0
        %1396 = vmatmul.mubr.bf16.gmra.mrb[0].mxu0 %v1341
        %v1397 = vpop.f32.mrb[0].mxu0
        %v1398 = vadd.f32 0.0, %v1397
        %v1399 = vpop.f32.mrb[0].mxu0
        %v1400 = vpop.f32.mrb[0].mxu0
        %v1401 = vadd.f32 0.0, %v1400
        %v1402 = vpop.f32.mrb[0].mxu0
        %1403 = vmatprep.mubr.bf16.mxu0 0
        %1404 = vmatmul.mubr.bf16.gmra.mrb[0].mxu0 %v1344
        %v1405 = vpop.f32.mrb[0].mxu0
        %v1406 = vadd.f32 0.0, %v1405
        %v1407 = vpop.f32.mrb[0].mxu0
        %v1408 = vpop.f32.mrb[0].mxu0
        %v1409 = vadd.f32 0.0, %v1408
        %v1410 = vpop.f32.mrb[0].mxu0
        %1411 = vmatprep.mubr.bf16.mxu0 0
        %1412 = vmatmul.mubr.bf16.gmra.mrb[0].mxu0 %v1347
        %v1413 = vpop.f32.mrb[0].mxu0
        %v1414 = vadd.f32 0.0, %v1413
        %v1415 = vpop.f32.mrb[0].mxu0
        %v1416 = vpop.f32.mrb[0].mxu0
        %v1417 = vadd.f32 0.0, %v1416
        %v1418 = vpop.f32.mrb[0].mxu0
        %1419 = vmatprep.mubr.bf16.mxu0 0
        %1420 = vmatmul.mubr.bf16.gmra.mrb[0].mxu0 %v1350
        %v1421 = vpop.f32.mrb[0].mxu0
        %v1422 = vadd.f32 0.0, %v1421
        %v1423 = vpop.f32.mrb[0].mxu0
        %v1424 = vpop.f32.mrb[0].mxu0
        %v1425 = vpop.f32.mrb[0].mxu0
        %1426 = vdwg.mxu0
        %v1427 = vadd.f32 %v1252, %v1390
        %v1428 = vadd.f32 %v1253, %v1393
        %v1429 = vadd.f32 %v1254, %v1398
        %v1430 = vadd.f32 %v1255, %v1401
        %v1431 = vadd.f32 %v1256, %v1406
        %v1432 = vadd.f32 %v1257, %v1409
        %v1433 = vadd.f32 %v1258, %v1414
        %v1434 = vadd.f32 %v1259, %v1417
        %v1435 = vadd.f32 %v1260, %v1422
        %v1436 = vld [vmem:[%s185 + $0x4] sm:$0xe]
        %s1437 = scalar_lea.vmem [#allocation5], 16
        %v1438 = vld [vmem:[%s1437] sm:$0x3]
        %v1440 = vunpack.c.l.b16 %v1436
        %v1441 = vpack.c.b16 %v1109, %v1440
        %vm1442 = vcmask 1046528
        %v1443 = vrot.slane %v1441, 1
        %v1444 = vrot.slane %v1119, 1
        %v1445 = vsel %vm1442, %v1443, %v1444
        %v1446 = vrot.slane %v1120, 1
        %v1447 = vsel %vm1442, %v1444, %v1446
        %v1448 = vrot.slane %v1121, 1
        %v1449 = vsel %vm1442, %v1446, %v1448
        %v1450 = vrot.slane %v1122, 1
        %v1451 = vsel %vm1442, %v1448, %v1450
        %v1453 = vsel %vm262, %v1445, 0
        %v1456 = vsel %vm262, %v1447, 0
        %v1459 = vsel %vm262, %v1449, 0
        %v1462 = vsel %vm262, %v1451, 0
        %v1465 = vsel %vm262, %v1450, 0
        %v1468 = vsel %vm278, %v1438, 0
        %1470 = vmatprep.subr.bf16.mxu0 0
        %1471 = vmatpush1.bf16.msra.mxu0 %v1468
        %1472 = vmatprep.subr.bf16.mxu0 0
        %1473 = vmatpush1.bf16.msra.mxu0 0
        %1474 = vmatprep.subr.bf16.mxu0 0
        %1475 = vmatpush1.bf16.msra.mxu0 0
        %1476 = vmatprep.subr.bf16.mxu0 0
        %1477 = vmatpush1.bf16.msra.mxu0 0
        %1478 = vmatprep.subr.bf16.mxu0 0
        %1479 = vmatpush1.bf16.msra.mxu0 0
        %1480 = vmatprep.subr.bf16.mxu0 0
        %1481 = vmatpush1.bf16.msra.mxu0 0
        %1482 = vmatprep.subr.bf16.mxu0 0
        %1483 = vmatpush1.bf16.msra.mxu0 0
        %1484 = vmatprep.subr.bf16.mxu0 0
        %1485 = vmatpush1.bf16.msra.mxu0 0
        %1486 = vmatprep.subr.bf16.mxu0 0
        %1487 = vmatpush1.bf16.msra.mxu0 0
        %1488 = vmatprep.subr.bf16.mxu0 0
        %1489 = vmatpush1.bf16.msra.mxu0 0
        %1490 = vmatprep.subr.bf16.mxu0 0
        %1491 = vmatpush1.bf16.msra.mxu0 0
        %1492 = vmatprep.subr.bf16.mxu0 0
        %1493 = vmatpush1.bf16.msra.mxu0 0
        %1494 = vmatprep.subr.bf16.mxu0 0
        %1495 = vmatpush1.bf16.msra.mxu0 0
        %1496 = vmatprep.subr.bf16.mxu0 0
        %1497 = vmatpush1.bf16.msra.mxu0 0
        %1498 = vmatprep.subr.bf16.mxu0 0
        %1499 = vmatpush1.bf16.msra.mxu0 0
        %1500 = vmatprep.subr.bf16.mxu0 0
        %1501 = vmatpush1.bf16.msra.mxu0 0
        %1502 = vmatprep.mubr.bf16.mxu0 0
        %1503 = vmatmul.mubr.bf16.gmra.mrb[0].mxu0 %v1453
        %v1504 = vpop.f32.mrb[0].mxu0
        %v1505 = vadd.f32 0.0, %v1504
        %v1506 = vpop.f32.mrb[0].mxu0
        %v1507 = vpop.f32.mrb[0].mxu0
        %v1508 = vadd.f32 0.0, %v1507
        %v1509 = vpop.f32.mrb[0].mxu0
        %1510 = vmatprep.mubr.bf16.mxu0 0
        %1511 = vmatmul.mubr.bf16.gmra.mrb[0].mxu0 %v1456
        %v1512 = vpop.f32.mrb[0].mxu0
        %v1513 = vadd.f32 0.0, %v1512
        %v1514 = vpop.f32.mrb[0].mxu0
        %v1515 = vpop.f32.mrb[0].mxu0
        %v1516 = vadd.f32 0.0, %v1515
        %v1517 = vpop.f32.mrb[0].mxu0
        %1518 = vmatprep.mubr.bf16.mxu0 0
        %1519 = vmatmul.mubr.bf16.gmra.mrb[0].mxu0 %v1459
        %v1520 = vpop.f32.mrb[0].mxu0
        %v1521 = vadd.f32 0.0, %v1520
        %v1522 = vpop.f32.mrb[0].mxu0
        %v1523 = vpop.f32.mrb[0].mxu0
        %v1524 = vadd.f32 0.0, %v1523
        %v1525 = vpop.f32.mrb[0].mxu0
        %1526 = vmatprep.mubr.bf16.mxu0 0
        %1527 = vmatmul.mubr.bf16.gmra.mrb[0].mxu0 %v1462
        %v1528 = vpop.f32.mrb[0].mxu0
        %v1529 = vadd.f32 0.0, %v1528
        %v1530 = vpop.f32.mrb[0].mxu0
        %v1531 = vpop.f32.mrb[0].mxu0
        %v1532 = vadd.f32 0.0, %v1531
        %v1533 = vpop.f32.mrb[0].mxu0
        %1534 = vmatprep.mubr.bf16.mxu0 0
        %1535 = vmatmul.mubr.bf16.gmra.mrb[0].mxu0 %v1465
        %v1536 = vpop.f32.mrb[0].mxu0
        %v1537 = vadd.f32 0.0, %v1536
        %v1538 = vpop.f32.mrb[0].mxu0
        %v1539 = vpop.f32.mrb[0].mxu0
        %v1540 = vpop.f32.mrb[0].mxu0
        %1541 = vdwg.mxu0
        %v1542 = vadd.f32 %v1427, %v1505
        %v1543 = vadd.f32 %v1428, %v1508
        %v1544 = vadd.f32 %v1429, %v1513
        %v1545 = vadd.f32 %v1430, %v1516
        %v1546 = vadd.f32 %v1431, %v1521
        %v1547 = vadd.f32 %v1432, %v1524
        %v1548 = vadd.f32 %v1433, %v1529
        %v1549 = vadd.f32 %v1434, %v1532
        %v1550 = vadd.f32 %v1435, %v1537
        %v1551 = vld [vmem:[#allocation7] sm:$0x1]
        %v1553 = vlaneseq
        %v1554 = vshrl.u32 %v1553, 7
        %v1555 = vsub.s32 0, %v1554
        %v1556 = vrot.slane %v1551, %v1555
        %v1558 = vadd.f32 %v1542, %v1556
        %v1559 = vadd.f32 %v1543, %v1556
        %v1560 = vadd.f32 %v1544, %v1556
        %v1561 = vadd.f32 %v1545, %v1556
        %v1562 = vadd.f32 %v1546, %v1556
        %v1563 = vadd.f32 %v1547, %v1556
        %v1564 = vadd.f32 %v1548, %v1556
        %v1565 = vadd.f32 %v1549, %v1556
        %v1566 = vadd.f32 %v1550, %v1556
        %v1567 = vmax.f32 %v1558, 0.0
        %v1568 = vmax.f32 %v1559, 0.0
        %v1569 = vmax.f32 %v1560, 0.0
        %v1570 = vmax.f32 %v1561, 0.0
        %v1571 = vmax.f32 %v1562, 0.0
        %v1572 = vmax.f32 %v1563, 0.0
        %v1573 = vmax.f32 %v1564, 0.0
        %v1574 = vmax.f32 %v1565, 0.0
        %v1575 = vmax.f32 %v1566, 0.0
        %v1576 = vpack.c.bf16 %v1568, %v1567
        %v1577 = vpack.c.bf16 %v1570, %v1569
        %v1578 = vpack.c.bf16 %v1572, %v1571
        %v1579 = vpack.c.bf16 %v1574, %v1573
        %v1580 = vpack.c.bf16 %v1575, %v1575
        %v1586 = vunpack.c.l.b16 %v1576
        %v1587 = vunpack.c.h.b16 %v1576
        %v1588 = vunpack.c.l.b16 %v1577
        %v1589 = vunpack.c.h.b16 %v1577
        %v1590 = vunpack.c.l.b16 %v1578
        %v1591 = vunpack.c.h.b16 %v1578
        %v1592 = vunpack.c.l.b16 %v1579
        %v1593 = vunpack.c.h.b16 %v1579
        %v1594 = vunpack.c.l.b16 %v1580
        %v1595 = vpack.c.b16 %v1586, %v1586
        %v1596 = vpack.c.b16 %v1587, %v1587
        %v1597 = vpack.c.b16 %v1588, %v1588
        %v1598 = vpack.c.b16 %v1589, %v1589
        %v1599 = vpack.c.b16 %v1590, %v1590
        %v1600 = vpack.c.b16 %v1591, %v1591
        %v1601 = vpack.c.b16 %v1592, %v1592
        %v1602 = vpack.c.b16 %v1593, %v1593
        %v1603 = vpack.c.b16 %v1594, %v1594
        %1613 = vst [vmem:[%s215] sm:$0xf] %v1595
        %1614 = vst [vmem:[%s215 + $0x4] sm:$0xf] %v1596
        %1615 = vst [vmem:[%s215 + $0x8] sm:$0xf] %v1597
        %1616 = vst [vmem:[%s215 + $0xc] sm:$0xf] %v1598
        %1617 = vst [vmem:[%s215 + $0x10] sm:$0xf] %v1599
        %1618 = vst [vmem:[%s215 + $0x14] sm:$0xf] %v1600
        %1619 = vst [vmem:[%s215 + $0x18] sm:$0xf] %v1601
        %1620 = vst [vmem:[%s215 + $0x1c] sm:$0xf] %v1602
        %1621 = vst [vmem:[%s215 + $0x20] sm:$0xf] %v1603
        %s1622 = sand.u32 %s97, 1
        %s1623 = scalar_lea.sflag [#allocation4], %s1622
        %s1624 = sand.u32 %s97, 1
        %s1625 = smul.addr %s1624, 36
        %s1626 = scalar_lea.vmem [#allocation8], %s1625
        // Predicated region
        $region45: #{basic_block_forward.2} parent=31 // pred_check
          %p1627 = pneg %p107
        $region46: #{basic_block_forward.2} parent=31 // pred_check_branch
          %1629 = sbr.rel (%p1627) target = $region48
        $region47: #{basic_block_forward.2} parent=31 // pred_region
          %s1631 = ssub.s32 576, 576
          %1632 = vsyncadd %s1623, %s1631
          %s1633 = smul.addr %s21, 9
          %s1634 = smul.addr %s1633, 64
          %s1635 = scalar_lea.hbm %s3, %s1634
          %s1636 = sshll.u32 %s1626, 4
          %s1637 = int_to_ptr.vmem [resolvable:$true] %s1636
          %1642 = dma.vmem_to_hbm [thread:$0]  %s1637, 576, %s1635, %s1623, 64, 64, 4
        $region48: #{basic_block_forward.2} parent=31 // pred_fallthru
          _
      $region32: #{basic_block_forward.2} parent=5 // pred_fallthru
        _
      %p1643 = scmp.le.s32.totalorder 2, %s16
      // Predicated region
      $region49: #{basic_block_forward.2} parent=5 // pred_check
        %p1644 = pneg %p1643
      $region50: #{basic_block_forward.2} parent=5 // pred_check_branch
        %1646 = sbr.rel (%p1644) target = $region52
      $region51: #{basic_block_forward.2} parent=5 // pred_region
        %s1647 = ssub.s32 %s16, 2
        // Predicated region
        $region53: #{basic_block_forward.2} parent=51 // pred_check
          %p1648 = pneg %p113
        $region54: #{basic_block_forward.2} parent=51 // pred_check_branch
          %1650 = sbr.rel (%p1648) target = $region56
        $region55: #{basic_block_forward.2} parent=51 // pred_region
          %s1651 = sand.u32 %s98, 1
          %s1652 = scalar_lea.sflag [#allocation4], %s1651
          %s1653 = sand.u32 %s98, 1
          %s1654 = smul.addr %s1653, 36
          %s1655 = scalar_lea.vmem [#allocation8], %s1654
          %1656 = dma.done %s1652, 576
        $region56: #{basic_block_forward.2} parent=51 // pred_fallthru
          _
      $region52: #{basic_block_forward.2} parent=5 // pred_fallthru
        _
    $region6: #{basic_block_forward.2} parent=1 // loop_footer
      %s20 = sadd.s32 1, %s16
    $region7: #{basic_block_forward.2} parent=1 // loop_footer_branch
      %15 = sbr.rel target = $region3
    $region8: #{basic_block_forward.2} parent=1 // loop_exit
      _
    %1657 = vsyncpa [#allocation3], 1
    %s1658 = scalar_lea.sflag [#allocation3], 1
    %1659 = vsyncpa %s1658, 1
    %1660 = vsyncpa [#allocation6], 1
    %1661 = vsyncpa [#allocation4], 1
    %s1662 = scalar_lea.sflag [#allocation4], 1
    %1663 = vsyncpa %s1662, 1

// kernel: basic_block_forward.3
$region0: #{basic_block_forward.3}
  #allocation0 [shape = 'u32[]', space=smem, size = 0x4, offset = 0x4, fixed_abs, tag = 'smem constant byte address 0x4 - core index']
  #allocation1 [shape = 'u32[144,128]{1,0:T(1,128)}', space=vmem, size = 0x12000, scoped, tag = 'internal scratch']
  %s0 = inlined_call_operand.hbm [shape: bf16[2,1,110,8], index: 0, kind: input, shape index: {}]
  %s1 = inlined_call_operand.hbm [shape: bf16[9,8,128], index: 1, kind: input, shape index: {}]
  %s2 = inlined_call_operand.hbm [shape: f32[1,128], index: 2, kind: input, shape index: {}]
  %s3 = inlined_call_operand.hbm [shape: bf16[2,80,4], index: 3, kind: input, shape index: {}]
  %s4 = inlined_call_operand.hbm [shape: bf16[4,128], index: 4, kind: input, shape index: {}]
  %s5 = inlined_call_operand.hbm [shape: f32[1,128], index: 5, kind: input, shape index: {}]
  %s6 = inlined_call_operand.hbm [shape: f32[2,80,128], index: 6, kind: output, shape index: {}]
  %s7 = sld [smem:[#allocation0]]
  $region81: #{basic_block_forward.3} parent=0
    _
  %s9 = ssub.s32 1, %s7
  %s10 = scalar_select 0, %s9, %s7
  $region1: #{basic_block_forward.3} parent=0
    #allocation2 [shape = 'u8[57344]{0}', space=vmem, size = 0xe000, scoped, tag = 'input window, operand 0']
    #allocation3 [shape = 's32[2]{0}', space=sflag, size = 0x8, scoped, tag = 'scoped memory for basic_block_forward.3']
    #allocation4 [shape = 's32[2]{0}', space=sflag, size = 0x8, scoped, tag = 'scoped memory for basic_block_forward.3']
    #allocation5 [shape = 'u8[18432]{0}', space=vmem, size = 0x4800, scoped, tag = 'input window, operand 1, single buffered']
    #allocation6 [shape = 's32[1]{0}', space=sflag, size = 0x4, scoped, tag = 'scoped memory for basic_block_forward.3']
    #allocation7 [shape = 'u8[512]{0}', space=vmem, size = 0x400, scoped, tag = 'input window, operand 2, single buffered']
    #allocation8 [shape = 'u8[40960]{0}', space=vmem, size = 0xa000, scoped, tag = 'input window, operand 3']
    #allocation9 [shape = 's32[2]{0}', space=sflag, size = 0x8, scoped, tag = 'scoped memory for basic_block_forward.3']
    #allocation10 [shape = 'u8[1024]{0}', space=vmem, size = 0x400, scoped, tag = 'input window, operand 4, single buffered']
    #allocation11 [shape = 'u8[512]{0}', space=vmem, size = 0x400, scoped, tag = 'input window, operand 5, single buffered']
    #allocation12 [shape = 's32[1]{0}', space=sflag, size = 0x4, scoped, tag = 'scoped memory for basic_block_forward.3']
    #allocation13 [shape = 'u8[81920]{0}', space=vmem, size = 0x14000, scoped, tag = 'output window, operand 0']
    %11 = vsyncpa [#allocation3], 0
    %s12 = scalar_lea.sflag [#allocation3], 1
    %13 = vsyncpa %s12, 0
    %14 = vsyncpa [#allocation6], 0
    %15 = vsyncpa [#allocation9], 0
    %s16 = scalar_lea.sflag [#allocation9], 1
    %17 = vsyncpa %s16, 0
    %18 = vsyncpa [#allocation12], 0
    %19 = vsyncpa [#allocation4], 0
    %s20 = scalar_lea.sflag [#allocation4], 1
    %21 = vsyncpa %s20, 0
    loop: start=0, step=1, limit=4
    $region2: #{basic_block_forward.3} parent=1 // loop_pre_header
      _
    $region3: #{basic_block_forward.3} parent=1 // loop_header
      %s23 = sphi 0, %s27
      %p24 = scmp.ge.s32.totalorder %s23, 4
      %s33 = sphi 0, %s35
      %s36 = sphi 0, %s33
      %s37 = sphi 0, %s36
      %s53 = sphi 0, %s37
      %s57 = sphi 0, %s57
      %s59 = sphi 0, %s57
      %s60 = sphi 0, %s59
      %s74 = sphi 0, %s60
      %s78 = sphi 0, %s78
      %s80 = sphi 0, %s78
      %s81 = sphi 0, %s80
      %s95 = sphi 0, %s81
      %s101 = sphi 0, %s103
      %s104 = sphi 0, %s101
      %s105 = sphi 0, %s104
      %s121 = sphi 0, %s105
      %s125 = sphi 0, %s125
      %s127 = sphi 0, %s125
      %s128 = sphi 0, %s127
      %s142 = sphi 0, %s128
      %s146 = sphi 0, %s146
      %s148 = sphi 0, %s146
      %s149 = sphi 0, %s148
      %s163 = sphi 0, %s149
      %s169 = sphi 0, %s171
      %s172 = sphi 0, %s169
      %s173 = sphi 0, %s172
      %s189 = sphi 0, %s173
    $region4: #{basic_block_forward.3} parent=1 // loop_header_branch
      %26 = sbr.rel (%p24) target = $region8
    $region5: #{basic_block_forward.3} parent=1 // loop_body
      %s28 = ssub.s32 %s23, 1
      %s29 = ssub.s32 %s23, 2
      %s30 = sadd.s32 %s23, 1
      %s31 = ssub.s32 %s23, %s30
      %p32 = scmp.eq.s32.totalorder %s31, 0
      %s34 = sadd.s32 %s33, 1
      %s35 = scalar_select %p32, %s33, %s34
      %p38 = pneg %p32
      %p39 = scmp.eq.s32.totalorder %s23, 1
      %p40 = por %p38, %p39
      %p41 = scmp.ne.s32.totalorder %s33, %s36
      %p42 = scmp.eq.s32.totalorder %s23, 0
      %p43 = por %p41, %p42
      %p44 = scmp.ne.s32.totalorder %s33, %s36
      %p45 = scmp.eq.s32.totalorder %s28, 1
      %p46 = por %p44, %p45
      %p47 = scmp.ne.s32.totalorder %s36, %s37
      %p48 = scmp.eq.s32.totalorder %s28, 0
      %p49 = por %p47, %p48
      %p50 = scmp.ne.s32.totalorder %s36, %s37
      %p51 = scmp.eq.s32.totalorder %s29, 1
      %p52 = por %p50, %p51
      %p54 = scmp.ne.s32.totalorder %s37, %s53
      %p55 = scmp.eq.s32.totalorder %s29, 0
      %p56 = por %p54, %p55
      %s58 = sadd.s32 %s57, 1
      %p61 = scmp.eq.s32.totalorder %s23, 1
      %p62 = scmp.ne.s32.totalorder %s57, %s59
      %p63 = scmp.eq.s32.totalorder %s23, 0
      %p64 = por %p62, %p63
      %p65 = scmp.ne.s32.totalorder %s57, %s59
      %p66 = scmp.eq.s32.totalorder %s28, 1
      %p67 = por %p65, %p66
      %p68 = scmp.ne.s32.totalorder %s59, %s60
      %p69 = scmp.eq.s32.totalorder %s28, 0
      %p70 = por %p68, %p69
      %p71 = scmp.ne.s32.totalorder %s59, %s60
      %p72 = scmp.eq.s32.totalorder %s29, 1
      %p73 = por %p71, %p72
      %p75 = scmp.ne.s32.totalorder %s60, %s74
      %p76 = scmp.eq.s32.totalorder %s29, 0
      %p77 = por %p75, %p76
      %s79 = sadd.s32 %s78, 1
      %p82 = scmp.eq.s32.totalorder %s23, 1
      %p83 = scmp.ne.s32.totalorder %s78, %s80
      %p84 = scmp.eq.s32.totalorder %s23, 0
      %p85 = por %p83, %p84
      %p86 = scmp.ne.s32.totalorder %s78, %s80
      %p87 = scmp.eq.s32.totalorder %s28, 1
      %p88 = por %p86, %p87
      %p89 = scmp.ne.s32.totalorder %s80, %s81
      %p90 = scmp.eq.s32.totalorder %s28, 0
      %p91 = por %p89, %p90
      %p92 = scmp.ne.s32.totalorder %s80, %s81
      %p93 = scmp.eq.s32.totalorder %s29, 1
      %p94 = por %p92, %p93
      %p96 = scmp.ne.s32.totalorder %s81, %s95
      %p97 = scmp.eq.s32.totalorder %s29, 0
      %p98 = por %p96, %p97
      %s99 = ssub.s32 %s23, %s30
      %p100 = scmp.eq.s32.totalorder %s99, 0
      %s102 = sadd.s32 %s101, 1
      %s103 = scalar_select %p100, %s101, %s102
      %p106 = pneg %p100
      %p107 = scmp.eq.s32.totalorder %s23, 1
      %p108 = por %p106, %p107
      %p109 = scmp.ne.s32.totalorder %s101, %s104
      %p110 = scmp.eq.s32.totalorder %s23, 0
      %p111 = por %p109, %p110
      %p112 = scmp.ne.s32.totalorder %s101, %s104
      %p113 = scmp.eq.s32.totalorder %s28, 1
      %p114 = por %p112, %p113
      %p115 = scmp.ne.s32.totalorder %s104, %s105
      %p116 = scmp.eq.s32.totalorder %s28, 0
      %p117 = por %p115, %p116
      %p118 = scmp.ne.s32.totalorder %s104, %s105
      %p119 = scmp.eq.s32.totalorder %s29, 1
      %p120 = por %p118, %p119
      %p122 = scmp.ne.s32.totalorder %s105, %s121
      %p123 = scmp.eq.s32.totalorder %s29, 0
      %p124 = por %p122, %p123
      %s126 = sadd.s32 %s125, 1
      %p129 = scmp.eq.s32.totalorder %s23, 1
      %p130 = scmp.ne.s32.totalorder %s125, %s127
      %p131 = scmp.eq.s32.totalorder %s23, 0
      %p132 = por %p130, %p131
      %p133 = scmp.ne.s32.totalorder %s125, %s127
      %p134 = scmp.eq.s32.totalorder %s28, 1
      %p135 = por %p133, %p134
      %p136 = scmp.ne.s32.totalorder %s127, %s128
      %p137 = scmp.eq.s32.totalorder %s28, 0
      %p138 = por %p136, %p137
      %p139 = scmp.ne.s32.totalorder %s127, %s128
      %p140 = scmp.eq.s32.totalorder %s29, 1
      %p141 = por %p139, %p140
      %p143 = scmp.ne.s32.totalorder %s128, %s142
      %p144 = scmp.eq.s32.totalorder %s29, 0
      %p145 = por %p143, %p144
      %s147 = sadd.s32 %s146, 1
      %p150 = scmp.eq.s32.totalorder %s23, 1
      %p151 = scmp.ne.s32.totalorder %s146, %s148
      %p152 = scmp.eq.s32.totalorder %s23, 0
      %p153 = por %p151, %p152
      %p154 = scmp.ne.s32.totalorder %s146, %s148
      %p155 = scmp.eq.s32.totalorder %s28, 1
      %p156 = por %p154, %p155
      %p157 = scmp.ne.s32.totalorder %s148, %s149
      %p158 = scmp.eq.s32.totalorder %s28, 0
      %p159 = por %p157, %p158
      %p160 = scmp.ne.s32.totalorder %s148, %s149
      %p161 = scmp.eq.s32.totalorder %s29, 1
      %p162 = por %p160, %p161
      %p164 = scmp.ne.s32.totalorder %s149, %s163
      %p165 = scmp.eq.s32.totalorder %s29, 0
      %p166 = por %p164, %p165
      %s167 = ssub.s32 %s23, %s30
      %p168 = scmp.eq.s32.totalorder %s167, 0
      %s170 = sadd.s32 %s169, 1
      %s171 = scalar_select %p168, %s169, %s170
      %p174 = pneg %p168
      %p175 = scmp.eq.s32.totalorder %s23, 1
      %p176 = por %p174, %p175
      %p177 = scmp.ne.s32.totalorder %s169, %s172
      %p178 = scmp.eq.s32.totalorder %s23, 0
      %p179 = por %p177, %p178
      %p180 = scmp.ne.s32.totalorder %s169, %s172
      %p181 = scmp.eq.s32.totalorder %s28, 1
      %p182 = por %p180, %p181
      %p183 = scmp.ne.s32.totalorder %s172, %s173
      %p184 = scmp.eq.s32.totalorder %s28, 0
      %p185 = por %p183, %p184
      %p186 = scmp.ne.s32.totalorder %s172, %s173
      %p187 = scmp.eq.s32.totalorder %s29, 1
      %p188 = por %p186, %p187
      %p190 = scmp.ne.s32.totalorder %s173, %s189
      %p191 = scmp.eq.s32.totalorder %s29, 0
      %p192 = por %p190, %p191
      %p193 = scmp.le.s32.totalorder 1, %s23
      %p194 = scmp.lt.s32.totalorder %s23, 3
      %p195 = pnand %p193, %p194
      %p196 = pneg %p195
      // Predicated region
      $region9: #{basic_block_forward.3} parent=5 // pred_check
        _
      $region10: #{basic_block_forward.3} parent=5 // pred_check_branch
        %198 = sbr.rel (%p195) target = $region12
      $region11: #{basic_block_forward.3} parent=5 // pred_region
        %s199 = ssub.s32 %s23, 1
        // Predicated region
        $region13: #{basic_block_forward.3} parent=11 // pred_check
          %p200 = pneg %p70
        $region14: #{basic_block_forward.3} parent=11 // pred_check_branch
          %202 = sbr.rel (%p200) target = $region16
        $region15: #{basic_block_forward.3} parent=11 // pred_region
          %s204 = ssub.s32 576, 576
          %205 = vsyncadd [#allocation6], %s204
          %s206 = sshll.u32 [#allocation5], 4
          %s207 = int_to_ptr.vmem [resolvable:$true] %s206
          %212 = dma.hbm_to_vmem [thread:$0]  %s1, 576, %s207, [#allocation6], 64, 64, 4
        $region16: #{basic_block_forward.3} parent=11 // pred_fallthru
          _
        // Predicated region
        $region17: #{basic_block_forward.3} parent=11 // pred_check
          %p213 = pneg %p91
        $region18: #{basic_block_forward.3} parent=11 // pred_check_branch
          %215 = sbr.rel (%p213) target = $region20
        $region19: #{basic_block_forward.3} parent=11 // pred_region
          %s217 = ssub.s32 16, 16
          %218 = vsyncadd [#allocation6], %s217
          %s220 = sshll.u32 [#allocation7], 4
          %s221 = int_to_ptr.vmem [resolvable:$true] %s220
          %223 = dma.hbm_to_vmem [thread:$0]  %s2, 16, %s221, [#allocation6]
        $region20: #{basic_block_forward.3} parent=11 // pred_fallthru
          _
        // Predicated region
        $region21: #{basic_block_forward.3} parent=11 // pred_check
          %p224 = pneg %p138
        $region22: #{basic_block_forward.3} parent=11 // pred_check_branch
          %226 = sbr.rel (%p224) target = $region24
        $region23: #{basic_block_forward.3} parent=11 // pred_region
          %s228 = ssub.s32 32, 32
          %229 = vsyncadd [#allocation9], %s228
          %s231 = sshll.u32 [#allocation10], 4
          %s232 = int_to_ptr.vmem [resolvable:$true] %s231
          %234 = dma.hbm_to_vmem [thread:$0]  %s4, 32, %s232, [#allocation9]
        $region24: #{basic_block_forward.3} parent=11 // pred_fallthru
          _
        // Predicated region
        $region25: #{basic_block_forward.3} parent=11 // pred_check
          %p235 = pneg %p159
        $region26: #{basic_block_forward.3} parent=11 // pred_check_branch
          %237 = sbr.rel (%p235) target = $region28
        $region27: #{basic_block_forward.3} parent=11 // pred_region
          %s239 = ssub.s32 16, 16
          %240 = vsyncadd [#allocation12], %s239
          %s242 = sshll.u32 [#allocation11], 4
          %s243 = int_to_ptr.vmem [resolvable:$true] %s242
          %245 = dma.hbm_to_vmem [thread:$0]  %s5, 16, %s243, [#allocation12]
        $region28: #{basic_block_forward.3} parent=11 // pred_fallthru
          _
      $region12: #{basic_block_forward.3} parent=5 // pred_fallthru
        _
      %p246 = scmp.lt.s32.totalorder %s23, 2
      // Predicated region
      $region29: #{basic_block_forward.3} parent=5 // pred_check
        %p247 = pneg %p246
      $region30: #{basic_block_forward.3} parent=5 // pred_check_branch
        %249 = sbr.rel (%p247) target = $region32
      $region31: #{basic_block_forward.3} parent=5 // pred_region
        // Predicated region
        $region33: #{basic_block_forward.3} parent=31 // pred_check
          %p250 = pneg %p43
        $region34: #{basic_block_forward.3} parent=31 // pred_check_branch
          %252 = sbr.rel (%p250) target = $region36
        $region35: #{basic_block_forward.3} parent=31 // pred_region
          %s253 = sand.u32 %s33, 1
          %s254 = scalar_lea.sflag [#allocation3], %s253
          %s255 = sand.u32 %s33, 1
          %s256 = smul.addr %s255, 56
          %s257 = scalar_lea.vmem [#allocation2], %s256
          %s259 = ssub.s32 896, 896
          %260 = vsyncadd %s254, %s259
          %s261 = smul.addr %s23, 14
          %s262 = smul.addr %s261, 64
          %s263 = scalar_lea.hbm %s0, %s262
          %s264 = sshll.u32 %s257, 4
          %s265 = int_to_ptr.vmem [resolvable:$true] %s264
          %270 = dma.hbm_to_vmem [thread:$0]  %s263, 896, %s265, %s254, 64, 64, 4
        $region36: #{basic_block_forward.3} parent=31 // pred_fallthru
          _
        // Predicated region
        $region37: #{basic_block_forward.3} parent=31 // pred_check
          %p271 = pneg %p111
        $region38: #{basic_block_forward.3} parent=31 // pred_check_branch
          %273 = sbr.rel (%p271) target = $region40
        $region39: #{basic_block_forward.3} parent=31 // pred_region
          %s274 = sand.u32 %s23, 1
          %s275 = scalar_lea.sflag [#allocation9], %s274
          %s276 = sand.u32 %s101, 1
          %s277 = smul.addr %s276, 40
          %s278 = scalar_lea.vmem [#allocation8], %s277
          %s280 = ssub.s32 640, 640
          %281 = vsyncadd %s275, %s280
          %s282 = smul.addr %s23, 10
          %s283 = smul.addr %s282, 64
          %s284 = scalar_lea.hbm %s3, %s283
          %s285 = sshll.u32 %s278, 4
          %s286 = int_to_ptr.vmem [resolvable:$true] %s285
          %291 = dma.hbm_to_vmem [thread:$0]  %s284, 640, %s286, %s275, 64, 64, 4
        $region40: #{basic_block_forward.3} parent=31 // pred_fallthru
          _
      $region32: #{basic_block_forward.3} parent=5 // pred_fallthru
        _
      %p292 = scmp.le.s32.totalorder 1, %s23
      %p293 = scmp.lt.s32.totalorder %s23, 3
      %p294 = pnand %p292, %p293
      %p295 = pneg %p294
      // Predicated region
      $region41: #{basic_block_forward.3} parent=5 // pred_check
        _
      $region42: #{basic_block_forward.3} parent=5 // pred_check_branch
        %297 = sbr.rel (%p294) target = $region44
      $region43: #{basic_block_forward.3} parent=5 // pred_region
        %s298 = ssub.s32 %s23, 1
        %s299 = sand.u32 %s36, 1
        %s300 = scalar_lea.sflag [#allocation3], %s299
        %s301 = sand.u32 %s36, 1
        %s302 = smul.addr %s301, 56
        %s303 = scalar_lea.vmem [#allocation2], %s302
        // Predicated region
        $region45: #{basic_block_forward.3} parent=43 // pred_check
          %p304 = pneg %p49
        $region46: #{basic_block_forward.3} parent=43 // pred_check_branch
          %306 = sbr.rel (%p304) target = $region48
        $region47: #{basic_block_forward.3} parent=43 // pred_region
          %307 = dma.done %s300, 896
        $region48: #{basic_block_forward.3} parent=43 // pred_fallthru
          _
        // Predicated region
        $region49: #{basic_block_forward.3} parent=43 // pred_check
          %p308 = pneg %p70
        $region50: #{basic_block_forward.3} parent=43 // pred_check_branch
          %310 = sbr.rel (%p308) target = $region52
        $region51: #{basic_block_forward.3} parent=43 // pred_region
          %311 = dma.done [#allocation6], 576
        $region52: #{basic_block_forward.3} parent=43 // pred_fallthru
          _
        // Predicated region
        $region53: #{basic_block_forward.3} parent=43 // pred_check
          %p312 = pneg %p91
        $region54: #{basic_block_forward.3} parent=43 // pred_check_branch
          %314 = sbr.rel (%p312) target = $region56
        $region55: #{basic_block_forward.3} parent=43 // pred_region
          %315 = dma.done [#allocation6], 16
        $region56: #{basic_block_forward.3} parent=43 // pred_fallthru
          _
        %s316 = sand.u32 %s28, 1
        %s317 = scalar_lea.sflag [#allocation9], %s316
        %s318 = sand.u32 %s104, 1
        %s319 = smul.addr %s318, 40
        %s320 = scalar_lea.vmem [#allocation8], %s319
        // Predicated region
        $region57: #{basic_block_forward.3} parent=43 // pred_check
          %p321 = pneg %p117
        $region58: #{basic_block_forward.3} parent=43 // pred_check_branch
          %323 = sbr.rel (%p321) target = $region60
        $region59: #{basic_block_forward.3} parent=43 // pred_region
          %324 = dma.done %s317, 640
        $region60: #{basic_block_forward.3} parent=43 // pred_fallthru
          _
        // Predicated region
        $region61: #{basic_block_forward.3} parent=43 // pred_check
          %p325 = pneg %p138
        $region62: #{basic_block_forward.3} parent=43 // pred_check_branch
          %327 = sbr.rel (%p325) target = $region64
        $region63: #{basic_block_forward.3} parent=43 // pred_region
          %328 = dma.done [#allocation9], 32
        $region64: #{basic_block_forward.3} parent=43 // pred_fallthru
          _
        // Predicated region
        $region65: #{basic_block_forward.3} parent=43 // pred_check
          %p329 = pneg %p159
        $region66: #{basic_block_forward.3} parent=43 // pred_check_branch
          %331 = sbr.rel (%p329) target = $region68
        $region67: #{basic_block_forward.3} parent=43 // pred_region
          %332 = dma.done [#allocation12], 16
        $region68: #{basic_block_forward.3} parent=43 // pred_fallthru
          _
        %s333 = sand.u32 %s36, 1
        %s334 = scalar_lea.sflag [#allocation3], %s333
        %s335 = sand.u32 %s36, 1
        %s336 = smul.addr %s335, 56
        %s337 = scalar_lea.vmem [#allocation2], %s336
        %p338 = pneg %p49
        %p339 = pneg %p46
        %p340 = pneg %p70
        %p341 = pneg %p67
        %p342 = pneg %p91
        %p343 = pneg %p88
        %s344 = sand.u32 %s28, 1
        %s345 = scalar_lea.sflag [#allocation9], %s344
        %s346 = sand.u32 %s104, 1
        %s347 = smul.addr %s346, 40
        %s348 = scalar_lea.vmem [#allocation8], %s347
        %p349 = pneg %p117
        %p350 = pneg %p114
        %p351 = pneg %p138
        %p352 = pneg %p135
        %p353 = pneg %p159
        %p354 = pneg %p156
        %p355 = pneg %p185
        %p356 = pneg %p182
        %s357 = sand.u32 %s172, 1
        %s358 = scalar_lea.sflag [#allocation4], %s357
        %s359 = sand.u32 %s172, 1
        %s360 = smul.addr %s359, 80
        %s361 = scalar_lea.vmem [#allocation13], %s360
        %v363 = vld [vmem:[%s303] sm:$0xf]
        %v364 = vld [vmem:[%s303 + $0x4] sm:$0xf]
        %v365 = vld [vmem:[%s303 + $0x8] sm:$0xf]
        %v366 = vld [vmem:[%s303 + $0xc] sm:$0xf]
        %v367 = vld [vmem:[%s303 + $0x10] sm:$0xf]
        %v368 = vld [vmem:[%s303 + $0x14] sm:$0xf]
        %v369 = vld [vmem:[%s303 + $0x18] sm:$0xf]
        %v370 = vld [vmem:[%s303 + $0x1c] sm:$0xf]
        %v371 = vld [vmem:[%s303 + $0x20] sm:$0xf]
        %v372 = vld [vmem:[%s303 + $0x24] sm:$0xf]
        %v373 = vld [vmem:[#allocation5] sm:$0xf]
        %v374 = vld [vmem:[%s303 + $0x28] sm:$0x1]
        %s375 = scalar_lea.vmem [#allocation5], 4
        %v376 = vld [vmem:[%s375] sm:$0xf]
        %v388 = vunpack.c.l.b16 %v363
        %v389 = vunpack.c.l.b16 %v364
        %v390 = vunpack.c.l.b16 %v365
        %v391 = vunpack.c.l.b16 %v366
        %v392 = vunpack.c.l.b16 %v367
        %v393 = vunpack.c.l.b16 %v368
        %v394 = vunpack.c.l.b16 %v369
        %v395 = vunpack.c.l.b16 %v370
        %v396 = vunpack.c.l.b16 %v371
        %v397 = vunpack.c.l.b16 %v372
        %v398 = vunpack.c.l.b16 %v374
        %v399 = vpack.c.b16 %v389, %v388
        %v400 = vpack.c.b16 %v391, %v390
        %v401 = vpack.c.b16 %v393, %v392
        %v402 = vpack.c.b16 %v395, %v394
        %v403 = vpack.c.b16 %v397, %v396
        %v404 = vpack.c.b16 %v398, %v398
        %vm405 = vsmask.f32 7424
        %v407 = vshrl.u32 %v399, 16
        %v409 = vshll.u32 %v399, 16
        %v411 = vrot.slane %v409, 1
        %v412 = vor.u32 %v407, %v411
        %v414 = vshll.u32 %v400, 16
        %v416 = vrot.slane %v414, 1
        %v417 = vsel %vm405, %v412, %v416
        %v418 = vshrl.u32 %v400, 16
        %v420 = vor.u32 %v418, %v416
        %v422 = vshll.u32 %v401, 16
        %v424 = vrot.slane %v422, 1
        %v425 = vsel %vm405, %v420, %v424
        %v426 = vshrl.u32 %v401, 16
        %v428 = vor.u32 %v426, %v424
        %v430 = vshll.u32 %v402, 16
        %v432 = vrot.slane %v430, 1
        %v433 = vsel %vm405, %v428, %v432
        %v434 = vshrl.u32 %v402, 16
        %v436 = vor.u32 %v434, %v432
        %v438 = vshll.u32 %v403, 16
        %v440 = vrot.slane %v438, 1
        %v441 = vsel %vm405, %v436, %v440
        %v442 = vshrl.u32 %v403, 16
        %v444 = vor.u32 %v442, %v440
        %v446 = vshll.u32 %v404, 16
        %v448 = vrot.slane %v446, 1
        %v449 = vsel %vm405, %v444, %v448
        %vm450 = vcmask 64512
        %v452 = vsel %vm450, %v417, 0
        %v455 = vsel %vm450, %v425, 0
        %v458 = vsel %vm450, %v433, 0
        %v461 = vsel %vm450, %v441, 0
        %v464 = vsel %vm450, %v449, 0
        %vm466 = vcmask 1043456
        %v468 = vsel %vm466, %v376, 0
        %470 = vmatprep.subr.bf16.mxu0 0
        %471 = vmatpush1.bf16.msra.mxu0 %v468
        %472 = vmatprep.subr.bf16.mxu0 0
        %473 = vmatpush1.bf16.msra.mxu0 0
        %474 = vmatprep.subr.bf16.mxu0 0
        %475 = vmatpush1.bf16.msra.mxu0 0
        %476 = vmatprep.subr.bf16.mxu0 0
        %477 = vmatpush1.bf16.msra.mxu0 0
        %478 = vmatprep.subr.bf16.mxu0 0
        %479 = vmatpush1.bf16.msra.mxu0 0
        %480 = vmatprep.subr.bf16.mxu0 0
        %481 = vmatpush1.bf16.msra.mxu0 0
        %482 = vmatprep.subr.bf16.mxu0 0
        %483 = vmatpush1.bf16.msra.mxu0 0
        %484 = vmatprep.subr.bf16.mxu0 0
        %485 = vmatpush1.bf16.msra.mxu0 0
        %486 = vmatprep.subr.bf16.mxu0 0
        %487 = vmatpush1.bf16.msra.mxu0 0
        %488 = vmatprep.subr.bf16.mxu0 0
        %489 = vmatpush1.bf16.msra.mxu0 0
        %490 = vmatprep.subr.bf16.mxu0 0
        %491 = vmatpush1.bf16.msra.mxu0 0
        %492 = vmatprep.subr.bf16.mxu0 0
        %493 = vmatpush1.bf16.msra.mxu0 0
        %494 = vmatprep.subr.bf16.mxu0 0
        %495 = vmatpush1.bf16.msra.mxu0 0
        %496 = vmatprep.subr.bf16.mxu0 0
        %497 = vmatpush1.bf16.msra.mxu0 0
        %498 = vmatprep.subr.bf16.mxu0 0
        %499 = vmatpush1.bf16.msra.mxu0 0
        %500 = vmatprep.subr.bf16.mxu0 0
        %501 = vmatpush1.bf16.msra.mxu0 0
        %502 = vmatprep.mubr.bf16.mxu0 0
        %503 = vmatmul.mubr.bf16.gmra.mrb[0].mxu0 %v452
        %v504 = vpop.f32.mrb[0].mxu0
        %v505 = vadd.f32 0.0, %v504
        %v506 = vpop.f32.mrb[0].mxu0
        %v507 = vpop.f32.mrb[0].mxu0
        %v508 = vadd.f32 0.0, %v507
        %v509 = vpop.f32.mrb[0].mxu0
        %510 = vmatprep.mubr.bf16.mxu0 0
        %511 = vmatmul.mubr.bf16.gmra.mrb[0].mxu0 %v455
        %v512 = vpop.f32.mrb[0].mxu0
        %v513 = vadd.f32 0.0, %v512
        %v514 = vpop.f32.mrb[0].mxu0
        %v515 = vpop.f32.mrb[0].mxu0
        %v516 = vadd.f32 0.0, %v515
        %v517 = vpop.f32.mrb[0].mxu0
        %518 = vmatprep.mubr.bf16.mxu0 0
        %519 = vmatmul.mubr.bf16.gmra.mrb[0].mxu0 %v458
        %v520 = vpop.f32.mrb[0].mxu0
        %v521 = vadd.f32 0.0, %v520
        %v522 = vpop.f32.mrb[0].mxu0
        %v523 = vpop.f32.mrb[0].mxu0
        %v524 = vadd.f32 0.0, %v523
        %v525 = vpop.f32.mrb[0].mxu0
        %526 = vmatprep.mubr.bf16.mxu0 0
        %527 = vmatmul.mubr.bf16.gmra.mrb[0].mxu0 %v461
        %v528 = vpop.f32.mrb[0].mxu0
        %v529 = vadd.f32 0.0, %v528
        %v530 = vpop.f32.mrb[0].mxu0
        %v531 = vpop.f32.mrb[0].mxu0
        %v532 = vadd.f32 0.0, %v531
        %v533 = vpop.f32.mrb[0].mxu0
        %534 = vmatprep.mubr.bf16.mxu0 0
        %535 = vmatmul.mubr.bf16.gmra.mrb[0].mxu0 %v464
        %v536 = vpop.f32.mrb[0].mxu0
        %v537 = vadd.f32 0.0, %v536
        %v538 = vpop.f32.mrb[0].mxu0
        %v539 = vpop.f32.mrb[0].mxu0
        %v540 = vadd.f32 0.0, %v539
        %v541 = vpop.f32.mrb[0].mxu0
        %542 = vdwg.mxu0
        %v543 = vsel %vm450, %v399, 0
        %v545 = vsel %vm450, %v400, 0
        %v547 = vsel %vm450, %v401, 0
        %v549 = vsel %vm450, %v402, 0
        %v551 = vsel %vm450, %v403, 0
        %v554 = vsel %vm466, %v373, 0
        %556 = vmatprep.subr.bf16.mxu0 0
        %557 = vmatpush1.bf16.msra.mxu0 %v554
        %558 = vmatprep.subr.bf16.mxu0 0
        %559 = vmatpush1.bf16.msra.mxu0 0
        %560 = vmatprep.subr.bf16.mxu0 0
        %561 = vmatpush1.bf16.msra.mxu0 0
        %562 = vmatprep.subr.bf16.mxu0 0
        %563 = vmatpush1.bf16.msra.mxu0 0
        %564 = vmatprep.subr.bf16.mxu0 0
        %565 = vmatpush1.bf16.msra.mxu0 0
        %566 = vmatprep.subr.bf16.mxu0 0
        %567 = vmatpush1.bf16.msra.mxu0 0
        %568 = vmatprep.subr.bf16.mxu0 0
        %569 = vmatpush1.bf16.msra.mxu0 0
        %570 = vmatprep.subr.bf16.mxu0 0
        %571 = vmatpush1.bf16.msra.mxu0 0
        %572 = vmatprep.subr.bf16.mxu0 0
        %573 = vmatpush1.bf16.msra.mxu0 0
        %574 = vmatprep.subr.bf16.mxu0 0
        %575 = vmatpush1.bf16.msra.mxu0 0
        %576 = vmatprep.subr.bf16.mxu0 0
        %577 = vmatpush1.bf16.msra.mxu0 0
        %578 = vmatprep.subr.bf16.mxu0 0
        %579 = vmatpush1.bf16.msra.mxu0 0
        %580 = vmatprep.subr.bf16.mxu0 0
        %581 = vmatpush1.bf16.msra.mxu0 0
        %582 = vmatprep.subr.bf16.mxu0 0
        %583 = vmatpush1.bf16.msra.mxu0 0
        %584 = vmatprep.subr.bf16.mxu0 0
        %585 = vmatpush1.bf16.msra.mxu0 0
        %586 = vmatprep.subr.bf16.mxu0 0
        %587 = vmatpush1.bf16.msra.mxu0 0
        %588 = vmatprep.mubr.bf16.mxu0 0
        %589 = vmatmul.mubr.bf16.gmra.mrb[0].mxu0 %v543
        %v590 = vpop.f32.mrb[0].mxu0
        %v591 = vadd.f32 %v505, %v590
        %v592 = vpop.f32.mrb[0].mxu0
        %v593 = vpop.f32.mrb[0].mxu0
        %v594 = vadd.f32 %v508, %v593
        %v595 = vpop.f32.mrb[0].mxu0
        %596 = vmatprep.mubr.bf16.mxu0 0
        %597 = vmatmul.mubr.bf16.gmra.mrb[0].mxu0 %v545
        %v598 = vpop.f32.mrb[0].mxu0
        %v599 = vadd.f32 %v513, %v598
        %v600 = vpop.f32.mrb[0].mxu0
        %v601 = vpop.f32.mrb[0].mxu0
        %v602 = vadd.f32 %v516, %v601
        %v603 = vpop.f32.mrb[0].mxu0
        %604 = vmatprep.mubr.bf16.mxu0 0
        %605 = vmatmul.mubr.bf16.gmra.mrb[0].mxu0 %v547
        %v606 = vpop.f32.mrb[0].mxu0
        %v607 = vadd.f32 %v521, %v606
        %v608 = vpop.f32.mrb[0].mxu0
        %v609 = vpop.f32.mrb[0].mxu0
        %v610 = vadd.f32 %v524, %v609
        %v611 = vpop.f32.mrb[0].mxu0
        %612 = vmatprep.mubr.bf16.mxu0 0
        %613 = vmatmul.mubr.bf16.gmra.mrb[0].mxu0 %v549
        %v614 = vpop.f32.mrb[0].mxu0
        %v615 = vadd.f32 %v529, %v614
        %v616 = vpop.f32.mrb[0].mxu0
        %v617 = vpop.f32.mrb[0].mxu0
        %v618 = vadd.f32 %v532, %v617
        %v619 = vpop.f32.mrb[0].mxu0
        %620 = vmatprep.mubr.bf16.mxu0 0
        %621 = vmatmul.mubr.bf16.gmra.mrb[0].mxu0 %v551
        %v622 = vpop.f32.mrb[0].mxu0
        %v623 = vadd.f32 %v537, %v622
        %v624 = vpop.f32.mrb[0].mxu0
        %v625 = vpop.f32.mrb[0].mxu0
        %v626 = vadd.f32 %v540, %v625
        %v627 = vpop.f32.mrb[0].mxu0
        %628 = vdwg.mxu0
        %v629 = vld [vmem:[%s303] sm:$0xe]
        %s630 = scalar_lea.vmem [#allocation5], 8
        %v631 = vld [vmem:[%s630] sm:$0xf]
        %v633 = vunpack.c.l.b16 %v629
        %v634 = vpack.c.b16 %v389, %v633
        %vm635 = vcmask 1046528
        %v636 = vrot.slane %v634, 1
        %v637 = vrot.slane %v400, 1
        %v638 = vsel %vm635, %v636, %v637
        %v639 = vrot.slane %v401, 1
        %v640 = vsel %vm635, %v637, %v639
        %v641 = vrot.slane %v402, 1
        %v642 = vsel %vm635, %v639, %v641
        %v643 = vrot.slane %v403, 1
        %v644 = vsel %vm635, %v641, %v643
        %v645 = vrot.slane %v404, 1
        %v646 = vsel %vm635, %v643, %v645
        %v648 = vsel %vm450, %v638, 0
        %v651 = vsel %vm450, %v640, 0
        %v654 = vsel %vm450, %v642, 0
        %v657 = vsel %vm450, %v644, 0
        %v660 = vsel %vm450, %v646, 0
        %v663 = vsel %vm466, %v631, 0
        %665 = vmatprep.subr.bf16.mxu0 0
        %666 = vmatpush1.bf16.msra.mxu0 %v663
        %667 = vmatprep.subr.bf16.mxu0 0
        %668 = vmatpush1.bf16.msra.mxu0 0
        %669 = vmatprep.subr.bf16.mxu0 0
        %670 = vmatpush1.bf16.msra.mxu0 0
        %671 = vmatprep.subr.bf16.mxu0 0
        %672 = vmatpush1.bf16.msra.mxu0 0
        %673 = vmatprep.subr.bf16.mxu0 0
        %674 = vmatpush1.bf16.msra.mxu0 0
        %675 = vmatprep.subr.bf16.mxu0 0
        %676 = vmatpush1.bf16.msra.mxu0 0
        %677 = vmatprep.subr.bf16.mxu0 0
        %678 = vmatpush1.bf16.msra.mxu0 0
        %679 = vmatprep.subr.bf16.mxu0 0
        %680 = vmatpush1.bf16.msra.mxu0 0
        %681 = vmatprep.subr.bf16.mxu0 0
        %682 = vmatpush1.bf16.msra.mxu0 0
        %683 = vmatprep.subr.bf16.mxu0 0
        %684 = vmatpush1.bf16.msra.mxu0 0
        %685 = vmatprep.subr.bf16.mxu0 0
        %686 = vmatpush1.bf16.msra.mxu0 0
        %687 = vmatprep.subr.bf16.mxu0 0
        %688 = vmatpush1.bf16.msra.mxu0 0
        %689 = vmatprep.subr.bf16.mxu0 0
        %690 = vmatpush1.bf16.msra.mxu0 0
        %691 = vmatprep.subr.bf16.mxu0 0
        %692 = vmatpush1.bf16.msra.mxu0 0
        %693 = vmatprep.subr.bf16.mxu0 0
        %694 = vmatpush1.bf16.msra.mxu0 0
        %695 = vmatprep.subr.bf16.mxu0 0
        %696 = vmatpush1.bf16.msra.mxu0 0
        %697 = vmatprep.mubr.bf16.mxu0 0
        %698 = vmatmul.mubr.bf16.gmra.mrb[0].mxu0 %v648
        %v699 = vpop.f32.mrb[0].mxu0
        %v700 = vadd.f32 0.0, %v699
        %v701 = vpop.f32.mrb[0].mxu0
        %v702 = vpop.f32.mrb[0].mxu0
        %v703 = vadd.f32 0.0, %v702
        %v704 = vpop.f32.mrb[0].mxu0
        %705 = vmatprep.mubr.bf16.mxu0 0
        %706 = vmatmul.mubr.bf16.gmra.mrb[0].mxu0 %v651
        %v707 = vpop.f32.mrb[0].mxu0
        %v708 = vadd.f32 0.0, %v707
        %v709 = vpop.f32.mrb[0].mxu0
        %v710 = vpop.f32.mrb[0].mxu0
        %v711 = vadd.f32 0.0, %v710
        %v712 = vpop.f32.mrb[0].mxu0
        %713 = vmatprep.mubr.bf16.mxu0 0
        %714 = vmatmul.mubr.bf16.gmra.mrb[0].mxu0 %v654
        %v715 = vpop.f32.mrb[0].mxu0
        %v716 = vadd.f32 0.0, %v715
        %v717 = vpop.f32.mrb[0].mxu0
        %v718 = vpop.f32.mrb[0].mxu0
        %v719 = vadd.f32 0.0, %v718
        %v720 = vpop.f32.mrb[0].mxu0
        %721 = vmatprep.mubr.bf16.mxu0 0
        %722 = vmatmul.mubr.bf16.gmra.mrb[0].mxu0 %v657
        %v723 = vpop.f32.mrb[0].mxu0
        %v724 = vadd.f32 0.0, %v723
        %v725 = vpop.f32.mrb[0].mxu0
        %v726 = vpop.f32.mrb[0].mxu0
        %v727 = vadd.f32 0.0, %v726
        %v728 = vpop.f32.mrb[0].mxu0
        %729 = vmatprep.mubr.bf16.mxu0 0
        %730 = vmatmul.mubr.bf16.gmra.mrb[0].mxu0 %v660
        %v731 = vpop.f32.mrb[0].mxu0
        %v732 = vadd.f32 0.0, %v731
        %v733 = vpop.f32.mrb[0].mxu0
        %v734 = vpop.f32.mrb[0].mxu0
        %v735 = vadd.f32 0.0, %v734
        %v736 = vpop.f32.mrb[0].mxu0
        %737 = vdwg.mxu0
        %v738 = vadd.f32 %v591, %v700
        %v739 = vadd.f32 %v594, %v703
        %v740 = vadd.f32 %v599, %v708
        %v741 = vadd.f32 %v602, %v711
        %v742 = vadd.f32 %v607, %v716
        %v743 = vadd.f32 %v610, %v719
        %v744 = vadd.f32 %v615, %v724
        %v745 = vadd.f32 %v618, %v727
        %v746 = vadd.f32 %v623, %v732
        %v747 = vadd.f32 %v626, %v735
        %v748 = vld [vmem:[%s303 + $0x4] sm:$0xe]
        %v749 = vld [vmem:[%s303 + $0x8] sm:$0xf]
        %v750 = vld [vmem:[%s303 + $0xc] sm:$0xf]
        %v751 = vld [vmem:[%s303 + $0x10] sm:$0xf]
        %v752 = vld [vmem:[%s303 + $0x14] sm:$0xf]
        %v753 = vld [vmem:[%s303 + $0x18] sm:$0xf]
        %v754 = vld [vmem:[%s303 + $0x1c] sm:$0xf]
        %v755 = vld [vmem:[%s303 + $0x20] sm:$0xf]
        %v756 = vld [vmem:[%s303 + $0x24] sm:$0xf]
        %v757 = vld [vmem:[%s303 + $0x28] sm:$0xf]
        %v758 = vld [vmem:[%s303 + $0x2c] sm:$0x1]
        %s759 = scalar_lea.vmem [#allocation5], 12
        %v760 = vld [vmem:[%s759] sm:$0xf]
        %v772 = vunpack.c.l.b16 %v748
        %v773 = vunpack.c.l.b16 %v749
        %v774 = vunpack.c.l.b16 %v750
        %v775 = vunpack.c.l.b16 %v751
        %v776 = vunpack.c.l.b16 %v752
        %v777 = vunpack.c.l.b16 %v753
        %v778 = vunpack.c.l.b16 %v754
        %v779 = vunpack.c.l.b16 %v755
        %v780 = vunpack.c.l.b16 %v756
        %v781 = vunpack.c.l.b16 %v757
        %v782 = vunpack.c.l.b16 %v758
        %v783 = vpack.c.b16 %v773, %v772
        %v784 = vpack.c.b16 %v775, %v774
        %v785 = vpack.c.b16 %v777, %v776
        %v786 = vpack.c.b16 %v779, %v778
        %v787 = vpack.c.b16 %v781, %v780
        %v788 = vpack.c.b16 %v782, %v782
        %v789 = vrot.slane %v783, 1
        %v790 = vrot.slane %v784, 1
        %v791 = vsel %vm635, %v789, %v790
        %v792 = vrot.slane %v785, 1
        %v793 = vsel %vm635, %v790, %v792
        %v794 = vrot.slane %v786, 1
        %v795 = vsel %vm635, %v792, %v794
        %v796 = vrot.slane %v787, 1
        %v797 = vsel %vm635, %v794, %v796
        %v798 = vrot.slane %v788, 1
        %v799 = vsel %vm635, %v796, %v798
        %v801 = vsel %vm450, %v791, 0
        %v804 = vsel %vm450, %v793, 0
        %v807 = vsel %vm450, %v795, 0
        %v810 = vsel %vm450, %v797, 0
        %v813 = vsel %vm450, %v799, 0
        %v816 = vsel %vm466, %v760, 0
        %818 = vmatprep.subr.bf16.mxu0 0
        %819 = vmatpush1.bf16.msra.mxu0 %v816
        %820 = vmatprep.subr.bf16.mxu0 0
        %821 = vmatpush1.bf16.msra.mxu0 0
        %822 = vmatprep.subr.bf16.mxu0 0
        %823 = vmatpush1.bf16.msra.mxu0 0
        %824 = vmatprep.subr.bf16.mxu0 0
        %825 = vmatpush1.bf16.msra.mxu0 0
        %826 = vmatprep.subr.bf16.mxu0 0
        %827 = vmatpush1.bf16.msra.mxu0 0
        %828 = vmatprep.subr.bf16.mxu0 0
        %829 = vmatpush1.bf16.msra.mxu0 0
        %830 = vmatprep.subr.bf16.mxu0 0
        %831 = vmatpush1.bf16.msra.mxu0 0
        %832 = vmatprep.subr.bf16.mxu0 0
        %833 = vmatpush1.bf16.msra.mxu0 0
        %834 = vmatprep.subr.bf16.mxu0 0
        %835 = vmatpush1.bf16.msra.mxu0 0
        %836 = vmatprep.subr.bf16.mxu0 0
        %837 = vmatpush1.bf16.msra.mxu0 0
        %838 = vmatprep.subr.bf16.mxu0 0
        %839 = vmatpush1.bf16.msra.mxu0 0
        %840 = vmatprep.subr.bf16.mxu0 0
        %841 = vmatpush1.bf16.msra.mxu0 0
        %842 = vmatprep.subr.bf16.mxu0 0
        %843 = vmatpush1.bf16.msra.mxu0 0
        %844 = vmatprep.subr.bf16.mxu0 0
        %845 = vmatpush1.bf16.msra.mxu0 0
        %846 = vmatprep.subr.bf16.mxu0 0
        %847 = vmatpush1.bf16.msra.mxu0 0
        %848 = vmatprep.subr.bf16.mxu0 0
        %849 = vmatpush1.bf16.msra.mxu0 0
        %850 = vmatprep.mubr.bf16.mxu0 0
        %851 = vmatmul.mubr.bf16.gmra.mrb[0].mxu0 %v801
        %v852 = vpop.f32.mrb[0].mxu0
        %v853 = vadd.f32 0.0, %v852
        %v854 = vpop.f32.mrb[0].mxu0
        %v855 = vpop.f32.mrb[0].mxu0
        %v856 = vadd.f32 0.0, %v855
        %v857 = vpop.f32.mrb[0].mxu0
        %858 = vmatprep.mubr.bf16.mxu0 0
        %859 = vmatmul.mubr.bf16.gmra.mrb[0].mxu0 %v804
        %v860 = vpop.f32.mrb[0].mxu0
        %v861 = vadd.f32 0.0, %v860
        %v862 = vpop.f32.mrb[0].mxu0
        %v863 = vpop.f32.mrb[0].mxu0
        %v864 = vadd.f32 0.0, %v863
        %v865 = vpop.f32.mrb[0].mxu0
        %866 = vmatprep.mubr.bf16.mxu0 0
        %867 = vmatmul.mubr.bf16.gmra.mrb[0].mxu0 %v807
        %v868 = vpop.f32.mrb[0].mxu0
        %v869 = vadd.f32 0.0, %v868
        %v870 = vpop.f32.mrb[0].mxu0
        %v871 = vpop.f32.mrb[0].mxu0
        %v872 = vadd.f32 0.0, %v871
        %v873 = vpop.f32.mrb[0].mxu0
        %874 = vmatprep.mubr.bf16.mxu0 0
        %875 = vmatmul.mubr.bf16.gmra.mrb[0].mxu0 %v810
        %v876 = vpop.f32.mrb[0].mxu0
        %v877 = vadd.f32 0.0, %v876
        %v878 = vpop.f32.mrb[0].mxu0
        %v879 = vpop.f32.mrb[0].mxu0
        %v880 = vadd.f32 0.0, %v879
        %v881 = vpop.f32.mrb[0].mxu0
        %882 = vmatprep.mubr.bf16.mxu0 0
        %883 = vmatmul.mubr.bf16.gmra.mrb[0].mxu0 %v813
        %v884 = vpop.f32.mrb[0].mxu0
        %v885 = vadd.f32 0.0, %v884
        %v886 = vpop.f32.mrb[0].mxu0
        %v887 = vpop.f32.mrb[0].mxu0
        %v888 = vadd.f32 0.0, %v887
        %v889 = vpop.f32.mrb[0].mxu0
        %890 = vdwg.mxu0
        %v891 = vadd.f32 %v738, %v853
        %v892 = vadd.f32 %v739, %v856
        %v893 = vadd.f32 %v740, %v861
        %v894 = vadd.f32 %v741, %v864
        %v895 = vadd.f32 %v742, %v869
        %v896 = vadd.f32 %v743, %v872
        %v897 = vadd.f32 %v744, %v877
        %v898 = vadd.f32 %v745, %v880
        %v899 = vadd.f32 %v746, %v885
        %v900 = vadd.f32 %v747, %v888
        %v901 = vld [vmem:[%s303 + $0x2c] sm:$0x3]
        %s902 = scalar_lea.vmem [#allocation5], 16
        %v903 = vld [vmem:[%s902] sm:$0xf]
        %v905 = vunpack.c.l.b16 %v901
        %v906 = vpack.c.b16 %v905, %v905
        %vm907 = vsmask.f32 6400
        %v909 = vshrl.u32 %v783, 16
        %v911 = vrot.slane %v909, 1
        %v912 = vshll.u32 %v783, 16
        %v914 = vrot.slane %v912, 2
        %v915 = vor.u32 %v911, %v914
        %v917 = vshrl.u32 %v784, 16
        %v919 = vrot.slane %v917, 1
        %v920 = vshll.u32 %v784, 16
        %v922 = vrot.slane %v920, 2
        %v923 = vor.u32 %v919, %v922
        %v924 = vsel %vm907, %v915, %v923
        %v926 = vshrl.u32 %v785, 16
        %v928 = vrot.slane %v926, 1
        %v929 = vshll.u32 %v785, 16
        %v931 = vrot.slane %v929, 2
        %v932 = vor.u32 %v928, %v931
        %v933 = vsel %vm907, %v923, %v932
        %v935 = vshrl.u32 %v786, 16
        %v937 = vrot.slane %v935, 1
        %v938 = vshll.u32 %v786, 16
        %v940 = vrot.slane %v938, 2
        %v941 = vor.u32 %v937, %v940
        %v942 = vsel %vm907, %v932, %v941
        %v944 = vshrl.u32 %v787, 16
        %v946 = vrot.slane %v944, 1
        %v947 = vshll.u32 %v787, 16
        %v949 = vrot.slane %v947, 2
        %v950 = vor.u32 %v946, %v949
        %v951 = vsel %vm907, %v941, %v950
        %v953 = vshrl.u32 %v906, 16
        %v955 = vrot.slane %v953, 1
        %v956 = vshll.u32 %v906, 16
        %v958 = vrot.slane %v956, 2
        %v959 = vor.u32 %v955, %v958
        %v960 = vsel %vm907, %v950, %v959
        %v962 = vsel %vm450, %v924, 0
        %v965 = vsel %vm450, %v933, 0
        %v968 = vsel %vm450, %v942, 0
        %v971 = vsel %vm450, %v951, 0
        %v974 = vsel %vm450, %v960, 0
        %v977 = vsel %vm466, %v903, 0
        %979 = vmatprep.subr.bf16.mxu0 0
        %980 = vmatpush1.bf16.msra.mxu0 %v977
        %981 = vmatprep.subr.bf16.mxu0 0
        %982 = vmatpush1.bf16.msra.mxu0 0
        %983 = vmatprep.subr.bf16.mxu0 0
        %984 = vmatpush1.bf16.msra.mxu0 0
        %985 = vmatprep.subr.bf16.mxu0 0
        %986 = vmatpush1.bf16.msra.mxu0 0
        %987 = vmatprep.subr.bf16.mxu0 0
        %988 = vmatpush1.bf16.msra.mxu0 0
        %989 = vmatprep.subr.bf16.mxu0 0
        %990 = vmatpush1.bf16.msra.mxu0 0
        %991 = vmatprep.subr.bf16.mxu0 0
        %992 = vmatpush1.bf16.msra.mxu0 0
        %993 = vmatprep.subr.bf16.mxu0 0
        %994 = vmatpush1.bf16.msra.mxu0 0
        %995 = vmatprep.subr.bf16.mxu0 0
        %996 = vmatpush1.bf16.msra.mxu0 0
        %997 = vmatprep.subr.bf16.mxu0 0
        %998 = vmatpush1.bf16.msra.mxu0 0
        %999 = vmatprep.subr.bf16.mxu0 0
        %1000 = vmatpush1.bf16.msra.mxu0 0
        %1001 = vmatprep.subr.bf16.mxu0 0
        %1002 = vmatpush1.bf16.msra.mxu0 0
        %1003 = vmatprep.subr.bf16.mxu0 0
        %1004 = vmatpush1.bf16.msra.mxu0 0
        %1005 = vmatprep.subr.bf16.mxu0 0
        %1006 = vmatpush1.bf16.msra.mxu0 0
        %1007 = vmatprep.subr.bf16.mxu0 0
        %1008 = vmatpush1.bf16.msra.mxu0 0
        %1009 = vmatprep.subr.bf16.mxu0 0
        %1010 = vmatpush1.bf16.msra.mxu0 0
        %1011 = vmatprep.mubr.bf16.mxu0 0
        %1012 = vmatmul.mubr.bf16.gmra.mrb[0].mxu0 %v962
        %v1013 = vpop.f32.mrb[0].mxu0
        %v1014 = vadd.f32 0.0, %v1013
        %v1015 = vpop.f32.mrb[0].mxu0
        %v1016 = vpop.f32.mrb[0].mxu0
        %v1017 = vadd.f32 0.0, %v1016
        %v1018 = vpop.f32.mrb[0].mxu0
        %1019 = vmatprep.mubr.bf16.mxu0 0
        %1020 = vmatmul.mubr.bf16.gmra.mrb[0].mxu0 %v965
        %v1021 = vpop.f32.mrb[0].mxu0
        %v1022 = vadd.f32 0.0, %v1021
        %v1023 = vpop.f32.mrb[0].mxu0
        %v1024 = vpop.f32.mrb[0].mxu0
        %v1025 = vadd.f32 0.0, %v1024
        %v1026 = vpop.f32.mrb[0].mxu0
        %1027 = vmatprep.mubr.bf16.mxu0 0
        %1028 = vmatmul.mubr.bf16.gmra.mrb[0].mxu0 %v968
        %v1029 = vpop.f32.mrb[0].mxu0
        %v1030 = vadd.f32 0.0, %v1029
        %v1031 = vpop.f32.mrb[0].mxu0
        %v1032 = vpop.f32.mrb[0].mxu0
        %v1033 = vadd.f32 0.0, %v1032
        %v1034 = vpop.f32.mrb[0].mxu0
        %1035 = vmatprep.mubr.bf16.mxu0 0
        %1036 = vmatmul.mubr.bf16.gmra.mrb[0].mxu0 %v971
        %v1037 = vpop.f32.mrb[0].mxu0
        %v1038 = vadd.f32 0.0, %v1037
        %v1039 = vpop.f32.mrb[0].mxu0
        %v1040 = vpop.f32.mrb[0].mxu0
        %v1041 = vadd.f32 0.0, %v1040
        %v1042 = vpop.f32.mrb[0].mxu0
        %1043 = vmatprep.mubr.bf16.mxu0 0
        %1044 = vmatmul.mubr.bf16.gmra.mrb[0].mxu0 %v974
        %v1045 = vpop.f32.mrb[0].mxu0
        %v1046 = vadd.f32 0.0, %v1045
        %v1047 = vpop.f32.mrb[0].mxu0
        %v1048 = vpop.f32.mrb[0].mxu0
        %v1049 = vadd.f32 0.0, %v1048
        %v1050 = vpop.f32.mrb[0].mxu0
        %1051 = vdwg.mxu0
        %v1052 = vadd.f32 %v891, %v1014
        %v1053 = vadd.f32 %v892, %v1017
        %v1054 = vadd.f32 %v893, %v1022
        %v1055 = vadd.f32 %v894, %v1025
        %v1056 = vadd.f32 %v895, %v1030
        %v1057 = vadd.f32 %v896, %v1033
        %v1058 = vadd.f32 %v897, %v1038
        %v1059 = vadd.f32 %v898, %v1041
        %v1060 = vadd.f32 %v899, %v1046
        %v1061 = vadd.f32 %v900, %v1049
        %v1062 = vld [vmem:[%s303 + $0x4] sm:$0xc]
        %s1063 = scalar_lea.vmem [#allocation5], 20
        %v1064 = vld [vmem:[%s1063] sm:$0xf]
        %v1066 = vunpack.c.l.b16 %v1062
        %v1067 = vpack.c.b16 %v773, %v1066
        %vm1068 = vcmask 1045504
        %v1069 = vrot.slane %v1067, 2
        %v1070 = vrot.slane %v784, 2
        %v1071 = vsel %vm1068, %v1069, %v1070
        %v1072 = vrot.slane %v785, 2
        %v1073 = vsel %vm1068, %v1070, %v1072
        %v1074 = vrot.slane %v786, 2
        %v1075 = vsel %vm1068, %v1072, %v1074
        %v1076 = vrot.slane %v787, 2
        %v1077 = vsel %vm1068, %v1074, %v1076
        %v1078 = vrot.slane %v906, 2
        %v1079 = vsel %vm1068, %v1076, %v1078
        %v1081 = vsel %vm450, %v1071, 0
        %v1084 = vsel %vm450, %v1073, 0
        %v1087 = vsel %vm450, %v1075, 0
        %v1090 = vsel %vm450, %v1077, 0
        %v1093 = vsel %vm450, %v1079, 0
        %v1096 = vsel %vm466, %v1064, 0
        %1098 = vmatprep.subr.bf16.mxu0 0
        %1099 = vmatpush1.bf16.msra.mxu0 %v1096
        %1100 = vmatprep.subr.bf16.mxu0 0
        %1101 = vmatpush1.bf16.msra.mxu0 0
        %1102 = vmatprep.subr.bf16.mxu0 0
        %1103 = vmatpush1.bf16.msra.mxu0 0
        %1104 = vmatprep.subr.bf16.mxu0 0
        %1105 = vmatpush1.bf16.msra.mxu0 0
        %1106 = vmatprep.subr.bf16.mxu0 0
        %1107 = vmatpush1.bf16.msra.mxu0 0
        %1108 = vmatprep.subr.bf16.mxu0 0
        %1109 = vmatpush1.bf16.msra.mxu0 0
        %1110 = vmatprep.subr.bf16.mxu0 0
        %1111 = vmatpush1.bf16.msra.mxu0 0
        %1112 = vmatprep.subr.bf16.mxu0 0
        %1113 = vmatpush1.bf16.msra.mxu0 0
        %1114 = vmatprep.subr.bf16.mxu0 0
        %1115 = vmatpush1.bf16.msra.mxu0 0
        %1116 = vmatprep.subr.bf16.mxu0 0
        %1117 = vmatpush1.bf16.msra.mxu0 0
        %1118 = vmatprep.subr.bf16.mxu0 0
        %1119 = vmatpush1.bf16.msra.mxu0 0
        %1120 = vmatprep.subr.bf16.mxu0 0
        %1121 = vmatpush1.bf16.msra.mxu0 0
        %1122 = vmatprep.subr.bf16.mxu0 0
        %1123 = vmatpush1.bf16.msra.mxu0 0
        %1124 = vmatprep.subr.bf16.mxu0 0
        %1125 = vmatpush1.bf16.msra.mxu0 0
        %1126 = vmatprep.subr.bf16.mxu0 0
        %1127 = vmatpush1.bf16.msra.mxu0 0
        %1128 = vmatprep.subr.bf16.mxu0 0
        %1129 = vmatpush1.bf16.msra.mxu0 0
        %1130 = vmatprep.mubr.bf16.mxu0 0
        %1131 = vmatmul.mubr.bf16.gmra.mrb[0].mxu0 %v1081
        %v1132 = vpop.f32.mrb[0].mxu0
        %v1133 = vadd.f32 0.0, %v1132
        %v1134 = vpop.f32.mrb[0].mxu0
        %v1135 = vpop.f32.mrb[0].mxu0
        %v1136 = vadd.f32 0.0, %v1135
        %v1137 = vpop.f32.mrb[0].mxu0
        %1138 = vmatprep.mubr.bf16.mxu0 0
        %1139 = vmatmul.mubr.bf16.gmra.mrb[0].mxu0 %v1084
        %v1140 = vpop.f32.mrb[0].mxu0
        %v1141 = vadd.f32 0.0, %v1140
        %v1142 = vpop.f32.mrb[0].mxu0
        %v1143 = vpop.f32.mrb[0].mxu0
        %v1144 = vadd.f32 0.0, %v1143
        %v1145 = vpop.f32.mrb[0].mxu0
        %1146 = vmatprep.mubr.bf16.mxu0 0
        %1147 = vmatmul.mubr.bf16.gmra.mrb[0].mxu0 %v1087
        %v1148 = vpop.f32.mrb[0].mxu0
        %v1149 = vadd.f32 0.0, %v1148
        %v1150 = vpop.f32.mrb[0].mxu0
        %v1151 = vpop.f32.mrb[0].mxu0
        %v1152 = vadd.f32 0.0, %v1151
        %v1153 = vpop.f32.mrb[0].mxu0
        %1154 = vmatprep.mubr.bf16.mxu0 0
        %1155 = vmatmul.mubr.bf16.gmra.mrb[0].mxu0 %v1090
        %v1156 = vpop.f32.mrb[0].mxu0
        %v1157 = vadd.f32 0.0, %v1156
        %v1158 = vpop.f32.mrb[0].mxu0
        %v1159 = vpop.f32.mrb[0].mxu0
        %v1160 = vadd.f32 0.0, %v1159
        %v1161 = vpop.f32.mrb[0].mxu0
        %1162 = vmatprep.mubr.bf16.mxu0 0
        %1163 = vmatmul.mubr.bf16.gmra.mrb[0].mxu0 %v1093
        %v1164 = vpop.f32.mrb[0].mxu0
        %v1165 = vadd.f32 0.0, %v1164
        %v1166 = vpop.f32.mrb[0].mxu0
        %v1167 = vpop.f32.mrb[0].mxu0
        %v1168 = vadd.f32 0.0, %v1167
        %v1169 = vpop.f32.mrb[0].mxu0
        %1170 = vdwg.mxu0
        %v1171 = vadd.f32 %v1052, %v1133
        %v1172 = vadd.f32 %v1053, %v1136
        %v1173 = vadd.f32 %v1054, %v1141
        %v1174 = vadd.f32 %v1055, %v1144
        %v1175 = vadd.f32 %v1056, %v1149
        %v1176 = vadd.f32 %v1057, %v1152
        %v1177 = vadd.f32 %v1058, %v1157
        %v1178 = vadd.f32 %v1059, %v1160
        %v1179 = vadd.f32 %v1060, %v1165
        %v1180 = vadd.f32 %v1061, %v1168
        %v1181 = vld [vmem:[%s303 + $0x8] sm:$0xc]
        %v1182 = vld [vmem:[%s303 + $0xc] sm:$0xf]
        %v1183 = vld [vmem:[%s303 + $0x10] sm:$0xf]
        %v1184 = vld [vmem:[%s303 + $0x14] sm:$0xf]
        %v1185 = vld [vmem:[%s303 + $0x18] sm:$0xf]
        %v1186 = vld [vmem:[%s303 + $0x1c] sm:$0xf]
        %v1187 = vld [vmem:[%s303 + $0x20] sm:$0xf]
        %v1188 = vld [vmem:[%s303 + $0x24] sm:$0xf]
        %v1189 = vld [vmem:[%s303 + $0x28] sm:$0xf]
        %v1190 = vld [vmem:[%s303 + $0x2c] sm:$0xf]
        %v1191 = vld [vmem:[%s303 + $0x30] sm:$0x3]
        %s1192 = scalar_lea.vmem [#allocation5], 24
        %v1193 = vld [vmem:[%s1192] sm:$0xf]
        %v1205 = vunpack.c.l.b16 %v1181
        %v1206 = vunpack.c.l.b16 %v1182
        %v1207 = vunpack.c.l.b16 %v1183
        %v1208 = vunpack.c.l.b16 %v1184
        %v1209 = vunpack.c.l.b16 %v1185
        %v1210 = vunpack.c.l.b16 %v1186
        %v1211 = vunpack.c.l.b16 %v1187
        %v1212 = vunpack.c.l.b16 %v1188
        %v1213 = vunpack.c.l.b16 %v1189
        %v1214 = vunpack.c.l.b16 %v1190
        %v1215 = vunpack.c.l.b16 %v1191
        %v1216 = vpack.c.b16 %v1206, %v1205
        %v1217 = vpack.c.b16 %v1208, %v1207
        %v1218 = vpack.c.b16 %v1210, %v1209
        %v1219 = vpack.c.b16 %v1212, %v1211
        %v1220 = vpack.c.b16 %v1214, %v1213
        %v1221 = vpack.c.b16 %v1215, %v1215
        %v1222 = vrot.slane %v1216, 2
        %v1223 = vrot.slane %v1217, 2
        %v1224 = vsel %vm1068, %v1222, %v1223
        %v1225 = vrot.slane %v1218, 2
        %v1226 = vsel %vm1068, %v1223, %v1225
        %v1227 = vrot.slane %v1219, 2
        %v1228 = vsel %vm1068, %v1225, %v1227
        %v1229 = vrot.slane %v1220, 2
        %v1230 = vsel %vm1068, %v1227, %v1229
        %v1231 = vrot.slane %v1221, 2
        %v1232 = vsel %vm1068, %v1229, %v1231
        %v1234 = vsel %vm450, %v1224, 0
        %v1237 = vsel %vm450, %v1226, 0
        %v1240 = vsel %vm450, %v1228, 0
        %v1243 = vsel %vm450, %v1230, 0
        %v1246 = vsel %vm450, %v1232, 0
        %v1249 = vsel %vm466, %v1193, 0
        %1251 = vmatprep.subr.bf16.mxu0 0
        %1252 = vmatpush1.bf16.msra.mxu0 %v1249
        %1253 = vmatprep.subr.bf16.mxu0 0
        %1254 = vmatpush1.bf16.msra.mxu0 0
        %1255 = vmatprep.subr.bf16.mxu0 0
        %1256 = vmatpush1.bf16.msra.mxu0 0
        %1257 = vmatprep.subr.bf16.mxu0 0
        %1258 = vmatpush1.bf16.msra.mxu0 0
        %1259 = vmatprep.subr.bf16.mxu0 0
        %1260 = vmatpush1.bf16.msra.mxu0 0
        %1261 = vmatprep.subr.bf16.mxu0 0
        %1262 = vmatpush1.bf16.msra.mxu0 0
        %1263 = vmatprep.subr.bf16.mxu0 0
        %1264 = vmatpush1.bf16.msra.mxu0 0
        %1265 = vmatprep.subr.bf16.mxu0 0
        %1266 = vmatpush1.bf16.msra.mxu0 0
        %1267 = vmatprep.subr.bf16.mxu0 0
        %1268 = vmatpush1.bf16.msra.mxu0 0
        %1269 = vmatprep.subr.bf16.mxu0 0
        %1270 = vmatpush1.bf16.msra.mxu0 0
        %1271 = vmatprep.subr.bf16.mxu0 0
        %1272 = vmatpush1.bf16.msra.mxu0 0
        %1273 = vmatprep.subr.bf16.mxu0 0
        %1274 = vmatpush1.bf16.msra.mxu0 0
        %1275 = vmatprep.subr.bf16.mxu0 0
        %1276 = vmatpush1.bf16.msra.mxu0 0
        %1277 = vmatprep.subr.bf16.mxu0 0
        %1278 = vmatpush1.bf16.msra.mxu0 0
        %1279 = vmatprep.subr.bf16.mxu0 0
        %1280 = vmatpush1.bf16.msra.mxu0 0
        %1281 = vmatprep.subr.bf16.mxu0 0
        %1282 = vmatpush1.bf16.msra.mxu0 0
        %1283 = vmatprep.mubr.bf16.mxu0 0
        %1284 = vmatmul.mubr.bf16.gmra.mrb[0].mxu0 %v1234
        %v1285 = vpop.f32.mrb[0].mxu0
        %v1286 = vadd.f32 0.0, %v1285
        %v1287 = vpop.f32.mrb[0].mxu0
        %v1288 = vpop.f32.mrb[0].mxu0
        %v1289 = vadd.f32 0.0, %v1288
        %v1290 = vpop.f32.mrb[0].mxu0
        %1291 = vmatprep.mubr.bf16.mxu0 0
        %1292 = vmatmul.mubr.bf16.gmra.mrb[0].mxu0 %v1237
        %v1293 = vpop.f32.mrb[0].mxu0
        %v1294 = vadd.f32 0.0, %v1293
        %v1295 = vpop.f32.mrb[0].mxu0
        %v1296 = vpop.f32.mrb[0].mxu0
        %v1297 = vadd.f32 0.0, %v1296
        %v1298 = vpop.f32.mrb[0].mxu0
        %1299 = vmatprep.mubr.bf16.mxu0 0
        %1300 = vmatmul.mubr.bf16.gmra.mrb[0].mxu0 %v1240
        %v1301 = vpop.f32.mrb[0].mxu0
        %v1302 = vadd.f32 0.0, %v1301
        %v1303 = vpop.f32.mrb[0].mxu0
        %v1304 = vpop.f32.mrb[0].mxu0
        %v1305 = vadd.f32 0.0, %v1304
        %v1306 = vpop.f32.mrb[0].mxu0
        %1307 = vmatprep.mubr.bf16.mxu0 0
        %1308 = vmatmul.mubr.bf16.gmra.mrb[0].mxu0 %v1243
        %v1309 = vpop.f32.mrb[0].mxu0
        %v1310 = vadd.f32 0.0, %v1309
        %v1311 = vpop.f32.mrb[0].mxu0
        %v1312 = vpop.f32.mrb[0].mxu0
        %v1313 = vadd.f32 0.0, %v1312
        %v1314 = vpop.f32.mrb[0].mxu0
        %1315 = vmatprep.mubr.bf16.mxu0 0
        %1316 = vmatmul.mubr.bf16.gmra.mrb[0].mxu0 %v1246
        %v1317 = vpop.f32.mrb[0].mxu0
        %v1318 = vadd.f32 0.0, %v1317
        %v1319 = vpop.f32.mrb[0].mxu0
        %v1320 = vpop.f32.mrb[0].mxu0
        %v1321 = vadd.f32 0.0, %v1320
        %v1322 = vpop.f32.mrb[0].mxu0
        %1323 = vdwg.mxu0
        %v1324 = vadd.f32 %v1171, %v1286
        %v1325 = vadd.f32 %v1172, %v1289
        %v1326 = vadd.f32 %v1173, %v1294
        %v1327 = vadd.f32 %v1174, %v1297
        %v1328 = vadd.f32 %v1175, %v1302
        %v1329 = vadd.f32 %v1176, %v1305
        %v1330 = vadd.f32 %v1177, %v1310
        %v1331 = vadd.f32 %v1178, %v1313
        %v1332 = vadd.f32 %v1179, %v1318
        %v1333 = vadd.f32 %v1180, %v1321
        %v1334 = vld [vmem:[%s303 + $0x30] sm:$0x7]
        %s1335 = scalar_lea.vmem [#allocation5], 28
        %v1336 = vld [vmem:[%s1335] sm:$0xf]
        %v1338 = vunpack.c.l.b16 %v1334
        %v1339 = vpack.c.b16 %v1338, %v1338
        %vm1340 = vsmask.f32 5376
        %v1342 = vshrl.u32 %v1216, 16
        %v1344 = vrot.slane %v1342, 2
        %v1345 = vshll.u32 %v1216, 16
        %v1347 = vrot.slane %v1345, 3
        %v1348 = vor.u32 %v1344, %v1347
        %v1350 = vshrl.u32 %v1217, 16
        %v1352 = vrot.slane %v1350, 2
        %v1353 = vshll.u32 %v1217, 16
        %v1355 = vrot.slane %v1353, 3
        %v1356 = vor.u32 %v1352, %v1355
        %v1357 = vsel %vm1340, %v1348, %v1356
        %v1359 = vshrl.u32 %v1218, 16
        %v1361 = vrot.slane %v1359, 2
        %v1362 = vshll.u32 %v1218, 16
        %v1364 = vrot.slane %v1362, 3
        %v1365 = vor.u32 %v1361, %v1364
        %v1366 = vsel %vm1340, %v1356, %v1365
        %v1368 = vshrl.u32 %v1219, 16
        %v1370 = vrot.slane %v1368, 2
        %v1371 = vshll.u32 %v1219, 16
        %v1373 = vrot.slane %v1371, 3
        %v1374 = vor.u32 %v1370, %v1373
        %v1375 = vsel %vm1340, %v1365, %v1374
        %v1377 = vshrl.u32 %v1220, 16
        %v1379 = vrot.slane %v1377, 2
        %v1380 = vshll.u32 %v1220, 16
        %v1382 = vrot.slane %v1380, 3
        %v1383 = vor.u32 %v1379, %v1382
        %v1384 = vsel %vm1340, %v1374, %v1383
        %v1386 = vshrl.u32 %v1339, 16
        %v1388 = vrot.slane %v1386, 2
        %v1389 = vshll.u32 %v1339, 16
        %v1391 = vrot.slane %v1389, 3
        %v1392 = vor.u32 %v1388, %v1391
        %v1393 = vsel %vm1340, %v1383, %v1392
        %v1395 = vsel %vm450, %v1357, 0
        %v1398 = vsel %vm450, %v1366, 0
        %v1401 = vsel %vm450, %v1375, 0
        %v1404 = vsel %vm450, %v1384, 0
        %v1407 = vsel %vm450, %v1393, 0
        %v1410 = vsel %vm466, %v1336, 0
        %1412 = vmatprep.subr.bf16.mxu0 0
        %1413 = vmatpush1.bf16.msra.mxu0 %v1410
        %1414 = vmatprep.subr.bf16.mxu0 0
        %1415 = vmatpush1.bf16.msra.mxu0 0
        %1416 = vmatprep.subr.bf16.mxu0 0
        %1417 = vmatpush1.bf16.msra.mxu0 0
        %1418 = vmatprep.subr.bf16.mxu0 0
        %1419 = vmatpush1.bf16.msra.mxu0 0
        %1420 = vmatprep.subr.bf16.mxu0 0
        %1421 = vmatpush1.bf16.msra.mxu0 0
        %1422 = vmatprep.subr.bf16.mxu0 0
        %1423 = vmatpush1.bf16.msra.mxu0 0
        %1424 = vmatprep.subr.bf16.mxu0 0
        %1425 = vmatpush1.bf16.msra.mxu0 0
        %1426 = vmatprep.subr.bf16.mxu0 0
        %1427 = vmatpush1.bf16.msra.mxu0 0
        %1428 = vmatprep.subr.bf16.mxu0 0
        %1429 = vmatpush1.bf16.msra.mxu0 0
        %1430 = vmatprep.subr.bf16.mxu0 0
        %1431 = vmatpush1.bf16.msra.mxu0 0
        %1432 = vmatprep.subr.bf16.mxu0 0
        %1433 = vmatpush1.bf16.msra.mxu0 0
        %1434 = vmatprep.subr.bf16.mxu0 0
        %1435 = vmatpush1.bf16.msra.mxu0 0
        %1436 = vmatprep.subr.bf16.mxu0 0
        %1437 = vmatpush1.bf16.msra.mxu0 0
        %1438 = vmatprep.subr.bf16.mxu0 0
        %1439 = vmatpush1.bf16.msra.mxu0 0
        %1440 = vmatprep.subr.bf16.mxu0 0
        %1441 = vmatpush1.bf16.msra.mxu0 0
        %1442 = vmatprep.subr.bf16.mxu0 0
        %1443 = vmatpush1.bf16.msra.mxu0 0
        %1444 = vmatprep.mubr.bf16.mxu0 0
        %1445 = vmatmul.mubr.bf16.gmra.mrb[0].mxu0 %v1395
        %v1446 = vpop.f32.mrb[0].mxu0
        %v1447 = vadd.f32 0.0, %v1446
        %v1448 = vpop.f32.mrb[0].mxu0
        %v1449 = vpop.f32.mrb[0].mxu0
        %v1450 = vadd.f32 0.0, %v1449
        %v1451 = vpop.f32.mrb[0].mxu0
        %1452 = vmatprep.mubr.bf16.mxu0 0
        %1453 = vmatmul.mubr.bf16.gmra.mrb[0].mxu0 %v1398
        %v1454 = vpop.f32.mrb[0].mxu0
        %v1455 = vadd.f32 0.0, %v1454
        %v1456 = vpop.f32.mrb[0].mxu0
        %v1457 = vpop.f32.mrb[0].mxu0
        %v1458 = vadd.f32 0.0, %v1457
        %v1459 = vpop.f32.mrb[0].mxu0
        %1460 = vmatprep.mubr.bf16.mxu0 0
        %1461 = vmatmul.mubr.bf16.gmra.mrb[0].mxu0 %v1401
        %v1462 = vpop.f32.mrb[0].mxu0
        %v1463 = vadd.f32 0.0, %v1462
        %v1464 = vpop.f32.mrb[0].mxu0
        %v1465 = vpop.f32.mrb[0].mxu0
        %v1466 = vadd.f32 0.0, %v1465
        %v1467 = vpop.f32.mrb[0].mxu0
        %1468 = vmatprep.mubr.bf16.mxu0 0
        %1469 = vmatmul.mubr.bf16.gmra.mrb[0].mxu0 %v1404
        %v1470 = vpop.f32.mrb[0].mxu0
        %v1471 = vadd.f32 0.0, %v1470
        %v1472 = vpop.f32.mrb[0].mxu0
        %v1473 = vpop.f32.mrb[0].mxu0
        %v1474 = vadd.f32 0.0, %v1473
        %v1475 = vpop.f32.mrb[0].mxu0
        %1476 = vmatprep.mubr.bf16.mxu0 0
        %1477 = vmatmul.mubr.bf16.gmra.mrb[0].mxu0 %v1407
        %v1478 = vpop.f32.mrb[0].mxu0
        %v1479 = vadd.f32 0.0, %v1478
        %v1480 = vpop.f32.mrb[0].mxu0
        %v1481 = vpop.f32.mrb[0].mxu0
        %v1482 = vadd.f32 0.0, %v1481
        %v1483 = vpop.f32.mrb[0].mxu0
        %1484 = vdwg.mxu0
        %v1485 = vadd.f32 %v1324, %v1447
        %v1486 = vadd.f32 %v1325, %v1450
        %v1487 = vadd.f32 %v1326, %v1455
        %v1488 = vadd.f32 %v1327, %v1458
        %v1489 = vadd.f32 %v1328, %v1463
        %v1490 = vadd.f32 %v1329, %v1466
        %v1491 = vadd.f32 %v1330, %v1471
        %v1492 = vadd.f32 %v1331, %v1474
        %v1493 = vadd.f32 %v1332, %v1479
        %v1494 = vadd.f32 %v1333, %v1482
        %v1495 = vld [vmem:[%s303 + $0x8] sm:$0x8]
        %s1496 = scalar_lea.vmem [#allocation5], 32
        %v1497 = vld [vmem:[%s1496] sm:$0xf]
        %v1499 = vunpack.c.l.b16 %v1495
        %v1500 = vpack.c.b16 %v1206, %v1499
        %vm1501 = vcmask 1044480
        %v1502 = vrot.slane %v1500, 3
        %v1503 = vrot.slane %v1217, 3
        %v1504 = vsel %vm1501, %v1502, %v1503
        %v1505 = vrot.slane %v1218, 3
        %v1506 = vsel %vm1501, %v1503, %v1505
        %v1507 = vrot.slane %v1219, 3
        %v1508 = vsel %vm1501, %v1505, %v1507
        %v1509 = vrot.slane %v1220, 3
        %v1510 = vsel %vm1501, %v1507, %v1509
        %v1511 = vrot.slane %v1339, 3
        %v1512 = vsel %vm1501, %v1509, %v1511
        %v1514 = vsel %vm450, %v1504, 0
        %v1517 = vsel %vm450, %v1506, 0
        %v1520 = vsel %vm450, %v1508, 0
        %v1523 = vsel %vm450, %v1510, 0
        %v1526 = vsel %vm450, %v1512, 0
        %v1529 = vsel %vm466, %v1497, 0
        %1531 = vmatprep.subr.bf16.mxu0 0
        %1532 = vmatpush1.bf16.msra.mxu0 %v1529
        %1533 = vmatprep.subr.bf16.mxu0 0
        %1534 = vmatpush1.bf16.msra.mxu0 0
        %1535 = vmatprep.subr.bf16.mxu0 0
        %1536 = vmatpush1.bf16.msra.mxu0 0
        %1537 = vmatprep.subr.bf16.mxu0 0
        %1538 = vmatpush1.bf16.msra.mxu0 0
        %1539 = vmatprep.subr.bf16.mxu0 0
        %1540 = vmatpush1.bf16.msra.mxu0 0
        %1541 = vmatprep.subr.bf16.mxu0 0
        %1542 = vmatpush1.bf16.msra.mxu0 0
        %1543 = vmatprep.subr.bf16.mxu0 0
        %1544 = vmatpush1.bf16.msra.mxu0 0
        %1545 = vmatprep.subr.bf16.mxu0 0
        %1546 = vmatpush1.bf16.msra.mxu0 0
        %1547 = vmatprep.subr.bf16.mxu0 0
        %1548 = vmatpush1.bf16.msra.mxu0 0
        %1549 = vmatprep.subr.bf16.mxu0 0
        %1550 = vmatpush1.bf16.msra.mxu0 0
        %1551 = vmatprep.subr.bf16.mxu0 0
        %1552 = vmatpush1.bf16.msra.mxu0 0
        %1553 = vmatprep.subr.bf16.mxu0 0
        %1554 = vmatpush1.bf16.msra.mxu0 0
        %1555 = vmatprep.subr.bf16.mxu0 0
        %1556 = vmatpush1.bf16.msra.mxu0 0
        %1557 = vmatprep.subr.bf16.mxu0 0
        %1558 = vmatpush1.bf16.msra.mxu0 0
        %1559 = vmatprep.subr.bf16.mxu0 0
        %1560 = vmatpush1.bf16.msra.mxu0 0
        %1561 = vmatprep.subr.bf16.mxu0 0
        %1562 = vmatpush1.bf16.msra.mxu0 0
        %1563 = vmatprep.mubr.bf16.mxu0 0
        %1564 = vmatmul.mubr.bf16.gmra.mrb[0].mxu0 %v1514
        %v1565 = vpop.f32.mrb[0].mxu0
        %v1566 = vadd.f32 0.0, %v1565
        %v1567 = vpop.f32.mrb[0].mxu0
        %v1568 = vpop.f32.mrb[0].mxu0
        %v1569 = vadd.f32 0.0, %v1568
        %v1570 = vpop.f32.mrb[0].mxu0
        %1571 = vmatprep.mubr.bf16.mxu0 0
        %1572 = vmatmul.mubr.bf16.gmra.mrb[0].mxu0 %v1517
        %v1573 = vpop.f32.mrb[0].mxu0
        %v1574 = vadd.f32 0.0, %v1573
        %v1575 = vpop.f32.mrb[0].mxu0
        %v1576 = vpop.f32.mrb[0].mxu0
        %v1577 = vadd.f32 0.0, %v1576
        %v1578 = vpop.f32.mrb[0].mxu0
        %1579 = vmatprep.mubr.bf16.mxu0 0
        %1580 = vmatmul.mubr.bf16.gmra.mrb[0].mxu0 %v1520
        %v1581 = vpop.f32.mrb[0].mxu0
        %v1582 = vadd.f32 0.0, %v1581
        %v1583 = vpop.f32.mrb[0].mxu0
        %v1584 = vpop.f32.mrb[0].mxu0
        %v1585 = vadd.f32 0.0, %v1584
        %v1586 = vpop.f32.mrb[0].mxu0
        %1587 = vmatprep.mubr.bf16.mxu0 0
        %1588 = vmatmul.mubr.bf16.gmra.mrb[0].mxu0 %v1523
        %v1589 = vpop.f32.mrb[0].mxu0
        %v1590 = vadd.f32 0.0, %v1589
        %v1591 = vpop.f32.mrb[0].mxu0
        %v1592 = vpop.f32.mrb[0].mxu0
        %v1593 = vadd.f32 0.0, %v1592
        %v1594 = vpop.f32.mrb[0].mxu0
        %1595 = vmatprep.mubr.bf16.mxu0 0
        %1596 = vmatmul.mubr.bf16.gmra.mrb[0].mxu0 %v1526
        %v1597 = vpop.f32.mrb[0].mxu0
        %v1598 = vadd.f32 0.0, %v1597
        %v1599 = vpop.f32.mrb[0].mxu0
        %v1600 = vpop.f32.mrb[0].mxu0
        %v1601 = vadd.f32 0.0, %v1600
        %v1602 = vpop.f32.mrb[0].mxu0
        %1603 = vdwg.mxu0
        %v1604 = vadd.f32 %v1485, %v1566
        %v1605 = vadd.f32 %v1486, %v1569
        %v1606 = vadd.f32 %v1487, %v1574
        %v1607 = vadd.f32 %v1488, %v1577
        %v1608 = vadd.f32 %v1489, %v1582
        %v1609 = vadd.f32 %v1490, %v1585
        %v1610 = vadd.f32 %v1491, %v1590
        %v1611 = vadd.f32 %v1492, %v1593
        %v1612 = vadd.f32 %v1493, %v1598
        %v1613 = vadd.f32 %v1494, %v1601
        %v1614 = vld [vmem:[#allocation7] sm:$0x1]
        %v1616 = vlaneseq
        %v1617 = vshrl.u32 %v1616, 7
        %v1618 = vsub.s32 0, %v1617
        %v1619 = vrot.slane %v1614, %v1618
        %v1621 = vadd.f32 %v1604, %v1619
        %v1622 = vadd.f32 %v1605, %v1619
        %v1623 = vadd.f32 %v1606, %v1619
        %v1624 = vadd.f32 %v1607, %v1619
        %v1625 = vadd.f32 %v1608, %v1619
        %v1626 = vadd.f32 %v1609, %v1619
        %v1627 = vadd.f32 %v1610, %v1619
        %v1628 = vadd.f32 %v1611, %v1619
        %v1629 = vadd.f32 %v1612, %v1619
        %v1630 = vadd.f32 %v1613, %v1619
        %v1631 = vld [vmem:[%s320] sm:$0xf]
        %v1632 = vld [vmem:[%s320 + $0x4] sm:$0xf]
        %v1633 = vld [vmem:[%s320 + $0x8] sm:$0xf]
        %v1634 = vld [vmem:[%s320 + $0xc] sm:$0xf]
        %v1635 = vld [vmem:[%s320 + $0x10] sm:$0xf]
        %v1636 = vld [vmem:[%s320 + $0x14] sm:$0xf]
        %v1637 = vld [vmem:[%s320 + $0x18] sm:$0xf]
        %v1638 = vld [vmem:[%s320 + $0x1c] sm:$0xf]
        %v1639 = vld [vmem:[%s320 + $0x20] sm:$0xf]
        %v1640 = vld [vmem:[%s320 + $0x24] sm:$0xf]
        %v1641 = vld [vmem:[#allocation10] sm:$0x3]
        %v1652 = vunpack.c.l.b16 %v1631
        %v1653 = vunpack.c.l.b16 %v1632
        %v1654 = vunpack.c.l.b16 %v1633
        %v1655 = vunpack.c.l.b16 %v1634
        %v1656 = vunpack.c.l.b16 %v1635
        %v1657 = vunpack.c.l.b16 %v1636
        %v1658 = vunpack.c.l.b16 %v1637
        %v1659 = vunpack.c.l.b16 %v1638
        %v1660 = vunpack.c.l.b16 %v1639
        %v1661 = vunpack.c.l.b16 %v1640
        %v1662 = vpack.c.b16 %v1653, %v1652
        %v1663 = vpack.c.b16 %v1655, %v1654
        %v1664 = vpack.c.b16 %v1657, %v1656
        %v1665 = vpack.c.b16 %v1659, %v1658
        %v1666 = vpack.c.b16 %v1661, %v1660
        %vm1667 = vcmask 31744
        %v1669 = vsel %vm1667, %v1662, 0
        %v1672 = vsel %vm1667, %v1663, 0
        %v1675 = vsel %vm1667, %v1664, 0
        %v1678 = vsel %vm1667, %v1665, 0
        %v1681 = vsel %vm1667, %v1666, 0
        %vm1683 = vcmask 1041408
        %v1685 = vsel %vm1683, %v1641, 0
        %1687 = vmatprep.subr.bf16.mxu0 0
        %1688 = vmatpush1.bf16.msra.mxu0 %v1685
        %1689 = vmatprep.subr.bf16.mxu0 0
        %1690 = vmatpush1.bf16.msra.mxu0 0
        %1691 = vmatprep.subr.bf16.mxu0 0
        %1692 = vmatpush1.bf16.msra.mxu0 0
        %1693 = vmatprep.subr.bf16.mxu0 0
        %1694 = vmatpush1.bf16.msra.mxu0 0
        %1695 = vmatprep.subr.bf16.mxu0 0
        %1696 = vmatpush1.bf16.msra.mxu0 0
        %1697 = vmatprep.subr.bf16.mxu0 0
        %1698 = vmatpush1.bf16.msra.mxu0 0
        %1699 = vmatprep.subr.bf16.mxu0 0
        %1700 = vmatpush1.bf16.msra.mxu0 0
        %1701 = vmatprep.subr.bf16.mxu0 0
        %1702 = vmatpush1.bf16.msra.mxu0 0
        %1703 = vmatprep.subr.bf16.mxu0 0
        %1704 = vmatpush1.bf16.msra.mxu0 0
        %1705 = vmatprep.subr.bf16.mxu0 0
        %1706 = vmatpush1.bf16.msra.mxu0 0
        %1707 = vmatprep.subr.bf16.mxu0 0
        %1708 = vmatpush1.bf16.msra.mxu0 0
        %1709 = vmatprep.subr.bf16.mxu0 0
        %1710 = vmatpush1.bf16.msra.mxu0 0
        %1711 = vmatprep.subr.bf16.mxu0 0
        %1712 = vmatpush1.bf16.msra.mxu0 0
        %1713 = vmatprep.subr.bf16.mxu0 0
        %1714 = vmatpush1.bf16.msra.mxu0 0
        %1715 = vmatprep.subr.bf16.mxu0 0
        %1716 = vmatpush1.bf16.msra.mxu0 0
        %1717 = vmatprep.subr.bf16.mxu0 0
        %1718 = vmatpush1.bf16.msra.mxu0 0
        %1719 = vmatprep.mubr.bf16.mxu0 0
        %1720 = vmatmul.mubr.bf16.gmra.mrb[0].mxu0 %v1669
        %v1721 = vpop.f32.mrb[0].mxu0
        %v1722 = vadd.f32 0.0, %v1721
        %v1723 = vpop.f32.mrb[0].mxu0
        %v1724 = vpop.f32.mrb[0].mxu0
        %v1725 = vadd.f32 0.0, %v1724
        %v1726 = vpop.f32.mrb[0].mxu0
        %1727 = vmatprep.mubr.bf16.mxu0 0
        %1728 = vmatmul.mubr.bf16.gmra.mrb[0].mxu0 %v1672
        %v1729 = vpop.f32.mrb[0].mxu0
        %v1730 = vadd.f32 0.0, %v1729
        %v1731 = vpop.f32.mrb[0].mxu0
        %v1732 = vpop.f32.mrb[0].mxu0
        %v1733 = vadd.f32 0.0, %v1732
        %v1734 = vpop.f32.mrb[0].mxu0
        %1735 = vmatprep.mubr.bf16.mxu0 0
        %1736 = vmatmul.mubr.bf16.gmra.mrb[0].mxu0 %v1675
        %v1737 = vpop.f32.mrb[0].mxu0
        %v1738 = vadd.f32 0.0, %v1737
        %v1739 = vpop.f32.mrb[0].mxu0
        %v1740 = vpop.f32.mrb[0].mxu0
        %v1741 = vadd.f32 0.0, %v1740
        %v1742 = vpop.f32.mrb[0].mxu0
        %1743 = vmatprep.mubr.bf16.mxu0 0
        %1744 = vmatmul.mubr.bf16.gmra.mrb[0].mxu0 %v1678
        %v1745 = vpop.f32.mrb[0].mxu0
        %v1746 = vadd.f32 0.0, %v1745
        %v1747 = vpop.f32.mrb[0].mxu0
        %v1748 = vpop.f32.mrb[0].mxu0
        %v1749 = vadd.f32 0.0, %v1748
        %v1750 = vpop.f32.mrb[0].mxu0
        %1751 = vmatprep.mubr.bf16.mxu0 0
        %1752 = vmatmul.mubr.bf16.gmra.mrb[0].mxu0 %v1681
        %v1753 = vpop.f32.mrb[0].mxu0
        %v1754 = vadd.f32 0.0, %v1753
        %v1755 = vpop.f32.mrb[0].mxu0
        %v1756 = vpop.f32.mrb[0].mxu0
        %v1757 = vadd.f32 0.0, %v1756
        %v1758 = vpop.f32.mrb[0].mxu0
        %1759 = vdwg.mxu0
        %v1760 = vadd.f32 %v1621, %v1722
        %v1761 = vadd.f32 %v1622, %v1725
        %v1762 = vadd.f32 %v1623, %v1730
        %v1763 = vadd.f32 %v1624, %v1733
        %v1764 = vadd.f32 %v1625, %v1738
        %v1765 = vadd.f32 %v1626, %v1741
        %v1766 = vadd.f32 %v1627, %v1746
        %v1767 = vadd.f32 %v1628, %v1749
        %v1768 = vadd.f32 %v1629, %v1754
        %v1769 = vadd.f32 %v1630, %v1757
        %v1770 = vld [vmem:[#allocation11] sm:$0x1]
        %v1772 = vlaneseq
        %v1773 = vshrl.u32 %v1772, 7
        %v1774 = vsub.s32 0, %v1773
        %v1775 = vrot.slane %v1770, %v1774
        %v1777 = vadd.f32 %v1760, %v1775
        %v1778 = vadd.f32 %v1761, %v1775
        %v1779 = vadd.f32 %v1762, %v1775
        %v1780 = vadd.f32 %v1763, %v1775
        %v1781 = vadd.f32 %v1764, %v1775
        %v1782 = vadd.f32 %v1765, %v1775
        %v1783 = vadd.f32 %v1766, %v1775
        %v1784 = vadd.f32 %v1767, %v1775
        %v1785 = vadd.f32 %v1768, %v1775
        %v1786 = vadd.f32 %v1769, %v1775
        %v1787 = vmax.f32 %v1777, 0.0
        %v1788 = vmax.f32 %v1778, 0.0
        %v1789 = vmax.f32 %v1779, 0.0
        %v1790 = vmax.f32 %v1780, 0.0
        %v1791 = vmax.f32 %v1781, 0.0
        %v1792 = vmax.f32 %v1782, 0.0
        %v1793 = vmax.f32 %v1783, 0.0
        %v1794 = vmax.f32 %v1784, 0.0
        %v1795 = vmax.f32 %v1785, 0.0
        %v1796 = vmax.f32 %v1786, 0.0
        %1797 = vst [vmem:[%s361] sm:$0xff] %v1787
        %1798 = vst [vmem:[%s361 + $0x8] sm:$0xff] %v1788
        %1799 = vst [vmem:[%s361 + $0x10] sm:$0xff] %v1789
        %1800 = vst [vmem:[%s361 + $0x18] sm:$0xff] %v1790
        %1801 = vst [vmem:[%s361 + $0x20] sm:$0xff] %v1791
        %1802 = vst [vmem:[%s361 + $0x28] sm:$0xff] %v1792
        %1803 = vst [vmem:[%s361 + $0x30] sm:$0xff] %v1793
        %1804 = vst [vmem:[%s361 + $0x38] sm:$0xff] %v1794
        %1805 = vst [vmem:[%s361 + $0x40] sm:$0xff] %v1795
        %1806 = vst [vmem:[%s361 + $0x48] sm:$0xff] %v1796
        %s1807 = sand.u32 %s172, 1
        %s1808 = scalar_lea.sflag [#allocation4], %s1807
        %s1809 = sand.u32 %s172, 1
        %s1810 = smul.addr %s1809, 80
        %s1811 = scalar_lea.vmem [#allocation13], %s1810
        // Predicated region
        $region69: #{basic_block_forward.3} parent=43 // pred_check
          %p1812 = pneg %p182
        $region70: #{basic_block_forward.3} parent=43 // pred_check_branch
          %1814 = sbr.rel (%p1812) target = $region72
        $region71: #{basic_block_forward.3} parent=43 // pred_region
          %s1816 = ssub.s32 1280, 1280
          %1817 = vsyncadd %s1808, %s1816
          %s1818 = smul.addr %s28, 10
          %s1819 = smul.addr %s1818, 128
          %s1820 = scalar_lea.hbm %s6, %s1819
          %s1821 = sshll.u32 %s1811, 4
          %s1822 = int_to_ptr.vmem [resolvable:$true] %s1821
          %1827 = dma.vmem_to_hbm [thread:$0]  %s1822, 1280, %s1820, %s1808, 128, 128, 8
        $region72: #{basic_block_forward.3} parent=43 // pred_fallthru
          _
      $region44: #{basic_block_forward.3} parent=5 // pred_fallthru
        _
      %p1828 = scmp.le.s32.totalorder 2, %s23
      // Predicated region
      $region73: #{basic_block_forward.3} parent=5 // pred_check
        %p1829 = pneg %p1828
      $region74: #{basic_block_forward.3} parent=5 // pred_check_branch
        %1831 = sbr.rel (%p1829) target = $region76
      $region75: #{basic_block_forward.3} parent=5 // pred_region
        %s1832 = ssub.s32 %s23, 2
        // Predicated region
        $region77: #{basic_block_forward.3} parent=75 // pred_check
          %p1833 = pneg %p188
        $region78: #{basic_block_forward.3} parent=75 // pred_check_branch
          %1835 = sbr.rel (%p1833) target = $region80
        $region79: #{basic_block_forward.3} parent=75 // pred_region
          %s1836 = sand.u32 %s173, 1
          %s1837 = scalar_lea.sflag [#allocation4], %s1836
          %s1838 = sand.u32 %s173, 1
          %s1839 = smul.addr %s1838, 80
          %s1840 = scalar_lea.vmem [#allocation13], %s1839
          %1841 = dma.done %s1837, 1280
        $region80: #{basic_block_forward.3} parent=75 // pred_fallthru
          _
      $region76: #{basic_block_forward.3} parent=5 // pred_fallthru
        _
    $region6: #{basic_block_forward.3} parent=1 // loop_footer
      %s27 = sadd.s32 1, %s23
    $region7: #{basic_block_forward.3} parent=1 // loop_footer_branch
      %22 = sbr.rel target = $region3
    $region8: #{basic_block_forward.3} parent=1 // loop_exit
      _
    %1842 = vsyncpa [#allocation3], 1
    %s1843 = scalar_lea.sflag [#allocation3], 1
    %1844 = vsyncpa %s1843, 1
    %1845 = vsyncpa [#allocation6], 1
    %1846 = vsyncpa [#allocation9], 1
    %s1847 = scalar_lea.sflag [#allocation9], 1
    %1848 = vsyncpa %s1847, 1
    %1849 = vsyncpa [#allocation12], 1
    %1850 = vsyncpa [#allocation4], 1
    %s1851 = scalar_lea.sflag [#allocation4], 1
    %1852 = vsyncpa %s1851, 1

</llo_original>
